<compile_context>
chip_gen: v7x
topology: tpu7x:2x2x1
jax: 0.10.0
libtpu: 0.0.40
codegen_flags: <defaults>
</compile_context>

<pallas_src>
import functools
import math

import jax
import jax.numpy as jnp
from jax.experimental import pallas as pl
from jax.experimental.pallas import tpu as pltpu

# ---- static conv configuration (kernel heights (3,4,5), 'same' padding along the sequence) ----
KSIZES = (3, 4, 5)
KMAX = max(KSIZES)
PAD_LEFT = tuple((k - 1) // 2 for k in KSIZES)   # (1, 1, 2)
PL_PAD = (KMAX - 1) // 2                          # 2  (left zero-pad of the sequence)
PR_PAD = KMAX - 1 - PL_PAD                        # 2  (right zero-pad)
LANE = 128


def _round_up(x, m):
    return (x + m - 1) // m * m


# --------------------------------------------------------------------------------------------------
# kernel
# --------------------------------------------------------------------------------------------------
def _single_cnn_attention_kernel(x_ref, mask_ref,
                                 wconv_ref, bconv_ref,
                                 wq_ref, bq_ref, wkv_ref, bkv_ref,
                                 wo_ref, bo_ref, wfc_ref, bfc_ref,
                                 wcls_ref, bcls_ref,
                                 logits_ref, attn_ref, *, scale):
    B, L, KD = x_ref.shape
    DM = wq_ref.shape[0]                                    # padded d_model (multiple of 128)

    # ---- ConvMultiKernel: all taps + all branches fused into one matmul (bf16 in, f32 acc) ----
    x = x_ref[...].reshape(B * L, KD)                                   # bf16 im2col windows
    h = jnp.dot(x, wconv_ref[...], preferred_element_type=jnp.float32)  # (B*L, DM)
    h = jnp.maximum(h + bconv_ref[...], 0.0)                            # bias + ReLU, f32

    h3 = h.reshape(B, L, DM)
    h_ctx = jnp.max(h3, axis=1)                                         # (B, DM) max-pool over L

    h_bf = h.astype(jnp.bfloat16)
    hc_bf = h_ctx.astype(jnp.bfloat16)

    # ---- single-head attention: Q from pooled context, fused K/V projection from the sequence ----
    q = jnp.dot(hc_bf, wq_ref[...], preferred_element_type=jnp.float32) + bq_ref[...]    # (B, DM)
    kv = jnp.dot(h_bf, wkv_ref[...], preferred_element_type=jnp.float32) + bkv_ref[...]  # (B*L, 2DM)
    k3 = kv[:, :DM].reshape(B, L, DM)
    v3 = kv[:, DM:].reshape(B, L, DM)

    # scores: per-sample q . k  ->  VPU mul + lane reduce (no per-sample M=1 matmuls, no transpose)
    scores = jnp.sum(q[:, None, :] * k3, axis=-1) * scale               # (B, L) f32
    scores = scores + jnp.where(mask_ref[...] != 0.0,
                                jnp.float32(-1e30), jnp.float32(0.0))
    scores = scores - jnp.max(scores, axis=-1, keepdims=True)
    e = jnp.exp(scores)
    attn = e * pl.reciprocal(jnp.sum(e, axis=-1, keepdims=True), approx=True)  # (B, L)

    # context: attention-weighted sum of V (sublane reduce over L), then out_proj
    ctx = jnp.sum(attn[:, :, None] * v3, axis=1)                        # (B, DM) f32
    ctx = jnp.dot(ctx.astype(jnp.bfloat16), wo_ref[...],
                  preferred_element_type=jnp.float32) + bo_ref[...]

    # ---- cat([context, h_context]) -> fc_squeeze (Linear+ReLU) -> classifier (Linear) ----
    cat = jnp.concatenate([ctx, h_ctx], axis=1).astype(jnp.bfloat16)    # (B, 2*DM), 128-aligned concat
    fc = jnp.maximum(jnp.dot(cat, wfc_ref[...],
                             preferred_element_type=jnp.float32) + bfc_ref[...], 0.0)
    logits = jnp.dot(fc.astype(jnp.bfloat16), wcls_ref[...],
                     preferred_element_type=jnp.float32) + bcls_ref[...]

    logits_ref[...] = logits                                            # (B, NC_PAD) lane-dense
    attn_ref[...] = attn                                                # (B, L)


# --------------------------------------------------------------------------------------------------
# weight packing: pad feature dims to 128-multiples, pack conv taps / KV, cast matmul weights to bf16
# --------------------------------------------------------------------------------------------------
def _pad_dm(a, axis, c_out, c_pad):
    """Pad a concat-of-branches axis of length len(KSIZES)*c_out to len(KSIZES)*c_pad."""
    nb = len(KSIZES)
    shape = a.shape
    a = a.reshape(shape[:axis] + (nb, c_out) + shape[axis + 1:])
    pad = [(0, 0)] * a.ndim
    pad[axis + 1] = (0, c_pad - c_out)
    a = jnp.pad(a, pad)
    return a.reshape(shape[:axis] + (nb * c_pad,) + shape[axis + 1:])


def pack_params(params):
    d_emb = params["embedding"].shape[1]
    c_out = params["w_conv"][0].shape[-1]
    c_pad = _round_up(c_out, LANE)
    d_model = len(KSIZES) * c_out
    dm_pad = len(KSIZES) * c_pad
    n_class = params["w_cls"].shape[-1]
    nc_pad = _round_up(n_class, LANE)

    # conv: each branch's taps land at its own 'same'-padding window offsets inside the KMAX window.
    w_conv = jnp.zeros((KMAX * d_emb, dm_pad), jnp.float32)
    b_conv = jnp.zeros((1, dm_pad), jnp.float32)
    for i, k in enumerate(KSIZES):
        for t in range(k):
            j = PL_PAD - PAD_LEFT[i] + t
            w_conv = w_conv.at[j * d_emb:(j + 1) * d_emb,
                               i * c_pad:i * c_pad + c_out].set(params["w_conv"][i][t])
        b_conv = b_conv.at[0, i * c_pad:i * c_pad + c_out].set(params["b_conv"][i])

    def pad_mat(m):   # pad both d_model-sized axes with the per-branch scheme
        return _pad_dm(_pad_dm(m, 0, c_out, c_pad), 1, c_out, c_pad)

    def pad_vec(v):   # (d_model,) -> (1, dm_pad)
        return _pad_dm(v.reshape(1, -1), 1, c_out, c_pad)

    w_q = pad_mat(params["w_qkv"][0])
    w_kv = jnp.concatenate([pad_mat(params["w_qkv"][1]),
                            pad_mat(params["w_qkv"][2])], axis=1)        # (dm_pad, 2*dm_pad)
    b_q = pad_vec(params["b_qkv"][0])
    b_kv = jnp.concatenate([pad_vec(params["b_qkv"][1]),
                            pad_vec(params["b_qkv"][2])], axis=1)

    w_o = pad_mat(params["w_o"])
    b_o = pad_vec(params["b_o"].reshape(-1))

    w_fc = jnp.concatenate([pad_mat(params["w_fc"][:d_model]),
                            pad_mat(params["w_fc"][d_model:])], axis=0)  # (2*dm_pad, dm_pad)
    b_fc = pad_vec(params["b_fc"].reshape(-1))

    w_cls = jnp.pad(_pad_dm(params["w_cls"], 0, c_out, c_pad),
                    ((0, 0), (0, nc_pad - n_class)))                     # (dm_pad, nc_pad)
    b_cls = jnp.pad(params["b_cls"].reshape(1, -1), ((0, 0), (0, nc_pad - n_class)))

    bf = lambda a: a.astype(jnp.bfloat16)
    return {
        "w_conv": bf(w_conv), "b_conv": b_conv,
        "w_q": bf(w_q), "b_q": b_q, "w_kv": bf(w_kv), "b_kv": b_kv,
        "w_o": bf(w_o), "b_o": b_o, "w_fc": bf(w_fc), "b_fc": b_fc,
        "w_cls": bf(w_cls), "b_cls": b_cls,
        "d_model": d_model, "n_class": n_class, "dm_pad": dm_pad, "nc_pad": nc_pad,
    }


# --------------------------------------------------------------------------------------------------
# wrapper
# --------------------------------------------------------------------------------------------------
def single_cnn_attention(ids, mask, params, *, b_tile=128):
    # glue: embedding gather + im2col windows for the fused conv matmul
    # TODO(synk): the embedding gather could be fused into the kernel with PrefetchScalarGridSpec DMA.
    x = params["embedding"][ids].astype(jnp.float32)                    # (N, L, D)
    N, L, D = x.shape
    x_pad = jnp.pad(x, ((0, 0), (PL_PAD, PR_PAD), (0, 0)))
    x_win = jnp.concatenate([x_pad[:, j:j + L, :] for j in range(KMAX)], axis=-1)  # (N, L, KMAX*D)
    x_win = x_win.astype(jnp.bfloat16)

    packed = pack_params(params)
    dm_pad, nc_pad = packed["dm_pad"], packed["nc_pad"]
    d_model, n_class = packed["d_model"], packed["n_class"]

    # batch tiling: B_TILE samples per grid step (clamped / padded so the grid divides evenly)
    b_tile = max(8, min(_round_up(b_tile, 8), _round_up(N, 8)))
    n_pad = _round_up(N, b_tile)
    if n_pad != N:
        x_win = jnp.pad(x_win, ((0, n_pad - N), (0, 0), (0, 0)))
        mask = jnp.pad(mask, ((0, n_pad - N), (0, 0)))
    mask_f = mask.astype(jnp.float32)
    kd = KMAX * D

    def w_spec(shape):
        nd = len(shape)
        return pl.BlockSpec(shape, lambda n, nd=nd: (0,) * nd)

    weights = (packed["w_conv"], packed["b_conv"],
               packed["w_q"], packed["b_q"], packed["w_kv"], packed["b_kv"],
               packed["w_o"], packed["b_o"], packed["w_fc"], packed["b_fc"],
               packed["w_cls"], packed["b_cls"])

    in_specs = [
        pl.BlockSpec((b_tile, L, kd), lambda n: (n, 0, 0)),   # activations: one batch tile per step
        pl.BlockSpec((b_tile, L), lambda n: (n, 0)),          # key-padding mask
    ] + [w_spec(w.shape) for w in weights]

    out_specs = (
        pl.BlockSpec((b_tile, nc_pad), lambda n: (n, 0)),     # lane-dense (128-wide) logits slab
        pl.BlockSpec((b_tile, L), lambda n: (n, 0)),          # attention weights slab
    )
    out_shape = (
        jax.ShapeDtypeStruct((n_pad, nc_pad), jnp.float32),
        jax.ShapeDtypeStruct((n_pad, L), jnp.float32),
    )

    kernel = functools.partial(_single_cnn_attention_kernel,
                               scale=1.0 / math.sqrt(d_model))

    logits, attn = pl.pallas_call(
        kernel,
        grid=(n_pad // b_tile,),
        in_specs=in_specs,
        out_specs=out_specs,
        out_shape=out_shape,
        compiler_params=pltpu.CompilerParams(
            dimension_semantics=("parallel",),        # batch tiles split across TCs on v7x
            vmem_limit_bytes=32 * 1024 * 1024),
    )(x_win, mask_f, *weights)

    return logits[:N, :n_class], attn[:N, :]


# --------------------------------------------------------------------------------------------------
# pure-JAX reference replicating the same forward semantics (bf16 matmul inputs, f32 accumulation)
# --------------------------------------------------------------------------------------------------
def reference_bf16(ids, mask, params):
    x = params["embedding"][ids].astype(jnp.float32)
    N, L, D = x.shape
    x_pad = jnp.pad(x, ((0, 0), (PL_PAD, PR_PAD), (0, 0))).astype(jnp.bfloat16)
    hs = []
    for i, k in enumerate(KSIZES):
        w = params["w_conv"][i].astype(jnp.bfloat16)
        acc = jnp.zeros((N, L, w.shape[-1]), jnp.float32)
        for t in range(k):
            off = PL_PAD - PAD_LEFT[i] + t
            acc = acc + jax.lax.dot_general(x_pad[:, off:off + L, :], w[t],
                                            (((2,), (0,)), ((), ())),
                                            preferred_element_type=jnp.float32)
        hs.append(jax.nn.relu(acc + params["b_conv"][i]))
    h_seq = jnp.concatenate(hs, axis=-1)                                  # (N, L, 300)
    h_ctx = jnp.max(h_seq, axis=1)                                        # (N, 300)

    wq, wk, wv = (params["w_qkv"][j].astype(jnp.bfloat16) for j in range(3))
    h_seq_b, h_ctx_b = h_seq.astype(jnp.bfloat16), h_ctx.astype(jnp.bfloat16)
    q = jnp.einsum("nd,de->ne", h_ctx_b, wq, preferred_element_type=jnp.float32) + params["b_qkv"][0]
    kx = jnp.einsum("nld,de->nle", h_seq_b, wk, preferred_element_type=jnp.float32) + params["b_qkv"][1]
    vx = jnp.einsum("nld,de->nle", h_seq_b, wv, preferred_element_type=jnp.float32) + params["b_qkv"][2]

    scores = jnp.einsum("nd,nld->nl", q, kx) / jnp.sqrt(jnp.float32(q.shape[-1]))
    scores = scores + jnp.where(mask != 0, -1e30, 0.0)
    attn = jax.nn.softmax(scores, axis=-1)

    ctx = jnp.einsum("nl,nld->nd", attn, vx)
    ctx = jnp.einsum("nd,de->ne", ctx.astype(jnp.bfloat16), params["w_o"].astype(jnp.bfloat16),
                     preferred_element_type=jnp.float32) + params["b_o"]
    cat = jnp.concatenate([ctx, h_ctx], axis=-1).astype(jnp.bfloat16)
    fc = jax.nn.relu(jnp.einsum("nd,de->ne", cat, params["w_fc"].astype(jnp.bfloat16),
                                preferred_element_type=jnp.float32) + params["b_fc"][0])
    logits = jnp.einsum("nd,de->ne", fc.astype(jnp.bfloat16), params["w_cls"].astype(jnp.bfloat16),
                        preferred_element_type=jnp.float32) + params["b_cls"][0]
    return logits, attn


# --------------------------------------------------------------------------------------------------
# parameters (same true shapes as the PyTorch module: c_out=100, d_model=300, n_class=3)
# --------------------------------------------------------------------------------------------------
def make_params(key, vocab_size, d_emb, padding_idx, c_out=100, n_class=3):
    d_model = c_out * len(KSIZES)
    d_fc_in = 2 * d_model
    d_fc_out = d_model
    ks = jax.random.split(key, 12)
    emb = jax.random.normal(ks[0], (vocab_size, d_emb), jnp.float32)
    emb = emb.at[padding_idx].set(0.0)
    w_conv = tuple(
        jax.random.normal(ks[1 + i], (k, d_emb, c_out), jnp.float32) / jnp.sqrt(k * d_emb)
        for i, k in enumerate(KSIZES))
    b_conv = 0.01 * jax.random.normal(ks[4], (len(KSIZES), c_out), jnp.float32)
    w_qkv = jax.random.normal(ks[5], (3, d_model, d_model), jnp.float32) / jnp.sqrt(d_model)
    b_qkv = 0.01 * jax.random.normal(ks[6], (3, d_model), jnp.float32)
    w_o = jax.random.normal(ks[7], (d_model, d_model), jnp.float32) / jnp.sqrt(d_model)
    b_o = 0.01 * jax.random.normal(ks[8], (1, d_model), jnp.float32)
    w_fc = jax.random.normal(ks[9], (d_fc_in, d_fc_out), jnp.float32) / jnp.sqrt(d_fc_in)
    b_fc = 0.01 * jax.random.normal(ks[10], (1, d_fc_out), jnp.float32)
    w_cls = jax.random.normal(ks[11], (d_fc_out, n_class), jnp.float32) / jnp.sqrt(d_fc_out)
    b_cls = jnp.zeros((1, n_class), jnp.float32)
    return {
        "embedding": emb, "w_conv": w_conv, "b_conv": b_conv,
        "w_qkv": w_qkv, "b_qkv": b_qkv, "w_o": w_o, "b_o": b_o,
        "w_fc": w_fc, "b_fc": b_fc, "w_cls": w_cls, "b_cls": b_cls,
    }


if __name__ == "__main__":
    N, L = 10, 8
    vocab_size, d_emb, padding_idx = 50, 32, 0

    key = jax.random.PRNGKey(0)
    k_ids, k_params = jax.random.split(key)
    params = make_params(k_params, vocab_size, d_emb, padding_idx)

    ids = jax.random.randint(k_ids, (N, L), 0, vocab_size)
    mask = jnp.zeros((N, L), jnp.int32).at[1, L - 1].set(1)   # mask last key of sample 1

    # small b_tile so the demo exercises multiple grid steps + batch padding (default is 128)
    logits, attn = single_cnn_attention(ids, mask, params, b_tile=8)
    jax.block_until_ready((logits, attn))

    ref_logits, ref_attn = reference_bf16(ids, mask, params)
    assert logits.shape == (N, 3) and attn.shape == (N, L)
    assert jnp.allclose(logits, ref_logits, rtol=1e-2, atol=1e-2)
    assert jnp.allclose(attn, ref_attn, rtol=1e-2, atol=1e-2)
    assert jnp.allclose(jnp.sum(attn, axis=-1), 1.0, atol=5e-3)
    assert float(attn[1, L - 1]) < 1e-6                        # masked key gets ~zero weight

    print("KERNEL_OK")
</pallas_src>

<mosaic_0001>
module attributes {stable_mosaic.version = 11 : i64} {
  func.func @_single_cnn_attention_kernel(%arg0: i32, %arg1: memref<8x8x160xbf16, #tpu.memory_space<vmem>>, %arg2: memref<8x8xf32, #tpu.memory_space<vmem>>, %arg3: memref<160x384xbf16, #tpu.memory_space<vmem>>, %arg4: memref<1x384xf32, #tpu.memory_space<vmem>>, %arg5: memref<384x384xbf16, #tpu.memory_space<vmem>>, %arg6: memref<1x384xf32, #tpu.memory_space<vmem>>, %arg7: memref<384x768xbf16, #tpu.memory_space<vmem>>, %arg8: memref<1x768xf32, #tpu.memory_space<vmem>>, %arg9: memref<384x384xbf16, #tpu.memory_space<vmem>>, %arg10: memref<1x384xf32, #tpu.memory_space<vmem>>, %arg11: memref<768x384xbf16, #tpu.memory_space<vmem>>, %arg12: memref<1x384xf32, #tpu.memory_space<vmem>>, %arg13: memref<384x128xbf16, #tpu.memory_space<vmem>>, %arg14: memref<1x128xf32, #tpu.memory_space<vmem>>, %arg15: memref<8x128xf32, #tpu.memory_space<vmem>>, %arg16: memref<8x8xf32, #tpu.memory_space<vmem>>) attributes {dimension_semantics = [#tpu.dimension_semantics<parallel>], iteration_bounds = array<i64: 2>, scalar_prefetch = 0 : i64, scratch_operands = 0 : i64, tpu.core_type = #tpu.core_type<tc>, window_params = [{transform_indices = @transform_0, window_bounds = array<i64: 8, 8, 160>}, {transform_indices = @transform_1, window_bounds = array<i64: 8, 8>}, {pipeline_mode = #tpu.pipeline_mode<synchronous>, transform_indices = @transform_2, window_bounds = array<i64: 160, 384>}, {pipeline_mode = #tpu.pipeline_mode<synchronous>, transform_indices = @transform_3, window_bounds = array<i64: 1, 384>}, {pipeline_mode = #tpu.pipeline_mode<synchronous>, transform_indices = @transform_4, window_bounds = array<i64: 384, 384>}, {pipeline_mode = #tpu.pipeline_mode<synchronous>, transform_indices = @transform_5, window_bounds = array<i64: 1, 384>}, {pipeline_mode = #tpu.pipeline_mode<synchronous>, transform_indices = @transform_6, window_bounds = array<i64: 384, 768>}, {pipeline_mode = #tpu.pipeline_mode<synchronous>, transform_indices = @transform_7, window_bounds = array<i64: 1, 768>}, {pipeline_mode = #tpu.pipeline_mode<synchronous>, transform_indices = @transform_8, window_bounds = array<i64: 384, 384>}, {pipeline_mode = #tpu.pipeline_mode<synchronous>, transform_indices = @transform_9, window_bounds = array<i64: 1, 384>}, {pipeline_mode = #tpu.pipeline_mode<synchronous>, transform_indices = @transform_10, window_bounds = array<i64: 768, 384>}, {pipeline_mode = #tpu.pipeline_mode<synchronous>, transform_indices = @transform_11, window_bounds = array<i64: 1, 384>}, {pipeline_mode = #tpu.pipeline_mode<synchronous>, transform_indices = @transform_12, window_bounds = array<i64: 384, 128>}, {pipeline_mode = #tpu.pipeline_mode<synchronous>, transform_indices = @transform_13, window_bounds = array<i64: 1, 128>}, {transform_indices = @transform_14, window_bounds = array<i64: 8, 128>}, {transform_indices = @transform_15, window_bounds = array<i64: 8, 8>}]} {
    %c0 = arith.constant 0 : index
    %c0_0 = arith.constant 0 : index
    %c0_1 = arith.constant 0 : index
    %0 = vector.load %arg1[%c0, %c0_0, %c0_1] : memref<8x8x160xbf16, #tpu.memory_space<vmem>>, vector<8x8x160xbf16>
    %1 = vector.shape_cast %0 : vector<8x8x160xbf16> to vector<64x160xbf16>
    %c0_2 = arith.constant 0 : index
    %c0_3 = arith.constant 0 : index
    %2 = vector.load %arg3[%c0_2, %c0_3] : memref<160x384xbf16, #tpu.memory_space<vmem>>, vector<160x384xbf16>
    %cst = arith.constant dense<0.000000e+00> : vector<64x384xf32>
    %3 = tpu.matmul %1, %2, %cst {dimension_numbers = #tpu.dot_dimension_numbers<[1], [0], [0], [1], [0, 0, 1, 1], [], []>} : vector<64x160xbf16>, vector<160x384xbf16>, vector<64x384xf32> -> vector<64x384xf32>
    %c0_4 = arith.constant 0 : index
    %c0_5 = arith.constant 0 : index
    %4 = vector.load %arg4[%c0_4, %c0_5] : memref<1x384xf32, #tpu.memory_space<vmem>>, vector<1x384xf32>
    %5 = vector.broadcast %4 : vector<1x384xf32> to vector<64x384xf32>
    %6 = arith.addf %3, %5 : vector<64x384xf32>
    %cst_6 = arith.constant 0.000000e+00 : f32
    %7 = vector.broadcast %cst_6 : f32 to vector<64x384xf32>
    %8 = arith.maximumf %6, %7 : vector<64x384xf32>
    %9 = vector.shape_cast %8 : vector<64x384xf32> to vector<8x8x384xf32>
    %cst_7 = arith.constant dense<0xFF800000> : vector<8x384xf32>
    %10 = vector.multi_reduction <maximumf>, %9, %cst_7 [1] : vector<8x8x384xf32> to vector<8x384xf32>
    %11 = arith.truncf %8 : vector<64x384xf32> to vector<64x384xbf16>
    %12 = arith.truncf %10 : vector<8x384xf32> to vector<8x384xbf16>
    %c0_8 = arith.constant 0 : index
    %c0_9 = arith.constant 0 : index
    %13 = vector.load %arg5[%c0_8, %c0_9] : memref<384x384xbf16, #tpu.memory_space<vmem>>, vector<384x384xbf16>
    %cst_10 = arith.constant dense<0.000000e+00> : vector<8x384xf32>
    %14 = tpu.matmul %12, %13, %cst_10 {dimension_numbers = #tpu.dot_dimension_numbers<[1], [0], [0], [1], [0, 0, 1, 1], [], []>} : vector<8x384xbf16>, vector<384x384xbf16>, vector<8x384xf32> -> vector<8x384xf32>
    %c0_11 = arith.constant 0 : index
    %c0_12 = arith.constant 0 : index
    %15 = vector.load %arg6[%c0_11, %c0_12] : memref<1x384xf32, #tpu.memory_space<vmem>>, vector<1x384xf32>
    %16 = vector.broadcast %15 : vector<1x384xf32> to vector<8x384xf32>
    %17 = arith.addf %14, %16 : vector<8x384xf32>
    %c0_13 = arith.constant 0 : index
    %c0_14 = arith.constant 0 : index
    %18 = vector.load %arg7[%c0_13, %c0_14] : memref<384x768xbf16, #tpu.memory_space<vmem>>, vector<384x768xbf16>
    %cst_15 = arith.constant dense<0.000000e+00> : vector<64x768xf32>
    %19 = tpu.matmul %11, %18, %cst_15 {dimension_numbers = #tpu.dot_dimension_numbers<[1], [0], [0], [1], [0, 0, 1, 1], [], []>} : vector<64x384xbf16>, vector<384x768xbf16>, vector<64x768xf32> -> vector<64x768xf32>
    %c0_16 = arith.constant 0 : index
    %c0_17 = arith.constant 0 : index
    %20 = vector.load %arg8[%c0_16, %c0_17] : memref<1x768xf32, #tpu.memory_space<vmem>>, vector<1x768xf32>
    %21 = vector.broadcast %20 : vector<1x768xf32> to vector<64x768xf32>
    %22 = arith.addf %19, %21 : vector<64x768xf32>
    %23 = vector.extract_strided_slice %22 {offsets = [0, 0], sizes = [64, 384], strides = [1, 1]} : vector<64x768xf32> to vector<64x384xf32>
    %24 = vector.shape_cast %23 : vector<64x384xf32> to vector<8x8x384xf32>
    %25 = vector.extract_strided_slice %22 {offsets = [0, 384], sizes = [64, 384], strides = [1, 1]} : vector<64x768xf32> to vector<64x384xf32>
    %26 = vector.shape_cast %25 : vector<64x384xf32> to vector<8x8x384xf32>
    %27 = vector.shape_cast %17 : vector<8x384xf32> to vector<8x1x384xf32>
    %28 = vector.broadcast %27 : vector<8x1x384xf32> to vector<8x8x384xf32>
    %29 = arith.mulf %28, %24 : vector<8x8x384xf32>
    %cst_18 = arith.constant dense<0.000000e+00> : vector<8x8xf32>
    %30 = vector.multi_reduction <add>, %29, %cst_18 [2] : vector<8x8x384xf32> to vector<8x8xf32>
    %cst_19 = arith.constant 0.0577350259 : f32
    %31 = vector.broadcast %cst_19 : f32 to vector<8x8xf32>
    %32 = arith.mulf %30, %31 : vector<8x8xf32>
    %c0_20 = arith.constant 0 : index
    %c0_21 = arith.constant 0 : index
    %33 = vector.load %arg2[%c0_20, %c0_21] : memref<8x8xf32, #tpu.memory_space<vmem>>, vector<8x8xf32>
    %cst_22 = arith.constant 0.000000e+00 : f32
    %34 = vector.broadcast %cst_22 : f32 to vector<8x8xf32>
    %35 = arith.cmpf one, %33, %34 : vector<8x8xf32>
    %cst_23 = arith.constant -1.000000e+30 : f32
    %cst_24 = arith.constant 0.000000e+00 : f32
    %36 = vector.broadcast %cst_23 : f32 to vector<8x8xf32>
    %37 = vector.broadcast %cst_24 : f32 to vector<8x8xf32>
    %38 = arith.select %35, %36, %37 : vector<8x8xi1>, vector<8x8xf32>
    %39 = arith.addf %32, %38 : vector<8x8xf32>
    %cst_25 = arith.constant dense<0xFF800000> : vector<8xf32>
    %40 = vector.multi_reduction <maximumf>, %39, %cst_25 [1] : vector<8x8xf32> to vector<8xf32>
    %41 = vector.shape_cast %40 : vector<8xf32> to vector<8x1xf32>
    %42 = vector.broadcast %41 : vector<8x1xf32> to vector<8x8xf32>
    %43 = arith.subf %39, %42 : vector<8x8xf32>
    %44 = math.exp %43 : vector<8x8xf32>
    %cst_26 = arith.constant dense<0.000000e+00> : vector<8xf32>
    %45 = vector.multi_reduction <add>, %44, %cst_26 [1] : vector<8x8xf32> to vector<8xf32>
    %46 = vector.shape_cast %45 : vector<8xf32> to vector<8x1xf32>
    %47 = tpu.reciprocal %46 {approx = true} : vector<8x1xf32> -> vector<8x1xf32>
    %48 = vector.broadcast %47 : vector<8x1xf32> to vector<8x8xf32>
    %49 = arith.mulf %44, %48 : vector<8x8xf32>
    %50 = vector.shape_cast %49 : vector<8x8xf32> to vector<8x8x1xf32>
    %51 = vector.broadcast %50 : vector<8x8x1xf32> to vector<8x8x384xf32>
    %52 = arith.mulf %51, %26 : vector<8x8x384xf32>
    %cst_27 = arith.constant dense<0.000000e+00> : vector<8x384xf32>
    %53 = vector.multi_reduction <add>, %52, %cst_27 [1] : vector<8x8x384xf32> to vector<8x384xf32>
    %54 = arith.truncf %53 : vector<8x384xf32> to vector<8x384xbf16>
    %c0_28 = arith.constant 0 : index
    %c0_29 = arith.constant 0 : index
    %55 = vector.load %arg9[%c0_28, %c0_29] : memref<384x384xbf16, #tpu.memory_space<vmem>>, vector<384x384xbf16>
    %cst_30 = arith.constant dense<0.000000e+00> : vector<8x384xf32>
    %56 = tpu.matmul %54, %55, %cst_30 {dimension_numbers = #tpu.dot_dimension_numbers<[1], [0], [0], [1], [0, 0, 1, 1], [], []>} : vector<8x384xbf16>, vector<384x384xbf16>, vector<8x384xf32> -> vector<8x384xf32>
    %c0_31 = arith.constant 0 : index
    %c0_32 = arith.constant 0 : index
    %57 = vector.load %arg10[%c0_31, %c0_32] : memref<1x384xf32, #tpu.memory_space<vmem>>, vector<1x384xf32>
    %58 = vector.broadcast %57 : vector<1x384xf32> to vector<8x384xf32>
    %59 = arith.addf %56, %58 : vector<8x384xf32>
    %60 = tpu.concatenate %59, %10 in 1 : vector<8x384xf32>, vector<8x384xf32> -> vector<8x768xf32>
    %61 = arith.truncf %60 : vector<8x768xf32> to vector<8x768xbf16>
    %c0_33 = arith.constant 0 : index
    %c0_34 = arith.constant 0 : index
    %62 = vector.load %arg11[%c0_33, %c0_34] : memref<768x384xbf16, #tpu.memory_space<vmem>>, vector<768x384xbf16>
    %cst_35 = arith.constant dense<0.000000e+00> : vector<8x384xf32>
    %63 = tpu.matmul %61, %62, %cst_35 {dimension_numbers = #tpu.dot_dimension_numbers<[1], [0], [0], [1], [0, 0, 1, 1], [], []>} : vector<8x768xbf16>, vector<768x384xbf16>, vector<8x384xf32> -> vector<8x384xf32>
    %c0_36 = arith.constant 0 : index
    %c0_37 = arith.constant 0 : index
    %64 = vector.load %arg12[%c0_36, %c0_37] : memref<1x384xf32, #tpu.memory_space<vmem>>, vector<1x384xf32>
    %65 = vector.broadcast %64 : vector<1x384xf32> to vector<8x384xf32>
    %66 = arith.addf %63, %65 : vector<8x384xf32>
    %cst_38 = arith.constant 0.000000e+00 : f32
    %67 = vector.broadcast %cst_38 : f32 to vector<8x384xf32>
    %68 = arith.maximumf %66, %67 : vector<8x384xf32>
    %69 = arith.truncf %68 : vector<8x384xf32> to vector<8x384xbf16>
    %c0_39 = arith.constant 0 : index
    %c0_40 = arith.constant 0 : index
    %70 = vector.load %arg13[%c0_39, %c0_40] : memref<384x128xbf16, #tpu.memory_space<vmem>>, vector<384x128xbf16>
    %cst_41 = arith.constant dense<0.000000e+00> : vector<8x128xf32>
    %71 = tpu.matmul %69, %70, %cst_41 {dimension_numbers = #tpu.dot_dimension_numbers<[1], [0], [0], [1], [0, 0, 1, 1], [], []>} : vector<8x384xbf16>, vector<384x128xbf16>, vector<8x128xf32> -> vector<8x128xf32>
    %c0_42 = arith.constant 0 : index
    %c0_43 = arith.constant 0 : index
    %72 = vector.load %arg14[%c0_42, %c0_43] : memref<1x128xf32, #tpu.memory_space<vmem>>, vector<1x128xf32>
    %73 = vector.broadcast %72 : vector<1x128xf32> to vector<8x128xf32>
    %74 = arith.addf %71, %73 : vector<8x128xf32>
    %c0_44 = arith.constant 0 : index
    %c0_45 = arith.constant 0 : index
    %75 = vector.load %arg15[%c0_44, %c0_45] : memref<8x128xf32, #tpu.memory_space<vmem>>, vector<8x128xf32>
    tpu.vector_store %arg15[%c0_44, %c0_45], %74 {strides = array<i32>} : memref<8x128xf32, #tpu.memory_space<vmem>>, vector<8x128xf32>,
    %c0_46 = arith.constant 0 : index
    %c0_47 = arith.constant 0 : index
    %76 = vector.load %arg16[%c0_46, %c0_47] : memref<8x8xf32, #tpu.memory_space<vmem>>, vector<8x8xf32>
    tpu.vector_store %arg16[%c0_46, %c0_47], %49 {strides = array<i32>} : memref<8x8xf32, #tpu.memory_space<vmem>>, vector<8x8xf32>,
    return
  }
  func.func @transform_0(%arg0: i32) -> (i32, i32, i32) {
    %c0_i32 = arith.constant 0 : i32
    %c0_i32_0 = arith.constant 0 : i32
    %c0_i32_1 = arith.constant 0 : i32
    return %arg0, %c0_i32, %c0_i32_0 : i32, i32, i32
  }
  func.func @transform_1(%arg0: i32) -> (i32, i32) {
    %c0_i32 = arith.constant 0 : i32
    %c0_i32_0 = arith.constant 0 : i32
    return %arg0, %c0_i32 : i32, i32
  }
  func.func @transform_2(%arg0: i32) -> (i32, i32) {
    %c0_i32 = arith.constant 0 : i32
    %c0_i32_0 = arith.constant 0 : i32
    %c0_i32_1 = arith.constant 0 : i32
    return %c0_i32, %c0_i32_0 : i32, i32
  }
  func.func @transform_3(%arg0: i32) -> (i32, i32) {
    %c0_i32 = arith.constant 0 : i32
    %c0_i32_0 = arith.constant 0 : i32
    %c0_i32_1 = arith.constant 0 : i32
    return %c0_i32, %c0_i32_0 : i32, i32
  }
  func.func @transform_4(%arg0: i32) -> (i32, i32) {
    %c0_i32 = arith.constant 0 : i32
    %c0_i32_0 = arith.constant 0 : i32
    %c0_i32_1 = arith.constant 0 : i32
    return %c0_i32, %c0_i32_0 : i32, i32
  }
  func.func @transform_5(%arg0: i32) -> (i32, i32) {
    %c0_i32 = arith.constant 0 : i32
    %c0_i32_0 = arith.constant 0 : i32
    %c0_i32_1 = arith.constant 0 : i32
    return %c0_i32, %c0_i32_0 : i32, i32
  }
  func.func @transform_6(%arg0: i32) -> (i32, i32) {
    %c0_i32 = arith.constant 0 : i32
    %c0_i32_0 = arith.constant 0 : i32
    %c0_i32_1 = arith.constant 0 : i32
    return %c0_i32, %c0_i32_0 : i32, i32
  }
  func.func @transform_7(%arg0: i32) -> (i32, i32) {
    %c0_i32 = arith.constant 0 : i32
    %c0_i32_0 = arith.constant 0 : i32
    %c0_i32_1 = arith.constant 0 : i32
    return %c0_i32, %c0_i32_0 : i32, i32
  }
  func.func @transform_8(%arg0: i32) -> (i32, i32) {
    %c0_i32 = arith.constant 0 : i32
    %c0_i32_0 = arith.constant 0 : i32
    %c0_i32_1 = arith.constant 0 : i32
    return %c0_i32, %c0_i32_0 : i32, i32
  }
  func.func @transform_9(%arg0: i32) -> (i32, i32) {
    %c0_i32 = arith.constant 0 : i32
    %c0_i32_0 = arith.constant 0 : i32
    %c0_i32_1 = arith.constant 0 : i32
    return %c0_i32, %c0_i32_0 : i32, i32
  }
  func.func @transform_10(%arg0: i32) -> (i32, i32) {
    %c0_i32 = arith.constant 0 : i32
    %c0_i32_0 = arith.constant 0 : i32
    %c0_i32_1 = arith.constant 0 : i32
    return %c0_i32, %c0_i32_0 : i32, i32
  }
  func.func @transform_11(%arg0: i32) -> (i32, i32) {
    %c0_i32 = arith.constant 0 : i32
    %c0_i32_0 = arith.constant 0 : i32
    %c0_i32_1 = arith.constant 0 : i32
    return %c0_i32, %c0_i32_0 : i32, i32
  }
  func.func @transform_12(%arg0: i32) -> (i32, i32) {
    %c0_i32 = arith.constant 0 : i32
    %c0_i32_0 = arith.constant 0 : i32
    %c0_i32_1 = arith.constant 0 : i32
    return %c0_i32, %c0_i32_0 : i32, i32
  }
  func.func @transform_13(%arg0: i32) -> (i32, i32) {
    %c0_i32 = arith.constant 0 : i32
    %c0_i32_0 = arith.constant 0 : i32
    %c0_i32_1 = arith.constant 0 : i32
    return %c0_i32, %c0_i32_0 : i32, i32
  }
  func.func @transform_14(%arg0: i32) -> (i32, i32) {
    %c0_i32 = arith.constant 0 : i32
    %c0_i32_0 = arith.constant 0 : i32
    return %arg0, %c0_i32 : i32, i32
  }
  func.func @transform_15(%arg0: i32) -> (i32, i32) {
    %c0_i32 = arith.constant 0 : i32
    %c0_i32_0 = arith.constant 0 : i32
    return %arg0, %c0_i32 : i32, i32
  }
}

</mosaic_0001>

<llo_original>
// kernel: tpu_custom_call.1
$region0: #{tpu_custom_call.1}
  #allocation0 [shape = 'u32[]', space=smem, size = 0x4, offset = 0x4, fixed_abs, tag = 'smem constant byte address 0x4 - core index']
  #allocation1 [shape = 'u32[144,128]{1,0:T(1,128)}', space=vmem, size = 0x12000, scoped, tag = 'internal scratch']
  %s0 = inlined_call_operand.hbm [shape: bf16[16,8,160], index: 0, kind: input, shape index: {}]
  %s1 = inlined_call_operand.vmem [shape: f32[16,8], index: 1, kind: input, shape index: {}]
  %s2 = inlined_call_operand.hbm [shape: bf16[160,384], index: 2, kind: input, shape index: {}]
  %s3 = inlined_call_operand.vmem [shape: f32[1,384], index: 3, kind: input, shape index: {}]
  %s4 = inlined_call_operand.hbm [shape: bf16[384,384], index: 4, kind: input, shape index: {}]
  %s5 = inlined_call_operand.vmem [shape: f32[1,384], index: 5, kind: input, shape index: {}]
  %s6 = inlined_call_operand.hbm [shape: bf16[384,768], index: 6, kind: input, shape index: {}]
  %s7 = inlined_call_operand.vmem [shape: f32[1,768], index: 7, kind: input, shape index: {}]
  %s8 = inlined_call_operand.hbm [shape: bf16[384,384], index: 8, kind: input, shape index: {}]
  %s9 = inlined_call_operand.vmem [shape: f32[1,384], index: 9, kind: input, shape index: {}]
  %s10 = inlined_call_operand.hbm [shape: bf16[768,384], index: 10, kind: input, shape index: {}]
  %s11 = inlined_call_operand.vmem [shape: f32[1,384], index: 11, kind: input, shape index: {}]
  %s12 = inlined_call_operand.hbm [shape: bf16[384,128], index: 12, kind: input, shape index: {}]
  %s13 = inlined_call_operand.vmem [shape: f32[1,128], index: 13, kind: input, shape index: {}]
  %s14 = inlined_call_operand.hbm [shape: f32[16,128], index: 14, kind: output, shape index: {0}]
  %s15 = inlined_call_operand.vmem [shape: f32[16,8], index: 15, kind: output, shape index: {1}]
  %16 = xla_tuple %s14, %s15
  %s17 = sld [smem:[#allocation0]]
  $region125: #{tpu_custom_call.1} parent=0
    _
  %s19 = ssub.s32 1, %s17
  %s20 = scalar_select 0, %s19, %s17
  $region1: #{tpu_custom_call.1} parent=0
    #allocation2 [shape = 'u8[65536]{0}', space=vmem, size = 0x10000, scoped, tag = 'input window, operand 0']
    #allocation3 [shape = 's32[2]{0}', space=sflag, size = 0x8, scoped, tag = 'scoped memory for tpu_custom_call.1']
    #allocation4 [shape = 's32[2]{0}', space=sflag, size = 0x8, scoped, tag = 'scoped memory for tpu_custom_call.1']
    #allocation5 [shape = 'u8[122880]{0}', space=vmem, size = 0x1e000, scoped, tag = 'input window, operand 2, single buffered']
    #allocation6 [shape = 's32[1]{0}', space=sflag, size = 0x4, scoped, tag = 'scoped memory for tpu_custom_call.1']
    #allocation7 [shape = 'u8[294912]{0}', space=vmem, size = 0x48000, scoped, tag = 'input window, operand 4, single buffered']
    #allocation8 [shape = 'u8[589824]{0}', space=vmem, size = 0x90000, scoped, tag = 'input window, operand 6, single buffered']
    #allocation9 [shape = 's32[1]{0}', space=sflag, size = 0x4, scoped, tag = 'scoped memory for tpu_custom_call.1']
    #allocation10 [shape = 'u8[294912]{0}', space=vmem, size = 0x48000, scoped, tag = 'input window, operand 8, single buffered']
    #allocation11 [shape = 'u8[589824]{0}', space=vmem, size = 0x90000, scoped, tag = 'input window, operand 10, single buffered']
    #allocation12 [shape = 's32[1]{0}', space=sflag, size = 0x4, scoped, tag = 'scoped memory for tpu_custom_call.1']
    #allocation13 [shape = 'u8[98304]{0}', space=vmem, size = 0x18000, scoped, tag = 'input window, operand 12, single buffered']
    #allocation14 [shape = 'u8[8192]{0}', space=vmem, size = 0x2000, scoped, tag = 'output window, operand 0']
    %21 = vsyncpa [#allocation3], 0
    %s22 = scalar_lea.sflag [#allocation3], 1
    %23 = vsyncpa %s22, 0
    %24 = vsyncpa [#allocation6], 0
    %25 = vsyncpa [#allocation9], 0
    %26 = vsyncpa [#allocation12], 0
    %27 = vsyncpa [#allocation4], 0
    %s28 = scalar_lea.sflag [#allocation4], 1
    %29 = vsyncpa %s28, 0
    loop: start=0, step=1, limit=4
    $region2: #{tpu_custom_call.1} parent=1 // loop_pre_header
      _
    $region3: #{tpu_custom_call.1} parent=1 // loop_header
      %s31 = sphi 0, %s35
      %p32 = scmp.ge.s32.totalorder %s31, 4
      %s41 = sphi 0, %s43
      %s44 = sphi 0, %s41
      %s45 = sphi 0, %s44
      %s61 = sphi 0, %s45
      %s67 = sphi 0, %s69
      %s70 = sphi 0, %s67
      %s71 = sphi 0, %s70
      %s87 = sphi 0, %s71
      %s91 = sphi 0, %s91
      %s93 = sphi 0, %s91
      %s94 = sphi 0, %s93
      %s108 = sphi 0, %s94
      %s112 = sphi 0, %s112
      %s114 = sphi 0, %s112
      %s115 = sphi 0, %s114
      %s129 = sphi 0, %s115
      %s133 = sphi 0, %s133
      %s135 = sphi 0, %s133
      %s136 = sphi 0, %s135
      %s150 = sphi 0, %s136
      %s154 = sphi 0, %s154
      %s156 = sphi 0, %s154
      %s157 = sphi 0, %s156
      %s171 = sphi 0, %s157
      %s175 = sphi 0, %s175
      %s177 = sphi 0, %s175
      %s178 = sphi 0, %s177
      %s192 = sphi 0, %s178
      %s196 = sphi 0, %s196
      %s198 = sphi 0, %s196
      %s199 = sphi 0, %s198
      %s213 = sphi 0, %s199
      %s217 = sphi 0, %s217
      %s219 = sphi 0, %s217
      %s220 = sphi 0, %s219
      %s234 = sphi 0, %s220
      %s238 = sphi 0, %s238
      %s240 = sphi 0, %s238
      %s241 = sphi 0, %s240
      %s255 = sphi 0, %s241
      %s259 = sphi 0, %s259
      %s261 = sphi 0, %s259
      %s262 = sphi 0, %s261
      %s276 = sphi 0, %s262
      %s280 = sphi 0, %s280
      %s282 = sphi 0, %s280
      %s283 = sphi 0, %s282
      %s297 = sphi 0, %s283
      %s301 = sphi 0, %s301
      %s303 = sphi 0, %s301
      %s304 = sphi 0, %s303
      %s318 = sphi 0, %s304
      %s322 = sphi 0, %s322
      %s324 = sphi 0, %s322
      %s325 = sphi 0, %s324
      %s339 = sphi 0, %s325
      %s345 = sphi 0, %s347
      %s348 = sphi 0, %s345
      %s349 = sphi 0, %s348
      %s365 = sphi 0, %s349
      %s371 = sphi 0, %s373
      %s374 = sphi 0, %s371
      %s375 = sphi 0, %s374
      %s391 = sphi 0, %s375
    $region4: #{tpu_custom_call.1} parent=1 // loop_header_branch
      %34 = sbr.rel (%p32) target = $region8
    $region5: #{tpu_custom_call.1} parent=1 // loop_body
      %s36 = ssub.s32 %s31, 1
      %s37 = ssub.s32 %s31, 2
      %s38 = sadd.s32 %s31, 1
      %s39 = ssub.s32 %s31, %s38
      %p40 = scmp.eq.s32.totalorder %s39, 0
      %s42 = sadd.s32 %s41, 1
      %s43 = scalar_select %p40, %s41, %s42
      %p46 = pneg %p40
      %p47 = scmp.eq.s32.totalorder %s31, 1
      %p48 = por %p46, %p47
      %p49 = scmp.ne.s32.totalorder %s41, %s44
      %p50 = scmp.eq.s32.totalorder %s31, 0
      %p51 = por %p49, %p50
      %p52 = scmp.ne.s32.totalorder %s41, %s44
      %p53 = scmp.eq.s32.totalorder %s36, 1
      %p54 = por %p52, %p53
      %p55 = scmp.ne.s32.totalorder %s44, %s45
      %p56 = scmp.eq.s32.totalorder %s36, 0
      %p57 = por %p55, %p56
      %p58 = scmp.ne.s32.totalorder %s44, %s45
      %p59 = scmp.eq.s32.totalorder %s37, 1
      %p60 = por %p58, %p59
      %p62 = scmp.ne.s32.totalorder %s45, %s61
      %p63 = scmp.eq.s32.totalorder %s37, 0
      %p64 = por %p62, %p63
      %s65 = ssub.s32 %s31, %s38
      %p66 = scmp.eq.s32.totalorder %s65, 0
      %s68 = sadd.s32 %s67, 1
      %s69 = scalar_select %p66, %s67, %s68
      %p72 = pneg %p66
      %p73 = scmp.eq.s32.totalorder %s31, 1
      %p74 = por %p72, %p73
      %p75 = scmp.ne.s32.totalorder %s67, %s70
      %p76 = scmp.eq.s32.totalorder %s31, 0
      %p77 = por %p75, %p76
      %p78 = scmp.ne.s32.totalorder %s67, %s70
      %p79 = scmp.eq.s32.totalorder %s36, 1
      %p80 = por %p78, %p79
      %p81 = scmp.ne.s32.totalorder %s70, %s71
      %p82 = scmp.eq.s32.totalorder %s36, 0
      %p83 = por %p81, %p82
      %p84 = scmp.ne.s32.totalorder %s70, %s71
      %p85 = scmp.eq.s32.totalorder %s37, 1
      %p86 = por %p84, %p85
      %p88 = scmp.ne.s32.totalorder %s71, %s87
      %p89 = scmp.eq.s32.totalorder %s37, 0
      %p90 = por %p88, %p89
      %s92 = sadd.s32 %s91, 1
      %p95 = scmp.eq.s32.totalorder %s31, 1
      %p96 = scmp.ne.s32.totalorder %s91, %s93
      %p97 = scmp.eq.s32.totalorder %s31, 0
      %p98 = por %p96, %p97
      %p99 = scmp.ne.s32.totalorder %s91, %s93
      %p100 = scmp.eq.s32.totalorder %s36, 1
      %p101 = por %p99, %p100
      %p102 = scmp.ne.s32.totalorder %s93, %s94
      %p103 = scmp.eq.s32.totalorder %s36, 0
      %p104 = por %p102, %p103
      %p105 = scmp.ne.s32.totalorder %s93, %s94
      %p106 = scmp.eq.s32.totalorder %s37, 1
      %p107 = por %p105, %p106
      %p109 = scmp.ne.s32.totalorder %s94, %s108
      %p110 = scmp.eq.s32.totalorder %s37, 0
      %p111 = por %p109, %p110
      %s113 = sadd.s32 %s112, 1
      %p116 = scmp.eq.s32.totalorder %s31, 1
      %p117 = scmp.ne.s32.totalorder %s112, %s114
      %p118 = scmp.eq.s32.totalorder %s31, 0
      %p119 = por %p117, %p118
      %p120 = scmp.ne.s32.totalorder %s112, %s114
      %p121 = scmp.eq.s32.totalorder %s36, 1
      %p122 = por %p120, %p121
      %p123 = scmp.ne.s32.totalorder %s114, %s115
      %p124 = scmp.eq.s32.totalorder %s36, 0
      %p125 = por %p123, %p124
      %p126 = scmp.ne.s32.totalorder %s114, %s115
      %p127 = scmp.eq.s32.totalorder %s37, 1
      %p128 = por %p126, %p127
      %p130 = scmp.ne.s32.totalorder %s115, %s129
      %p131 = scmp.eq.s32.totalorder %s37, 0
      %p132 = por %p130, %p131
      %s134 = sadd.s32 %s133, 1
      %p137 = scmp.eq.s32.totalorder %s31, 1
      %p138 = scmp.ne.s32.totalorder %s133, %s135
      %p139 = scmp.eq.s32.totalorder %s31, 0
      %p140 = por %p138, %p139
      %p141 = scmp.ne.s32.totalorder %s133, %s135
      %p142 = scmp.eq.s32.totalorder %s36, 1
      %p143 = por %p141, %p142
      %p144 = scmp.ne.s32.totalorder %s135, %s136
      %p145 = scmp.eq.s32.totalorder %s36, 0
      %p146 = por %p144, %p145
      %p147 = scmp.ne.s32.totalorder %s135, %s136
      %p148 = scmp.eq.s32.totalorder %s37, 1
      %p149 = por %p147, %p148
      %p151 = scmp.ne.s32.totalorder %s136, %s150
      %p152 = scmp.eq.s32.totalorder %s37, 0
      %p153 = por %p151, %p152
      %s155 = sadd.s32 %s154, 1
      %p158 = scmp.eq.s32.totalorder %s31, 1
      %p159 = scmp.ne.s32.totalorder %s154, %s156
      %p160 = scmp.eq.s32.totalorder %s31, 0
      %p161 = por %p159, %p160
      %p162 = scmp.ne.s32.totalorder %s154, %s156
      %p163 = scmp.eq.s32.totalorder %s36, 1
      %p164 = por %p162, %p163
      %p165 = scmp.ne.s32.totalorder %s156, %s157
      %p166 = scmp.eq.s32.totalorder %s36, 0
      %p167 = por %p165, %p166
      %p168 = scmp.ne.s32.totalorder %s156, %s157
      %p169 = scmp.eq.s32.totalorder %s37, 1
      %p170 = por %p168, %p169
      %p172 = scmp.ne.s32.totalorder %s157, %s171
      %p173 = scmp.eq.s32.totalorder %s37, 0
      %p174 = por %p172, %p173
      %s176 = sadd.s32 %s175, 1
      %p179 = scmp.eq.s32.totalorder %s31, 1
      %p180 = scmp.ne.s32.totalorder %s175, %s177
      %p181 = scmp.eq.s32.totalorder %s31, 0
      %p182 = por %p180, %p181
      %p183 = scmp.ne.s32.totalorder %s175, %s177
      %p184 = scmp.eq.s32.totalorder %s36, 1
      %p185 = por %p183, %p184
      %p186 = scmp.ne.s32.totalorder %s177, %s178
      %p187 = scmp.eq.s32.totalorder %s36, 0
      %p188 = por %p186, %p187
      %p189 = scmp.ne.s32.totalorder %s177, %s178
      %p190 = scmp.eq.s32.totalorder %s37, 1
      %p191 = por %p189, %p190
      %p193 = scmp.ne.s32.totalorder %s178, %s192
      %p194 = scmp.eq.s32.totalorder %s37, 0
      %p195 = por %p193, %p194
      %s197 = sadd.s32 %s196, 1
      %p200 = scmp.eq.s32.totalorder %s31, 1
      %p201 = scmp.ne.s32.totalorder %s196, %s198
      %p202 = scmp.eq.s32.totalorder %s31, 0
      %p203 = por %p201, %p202
      %p204 = scmp.ne.s32.totalorder %s196, %s198
      %p205 = scmp.eq.s32.totalorder %s36, 1
      %p206 = por %p204, %p205
      %p207 = scmp.ne.s32.totalorder %s198, %s199
      %p208 = scmp.eq.s32.totalorder %s36, 0
      %p209 = por %p207, %p208
      %p210 = scmp.ne.s32.totalorder %s198, %s199
      %p211 = scmp.eq.s32.totalorder %s37, 1
      %p212 = por %p210, %p211
      %p214 = scmp.ne.s32.totalorder %s199, %s213
      %p215 = scmp.eq.s32.totalorder %s37, 0
      %p216 = por %p214, %p215
      %s218 = sadd.s32 %s217, 1
      %p221 = scmp.eq.s32.totalorder %s31, 1
      %p222 = scmp.ne.s32.totalorder %s217, %s219
      %p223 = scmp.eq.s32.totalorder %s31, 0
      %p224 = por %p222, %p223
      %p225 = scmp.ne.s32.totalorder %s217, %s219
      %p226 = scmp.eq.s32.totalorder %s36, 1
      %p227 = por %p225, %p226
      %p228 = scmp.ne.s32.totalorder %s219, %s220
      %p229 = scmp.eq.s32.totalorder %s36, 0
      %p230 = por %p228, %p229
      %p231 = scmp.ne.s32.totalorder %s219, %s220
      %p232 = scmp.eq.s32.totalorder %s37, 1
      %p233 = por %p231, %p232
      %p235 = scmp.ne.s32.totalorder %s220, %s234
      %p236 = scmp.eq.s32.totalorder %s37, 0
      %p237 = por %p235, %p236
      %s239 = sadd.s32 %s238, 1
      %p242 = scmp.eq.s32.totalorder %s31, 1
      %p243 = scmp.ne.s32.totalorder %s238, %s240
      %p244 = scmp.eq.s32.totalorder %s31, 0
      %p245 = por %p243, %p244
      %p246 = scmp.ne.s32.totalorder %s238, %s240
      %p247 = scmp.eq.s32.totalorder %s36, 1
      %p248 = por %p246, %p247
      %p249 = scmp.ne.s32.totalorder %s240, %s241
      %p250 = scmp.eq.s32.totalorder %s36, 0
      %p251 = por %p249, %p250
      %p252 = scmp.ne.s32.totalorder %s240, %s241
      %p253 = scmp.eq.s32.totalorder %s37, 1
      %p254 = por %p252, %p253
      %p256 = scmp.ne.s32.totalorder %s241, %s255
      %p257 = scmp.eq.s32.totalorder %s37, 0
      %p258 = por %p256, %p257
      %s260 = sadd.s32 %s259, 1
      %p263 = scmp.eq.s32.totalorder %s31, 1
      %p264 = scmp.ne.s32.totalorder %s259, %s261
      %p265 = scmp.eq.s32.totalorder %s31, 0
      %p266 = por %p264, %p265
      %p267 = scmp.ne.s32.totalorder %s259, %s261
      %p268 = scmp.eq.s32.totalorder %s36, 1
      %p269 = por %p267, %p268
      %p270 = scmp.ne.s32.totalorder %s261, %s262
      %p271 = scmp.eq.s32.totalorder %s36, 0
      %p272 = por %p270, %p271
      %p273 = scmp.ne.s32.totalorder %s261, %s262
      %p274 = scmp.eq.s32.totalorder %s37, 1
      %p275 = por %p273, %p274
      %p277 = scmp.ne.s32.totalorder %s262, %s276
      %p278 = scmp.eq.s32.totalorder %s37, 0
      %p279 = por %p277, %p278
      %s281 = sadd.s32 %s280, 1
      %p284 = scmp.eq.s32.totalorder %s31, 1
      %p285 = scmp.ne.s32.totalorder %s280, %s282
      %p286 = scmp.eq.s32.totalorder %s31, 0
      %p287 = por %p285, %p286
      %p288 = scmp.ne.s32.totalorder %s280, %s282
      %p289 = scmp.eq.s32.totalorder %s36, 1
      %p290 = por %p288, %p289
      %p291 = scmp.ne.s32.totalorder %s282, %s283
      %p292 = scmp.eq.s32.totalorder %s36, 0
      %p293 = por %p291, %p292
      %p294 = scmp.ne.s32.totalorder %s282, %s283
      %p295 = scmp.eq.s32.totalorder %s37, 1
      %p296 = por %p294, %p295
      %p298 = scmp.ne.s32.totalorder %s283, %s297
      %p299 = scmp.eq.s32.totalorder %s37, 0
      %p300 = por %p298, %p299
      %s302 = sadd.s32 %s301, 1
      %p305 = scmp.eq.s32.totalorder %s31, 1
      %p306 = scmp.ne.s32.totalorder %s301, %s303
      %p307 = scmp.eq.s32.totalorder %s31, 0
      %p308 = por %p306, %p307
      %p309 = scmp.ne.s32.totalorder %s301, %s303
      %p310 = scmp.eq.s32.totalorder %s36, 1
      %p311 = por %p309, %p310
      %p312 = scmp.ne.s32.totalorder %s303, %s304
      %p313 = scmp.eq.s32.totalorder %s36, 0
      %p314 = por %p312, %p313
      %p315 = scmp.ne.s32.totalorder %s303, %s304
      %p316 = scmp.eq.s32.totalorder %s37, 1
      %p317 = por %p315, %p316
      %p319 = scmp.ne.s32.totalorder %s304, %s318
      %p320 = scmp.eq.s32.totalorder %s37, 0
      %p321 = por %p319, %p320
      %s323 = sadd.s32 %s322, 1
      %p326 = scmp.eq.s32.totalorder %s31, 1
      %p327 = scmp.ne.s32.totalorder %s322, %s324
      %p328 = scmp.eq.s32.totalorder %s31, 0
      %p329 = por %p327, %p328
      %p330 = scmp.ne.s32.totalorder %s322, %s324
      %p331 = scmp.eq.s32.totalorder %s36, 1
      %p332 = por %p330, %p331
      %p333 = scmp.ne.s32.totalorder %s324, %s325
      %p334 = scmp.eq.s32.totalorder %s36, 0
      %p335 = por %p333, %p334
      %p336 = scmp.ne.s32.totalorder %s324, %s325
      %p337 = scmp.eq.s32.totalorder %s37, 1
      %p338 = por %p336, %p337
      %p340 = scmp.ne.s32.totalorder %s325, %s339
      %p341 = scmp.eq.s32.totalorder %s37, 0
      %p342 = por %p340, %p341
      %s343 = ssub.s32 %s31, %s38
      %p344 = scmp.eq.s32.totalorder %s343, 0
      %s346 = sadd.s32 %s345, 1
      %s347 = scalar_select %p344, %s345, %s346
      %p350 = pneg %p344
      %p351 = scmp.eq.s32.totalorder %s31, 1
      %p352 = por %p350, %p351
      %p353 = scmp.ne.s32.totalorder %s345, %s348
      %p354 = scmp.eq.s32.totalorder %s31, 0
      %p355 = por %p353, %p354
      %p356 = scmp.ne.s32.totalorder %s345, %s348
      %p357 = scmp.eq.s32.totalorder %s36, 1
      %p358 = por %p356, %p357
      %p359 = scmp.ne.s32.totalorder %s348, %s349
      %p360 = scmp.eq.s32.totalorder %s36, 0
      %p361 = por %p359, %p360
      %p362 = scmp.ne.s32.totalorder %s348, %s349
      %p363 = scmp.eq.s32.totalorder %s37, 1
      %p364 = por %p362, %p363
      %p366 = scmp.ne.s32.totalorder %s349, %s365
      %p367 = scmp.eq.s32.totalorder %s37, 0
      %p368 = por %p366, %p367
      %s369 = ssub.s32 %s31, %s38
      %p370 = scmp.eq.s32.totalorder %s369, 0
      %s372 = sadd.s32 %s371, 1
      %s373 = scalar_select %p370, %s371, %s372
      %p376 = pneg %p370
      %p377 = scmp.eq.s32.totalorder %s31, 1
      %p378 = por %p376, %p377
      %p379 = scmp.ne.s32.totalorder %s371, %s374
      %p380 = scmp.eq.s32.totalorder %s31, 0
      %p381 = por %p379, %p380
      %p382 = scmp.ne.s32.totalorder %s371, %s374
      %p383 = scmp.eq.s32.totalorder %s36, 1
      %p384 = por %p382, %p383
      %p385 = scmp.ne.s32.totalorder %s374, %s375
      %p386 = scmp.eq.s32.totalorder %s36, 0
      %p387 = por %p385, %p386
      %p388 = scmp.ne.s32.totalorder %s374, %s375
      %p389 = scmp.eq.s32.totalorder %s37, 1
      %p390 = por %p388, %p389
      %p392 = scmp.ne.s32.totalorder %s375, %s391
      %p393 = scmp.eq.s32.totalorder %s37, 0
      %p394 = por %p392, %p393
      %p395 = scmp.le.s32.totalorder 1, %s31
      %p396 = scmp.lt.s32.totalorder %s31, 3
      %p397 = pnand %p395, %p396
      %p398 = pneg %p397
      // Predicated region
      $region9: #{tpu_custom_call.1} parent=5 // pred_check
        _
      $region10: #{tpu_custom_call.1} parent=5 // pred_check_branch
        %400 = sbr.rel (%p397) target = $region12
      $region11: #{tpu_custom_call.1} parent=5 // pred_region
        %s401 = ssub.s32 %s31, 1
        // Predicated region
        $region13: #{tpu_custom_call.1} parent=11 // pred_check
          %p402 = pneg %p104
        $region14: #{tpu_custom_call.1} parent=11 // pred_check_branch
          %404 = sbr.rel (%p402) target = $region16
        $region15: #{tpu_custom_call.1} parent=11 // pred_region
          %s406 = ssub.s32 3840, 3840
          %407 = vsyncadd [#allocation6], %s406
          %s408 = sshll.u32 [#allocation5], 4
          %s409 = int_to_ptr.vmem [resolvable:$true] %s408
          %414 = dma.hbm_to_vmem [thread:$0]  %s2, 3840, %s409, [#allocation6], 192, 192, 12
        $region16: #{tpu_custom_call.1} parent=11 // pred_fallthru
          _
        // Predicated region
        $region17: #{tpu_custom_call.1} parent=11 // pred_check
          %p415 = pneg %p125
        $region18: #{tpu_custom_call.1} parent=11 // pred_check_branch
          %417 = sbr.rel (%p415) target = $region20
        $region19: #{tpu_custom_call.1} parent=11 // pred_region
          _
        $region20: #{tpu_custom_call.1} parent=11 // pred_fallthru
          _
        // Predicated region
        $region21: #{tpu_custom_call.1} parent=11 // pred_check
          %p418 = pneg %p146
        $region22: #{tpu_custom_call.1} parent=11 // pred_check_branch
          %420 = sbr.rel (%p418) target = $region24
        $region23: #{tpu_custom_call.1} parent=11 // pred_region
          %s422 = ssub.s32 9216, 9216
          %423 = vsyncadd [#allocation6], %s422
          %s424 = sshll.u32 [#allocation7], 4
          %s425 = int_to_ptr.vmem [resolvable:$true] %s424
          %430 = dma.hbm_to_vmem [thread:$0]  %s4, 9216, %s425, [#allocation6], 192, 192, 12
        $region24: #{tpu_custom_call.1} parent=11 // pred_fallthru
          _
        // Predicated region
        $region25: #{tpu_custom_call.1} parent=11 // pred_check
          %p431 = pneg %p167
        $region26: #{tpu_custom_call.1} parent=11 // pred_check_branch
          %433 = sbr.rel (%p431) target = $region28
        $region27: #{tpu_custom_call.1} parent=11 // pred_region
          _
        $region28: #{tpu_custom_call.1} parent=11 // pred_fallthru
          _
        // Predicated region
        $region29: #{tpu_custom_call.1} parent=11 // pred_check
          %p434 = pneg %p188
        $region30: #{tpu_custom_call.1} parent=11 // pred_check_branch
          %436 = sbr.rel (%p434) target = $region32
        $region31: #{tpu_custom_call.1} parent=11 // pred_region
          %s438 = ssub.s32 18432, 18432
          %439 = vsyncadd [#allocation9], %s438
          %s440 = sshll.u32 [#allocation8], 4
          %s441 = int_to_ptr.vmem [resolvable:$true] %s440
          %446 = dma.hbm_to_vmem [thread:$0]  %s6, 18432, %s441, [#allocation9], 384, 384, 24
        $region32: #{tpu_custom_call.1} parent=11 // pred_fallthru
          _
        // Predicated region
        $region33: #{tpu_custom_call.1} parent=11 // pred_check
          %p447 = pneg %p209
        $region34: #{tpu_custom_call.1} parent=11 // pred_check_branch
          %449 = sbr.rel (%p447) target = $region36
        $region35: #{tpu_custom_call.1} parent=11 // pred_region
          _
        $region36: #{tpu_custom_call.1} parent=11 // pred_fallthru
          _
        // Predicated region
        $region37: #{tpu_custom_call.1} parent=11 // pred_check
          %p450 = pneg %p230
        $region38: #{tpu_custom_call.1} parent=11 // pred_check_branch
          %452 = sbr.rel (%p450) target = $region40
        $region39: #{tpu_custom_call.1} parent=11 // pred_region
          %s454 = ssub.s32 9216, 9216
          %455 = vsyncadd [#allocation9], %s454
          %s456 = sshll.u32 [#allocation10], 4
          %s457 = int_to_ptr.vmem [resolvable:$true] %s456
          %462 = dma.hbm_to_vmem [thread:$0]  %s8, 9216, %s457, [#allocation9], 192, 192, 12
        $region40: #{tpu_custom_call.1} parent=11 // pred_fallthru
          _
        // Predicated region
        $region41: #{tpu_custom_call.1} parent=11 // pred_check
          %p463 = pneg %p251
        $region42: #{tpu_custom_call.1} parent=11 // pred_check_branch
          %465 = sbr.rel (%p463) target = $region44
        $region43: #{tpu_custom_call.1} parent=11 // pred_region
          _
        $region44: #{tpu_custom_call.1} parent=11 // pred_fallthru
          _
        // Predicated region
        $region45: #{tpu_custom_call.1} parent=11 // pred_check
          %p466 = pneg %p272
        $region46: #{tpu_custom_call.1} parent=11 // pred_check_branch
          %468 = sbr.rel (%p466) target = $region48
        $region47: #{tpu_custom_call.1} parent=11 // pred_region
          %s470 = ssub.s32 18432, 18432
          %471 = vsyncadd [#allocation12], %s470
          %s472 = sshll.u32 [#allocation11], 4
          %s473 = int_to_ptr.vmem [resolvable:$true] %s472
          %478 = dma.hbm_to_vmem [thread:$0]  %s10, 18432, %s473, [#allocation12], 192, 192, 12
        $region48: #{tpu_custom_call.1} parent=11 // pred_fallthru
          _
        // Predicated region
        $region49: #{tpu_custom_call.1} parent=11 // pred_check
          %p479 = pneg %p293
        $region50: #{tpu_custom_call.1} parent=11 // pred_check_branch
          %481 = sbr.rel (%p479) target = $region52
        $region51: #{tpu_custom_call.1} parent=11 // pred_region
          _
        $region52: #{tpu_custom_call.1} parent=11 // pred_fallthru
          _
        // Predicated region
        $region53: #{tpu_custom_call.1} parent=11 // pred_check
          %p482 = pneg %p314
        $region54: #{tpu_custom_call.1} parent=11 // pred_check_branch
          %484 = sbr.rel (%p482) target = $region56
        $region55: #{tpu_custom_call.1} parent=11 // pred_region
          %s486 = ssub.s32 3072, 3072
          %487 = vsyncadd [#allocation12], %s486
          %s488 = sshll.u32 [#allocation13], 4
          %s489 = int_to_ptr.vmem [resolvable:$true] %s488
          %494 = dma.hbm_to_vmem [thread:$0]  %s12, 3072, %s489, [#allocation12], 64, 64, 4
        $region56: #{tpu_custom_call.1} parent=11 // pred_fallthru
          _
        // Predicated region
        $region57: #{tpu_custom_call.1} parent=11 // pred_check
          %p495 = pneg %p335
        $region58: #{tpu_custom_call.1} parent=11 // pred_check_branch
          %497 = sbr.rel (%p495) target = $region60
        $region59: #{tpu_custom_call.1} parent=11 // pred_region
          _
        $region60: #{tpu_custom_call.1} parent=11 // pred_fallthru
          _
      $region12: #{tpu_custom_call.1} parent=5 // pred_fallthru
        _
      %p498 = scmp.lt.s32.totalorder %s31, 2
      // Predicated region
      $region61: #{tpu_custom_call.1} parent=5 // pred_check
        %p499 = pneg %p498
      $region62: #{tpu_custom_call.1} parent=5 // pred_check_branch
        %501 = sbr.rel (%p499) target = $region64
      $region63: #{tpu_custom_call.1} parent=5 // pred_region
        // Predicated region
        $region65: #{tpu_custom_call.1} parent=63 // pred_check
          %p502 = pneg %p51
        $region66: #{tpu_custom_call.1} parent=63 // pred_check_branch
          %504 = sbr.rel (%p502) target = $region68
        $region67: #{tpu_custom_call.1} parent=63 // pred_region
          %s505 = sand.u32 %s41, 1
          %s506 = scalar_lea.sflag [#allocation3], %s505
          %s507 = sand.u32 %s41, 1
          %s508 = smul.addr %s507, 64
          %s509 = scalar_lea.vmem [#allocation2], %s508
          %s510 = smul.u32 8, %s31
          %s512 = ssub.s32 1024, 1024
          %513 = vsyncadd %s506, %s512
          %s514 = smul.addr %s510, 2
          %s515 = smul.addr %s514, 64
          %s516 = scalar_lea.hbm %s0, %s515
          %s517 = sshll.u32 %s509, 4
          %s518 = int_to_ptr.vmem [resolvable:$true] %s517
          %523 = dma.hbm_to_vmem [thread:$0]  %s516, 1024, %s518, %s506, 128, 128, 8
        $region68: #{tpu_custom_call.1} parent=63 // pred_fallthru
          _
        // Predicated region
        $region69: #{tpu_custom_call.1} parent=63 // pred_check
          %p524 = pneg %p77
        $region70: #{tpu_custom_call.1} parent=63 // pred_check_branch
          %526 = sbr.rel (%p524) target = $region72
        $region71: #{tpu_custom_call.1} parent=63 // pred_region
          %p527 = scmp.lt.s32.totalorder %s31, 1
          %s528 = scalar_select %p527, %s31, 1
          %s529 = smul.addr %s528, 8
          %s530 = scalar_lea.vmem %s1, %s529
        $region72: #{tpu_custom_call.1} parent=63 // pred_fallthru
          _
      $region64: #{tpu_custom_call.1} parent=5 // pred_fallthru
        _
      %p531 = scmp.le.s32.totalorder 1, %s31
      %p532 = scmp.lt.s32.totalorder %s31, 3
      %p533 = pnand %p531, %p532
      %p534 = pneg %p533
      // Predicated region
      $region73: #{tpu_custom_call.1} parent=5 // pred_check
        _
      $region74: #{tpu_custom_call.1} parent=5 // pred_check_branch
        %536 = sbr.rel (%p533) target = $region76
      $region75: #{tpu_custom_call.1} parent=5 // pred_region
        %s537 = ssub.s32 %s31, 1
        %s538 = sand.u32 %s44, 1
        %s539 = scalar_lea.sflag [#allocation3], %s538
        %s540 = sand.u32 %s44, 1
        %s541 = smul.addr %s540, 64
        %s542 = scalar_lea.vmem [#allocation2], %s541
        // Predicated region
        $region77: #{tpu_custom_call.1} parent=75 // pred_check
          %p543 = pneg %p57
        $region78: #{tpu_custom_call.1} parent=75 // pred_check_branch
          %545 = sbr.rel (%p543) target = $region80
        $region79: #{tpu_custom_call.1} parent=75 // pred_region
          %546 = dma.done %s539, 1024
        $region80: #{tpu_custom_call.1} parent=75 // pred_fallthru
          _
        // Predicated region
        $region81: #{tpu_custom_call.1} parent=75 // pred_check
          %p547 = pneg %p104
        $region82: #{tpu_custom_call.1} parent=75 // pred_check_branch
          %549 = sbr.rel (%p547) target = $region84
        $region83: #{tpu_custom_call.1} parent=75 // pred_region
          %550 = dma.done [#allocation6], 3840
        $region84: #{tpu_custom_call.1} parent=75 // pred_fallthru
          _
        // Predicated region
        $region85: #{tpu_custom_call.1} parent=75 // pred_check
          %p551 = pneg %p146
        $region86: #{tpu_custom_call.1} parent=75 // pred_check_branch
          %553 = sbr.rel (%p551) target = $region88
        $region87: #{tpu_custom_call.1} parent=75 // pred_region
          %554 = dma.done [#allocation6], 9216
        $region88: #{tpu_custom_call.1} parent=75 // pred_fallthru
          _
        // Predicated region
        $region89: #{tpu_custom_call.1} parent=75 // pred_check
          %p555 = pneg %p188
        $region90: #{tpu_custom_call.1} parent=75 // pred_check_branch
          %557 = sbr.rel (%p555) target = $region92
        $region91: #{tpu_custom_call.1} parent=75 // pred_region
          %558 = dma.done [#allocation9], 18432
        $region92: #{tpu_custom_call.1} parent=75 // pred_fallthru
          _
        // Predicated region
        $region93: #{tpu_custom_call.1} parent=75 // pred_check
          %p559 = pneg %p230
        $region94: #{tpu_custom_call.1} parent=75 // pred_check_branch
          %561 = sbr.rel (%p559) target = $region96
        $region95: #{tpu_custom_call.1} parent=75 // pred_region
          %562 = dma.done [#allocation9], 9216
        $region96: #{tpu_custom_call.1} parent=75 // pred_fallthru
          _
        // Predicated region
        $region97: #{tpu_custom_call.1} parent=75 // pred_check
          %p563 = pneg %p272
        $region98: #{tpu_custom_call.1} parent=75 // pred_check_branch
          %565 = sbr.rel (%p563) target = $region100
        $region99: #{tpu_custom_call.1} parent=75 // pred_region
          %566 = dma.done [#allocation12], 18432
        $region100: #{tpu_custom_call.1} parent=75 // pred_fallthru
          _
        // Predicated region
        $region101: #{tpu_custom_call.1} parent=75 // pred_check
          %p567 = pneg %p314
        $region102: #{tpu_custom_call.1} parent=75 // pred_check_branch
          %569 = sbr.rel (%p567) target = $region104
        $region103: #{tpu_custom_call.1} parent=75 // pred_region
          %570 = dma.done [#allocation12], 3072
        $region104: #{tpu_custom_call.1} parent=75 // pred_fallthru
          _
        %s571 = sand.u32 %s44, 1
        %s572 = scalar_lea.sflag [#allocation3], %s571
        %s573 = sand.u32 %s44, 1
        %s574 = smul.addr %s573, 64
        %s575 = scalar_lea.vmem [#allocation2], %s574
        %p576 = pneg %p57
        %p577 = pneg %p54
        %p578 = scmp.lt.s32.totalorder %s36, 1
        %s579 = scalar_select %p578, %s36, 1
        %s580 = smul.addr %s579, 8
        %s581 = scalar_lea.vmem %s1, %s580
        %p582 = pneg %p83
        %p583 = pneg %p80
        %p584 = pneg %p104
        %p585 = pneg %p101
        %p586 = pneg %p125
        %p587 = pneg %p122
        %p588 = pneg %p146
        %p589 = pneg %p143
        %p590 = pneg %p167
        %p591 = pneg %p164
        %p592 = pneg %p188
        %p593 = pneg %p185
        %p594 = pneg %p209
        %p595 = pneg %p206
        %p596 = pneg %p230
        %p597 = pneg %p227
        %p598 = pneg %p251
        %p599 = pneg %p248
        %p600 = pneg %p272
        %p601 = pneg %p269
        %p602 = pneg %p293
        %p603 = pneg %p290
        %p604 = pneg %p314
        %p605 = pneg %p311
        %p606 = pneg %p335
        %p607 = pneg %p332
        %p608 = pneg %p361
        %p609 = pneg %p358
        %s610 = sand.u32 %s348, 1
        %s611 = scalar_lea.sflag [#allocation4], %s610
        %s612 = sand.u32 %s348, 1
        %s613 = smul.addr %s612, 8
        %s614 = scalar_lea.vmem [#allocation14], %s613
        %p615 = pneg %p387
        %p616 = pneg %p384
        %p617 = scmp.lt.s32.totalorder %s36, 1
        %s618 = scalar_select %p617, %s36, 1
        %s619 = smul.addr %s618, 8
        %s620 = scalar_lea.vmem %s15, %s619
        %s621 = smul.u32 8, %s36
        %p622 = scmp.lt.s32.totalorder %s36, 1
        %s623 = scalar_select %p622, %s36, 1
        %s624 = smul.addr %s623, 8
        %s625 = scalar_lea.vmem %s1, %s624
        %p626 = scmp.lt.s32.totalorder %s36, 1
        %s627 = scalar_select %p626, %s36, 1
        %s628 = smul.addr %s627, 8
        %s629 = scalar_lea.vmem %s15, %s628
        %v631 = vld [vmem:[%s542] sm:$0xff]
        %v632 = vld [vmem:[%s542 + $0x8] sm:$0xff]
        %v633 = vld [vmem:[%s542 + $0x10] sm:$0xff]
        %v634 = vld [vmem:[%s542 + $0x18] sm:$0xff]
        %v635 = vld [vmem:[%s542 + $0x20] sm:$0xff]
        %v636 = vld [vmem:[%s542 + $0x28] sm:$0xff]
        %v637 = vld [vmem:[%s542 + $0x30] sm:$0xff]
        %v638 = vld [vmem:[%s542 + $0x38] sm:$0xff]
        %v639 = vld [vmem:[#allocation5] sm:$0xff]
        %v640 = vld [vmem:[#allocation5 + $0x8] sm:$0xf]
        %v641 = vld [vmem:[#allocation5 + $0xc] sm:$0xff]
        %v642 = vld [vmem:[#allocation5 + $0x14] sm:$0xf]
        %v643 = vld [vmem:[#allocation5 + $0x18] sm:$0xff]
        %v644 = vld [vmem:[#allocation5 + $0x20] sm:$0xf]
        %v645 = vld [vmem:[#allocation5 + $0x24] sm:$0xff]
        %v646 = vld [vmem:[#allocation5 + $0x2c] sm:$0xf]
        %v647 = vld [vmem:[#allocation5 + $0x30] sm:$0xff]
        %v648 = vld [vmem:[#allocation5 + $0x38] sm:$0xf]
        %v649 = vld [vmem:[#allocation5 + $0x3c] sm:$0xff]
        %v650 = vld [vmem:[#allocation5 + $0x44] sm:$0xf]
        %v651 = vld [vmem:[#allocation5 + $0x48] sm:$0xff]
        %v652 = vld [vmem:[#allocation5 + $0x50] sm:$0xf]
        %v653 = vld [vmem:[#allocation5 + $0x54] sm:$0xff]
        %v654 = vld [vmem:[#allocation5 + $0x5c] sm:$0xf]
        %v655 = vld [vmem:[#allocation5 + $0x60] sm:$0xff]
        %v656 = vld [vmem:[#allocation5 + $0x68] sm:$0xf]
        %v657 = vld [vmem:[#allocation5 + $0x6c] sm:$0xff]
        %v658 = vld [vmem:[#allocation5 + $0x74] sm:$0xf]
        %v659 = vld [vmem:[#allocation5 + $0x78] sm:$0xff]
        %v660 = vld [vmem:[#allocation5 + $0x80] sm:$0xf]
        %v661 = vld [vmem:[#allocation5 + $0x84] sm:$0xff]
        %v662 = vld [vmem:[#allocation5 + $0x8c] sm:$0xf]
        %v663 = vld [vmem:[#allocation5 + $0x90] sm:$0xff]
        %v664 = vld [vmem:[#allocation5 + $0x98] sm:$0xf]
        %v665 = vld [vmem:[#allocation5 + $0x9c] sm:$0xff]
        %v666 = vld [vmem:[#allocation5 + $0xa4] sm:$0xf]
        %v667 = vld [vmem:[#allocation5 + $0xa8] sm:$0xff]
        %v668 = vld [vmem:[#allocation5 + $0xb0] sm:$0xf]
        %v669 = vld [vmem:[#allocation5 + $0xb4] sm:$0xff]
        %v670 = vld [vmem:[#allocation5 + $0xbc] sm:$0xf]
        %v671 = vld [vmem:[#allocation5 + $0xc0] sm:$0xff]
        %v672 = vld [vmem:[#allocation5 + $0xc8] sm:$0xf]
        %v673 = vld [vmem:[#allocation5 + $0xcc] sm:$0xff]
        %v674 = vld [vmem:[#allocation5 + $0xd4] sm:$0xf]
        %v675 = vld [vmem:[#allocation5 + $0xd8] sm:$0xff]
        %v676 = vld [vmem:[#allocation5 + $0xe0] sm:$0xf]
        %v677 = vld [vmem:[#allocation5 + $0xe4] sm:$0xff]
        %v678 = vld [vmem:[#allocation5 + $0xec] sm:$0xf]
        %v679 = vld [vmem:[%s3] sm:$0x7]
        %v681 = vlaneseq
        %v682 = vshrl.u32 %v681, 7
        %v683 = vsub.s32 0, %v682
        %v684 = vrot.slane %v679, %v683
        %v685 = vlaneseq
        %v686 = vshrl.u32 %v685, 7
        %v687 = vsub.s32 1, %v686
        %v688 = vrot.slane %v679, %v687
        %v689 = vlaneseq
        %v690 = vshrl.u32 %v689, 7
        %v691 = vsub.s32 2, %v690
        %v692 = vrot.slane %v679, %v691
        %v704 = vunpack.c.l.b16 %v631
        %v705 = vunpack.c.h.b16 %v631
        %v706 = vunpack.c.l.b16 %v632
        %v707 = vunpack.c.h.b16 %v632
        %v708 = vunpack.c.l.b16 %v633
        %v709 = vunpack.c.h.b16 %v633
        %v710 = vunpack.c.l.b16 %v634
        %v711 = vunpack.c.h.b16 %v634
        %v712 = vunpack.c.l.b16 %v635
        %v713 = vunpack.c.h.b16 %v635
        %v714 = vunpack.c.l.b16 %v636
        %v715 = vunpack.c.h.b16 %v636
        %v716 = vunpack.c.l.b16 %v637
        %v717 = vunpack.c.h.b16 %v637
        %v718 = vunpack.c.l.b16 %v638
        %v719 = vunpack.c.h.b16 %v638
        %v720 = vpack.c.b16 %v706, %v704
        %v721 = vpack.c.b16 %v707, %v705
        %v722 = vpack.c.b16 %v710, %v708
        %v723 = vpack.c.b16 %v711, %v709
        %v724 = vpack.c.b16 %v714, %v712
        %v725 = vpack.c.b16 %v715, %v713
        %v726 = vpack.c.b16 %v718, %v716
        %v727 = vpack.c.b16 %v719, %v717
        %v772 = vunpack.c.l.b16 %v639
        %v773 = vunpack.c.h.b16 %v639
        %v774 = vunpack.c.l.b16 %v640
        %v775 = vunpack.c.l.b16 %v641
        %v776 = vunpack.c.h.b16 %v641
        %v777 = vunpack.c.l.b16 %v642
        %v778 = vunpack.c.l.b16 %v643
        %v779 = vunpack.c.h.b16 %v643
        %v780 = vunpack.c.l.b16 %v644
        %v781 = vunpack.c.l.b16 %v645
        %v782 = vunpack.c.h.b16 %v645
        %v783 = vunpack.c.l.b16 %v646
        %v784 = vunpack.c.l.b16 %v647
        %v785 = vunpack.c.h.b16 %v647
        %v786 = vunpack.c.l.b16 %v648
        %v787 = vunpack.c.l.b16 %v649
        %v788 = vunpack.c.h.b16 %v649
        %v789 = vunpack.c.l.b16 %v650
        %v790 = vunpack.c.l.b16 %v651
        %v791 = vunpack.c.h.b16 %v651
        %v792 = vunpack.c.l.b16 %v652
        %v793 = vunpack.c.l.b16 %v653
        %v794 = vunpack.c.h.b16 %v653
        %v795 = vunpack.c.l.b16 %v654
        %v796 = vunpack.c.l.b16 %v655
        %v797 = vunpack.c.h.b16 %v655
        %v798 = vunpack.c.l.b16 %v656
        %v799 = vunpack.c.l.b16 %v657
        %v800 = vunpack.c.h.b16 %v657
        %v801 = vunpack.c.l.b16 %v658
        %v802 = vunpack.c.l.b16 %v659
        %v803 = vunpack.c.h.b16 %v659
        %v804 = vunpack.c.l.b16 %v660
        %v805 = vunpack.c.l.b16 %v661
        %v806 = vunpack.c.h.b16 %v661
        %v807 = vunpack.c.l.b16 %v662
        %v808 = vunpack.c.l.b16 %v663
        %v809 = vunpack.c.h.b16 %v663
        %v810 = vunpack.c.l.b16 %v664
        %v811 = vunpack.c.l.b16 %v665
        %v812 = vunpack.c.h.b16 %v665
        %v813 = vunpack.c.l.b16 %v666
        %v814 = vunpack.c.l.b16 %v667
        %v815 = vunpack.c.h.b16 %v667
        %v816 = vunpack.c.l.b16 %v668
        %v817 = vunpack.c.l.b16 %v669
        %v818 = vunpack.c.h.b16 %v669
        %v819 = vunpack.c.l.b16 %v670
        %v820 = vunpack.c.l.b16 %v671
        %v821 = vunpack.c.h.b16 %v671
        %v822 = vunpack.c.l.b16 %v672
        %v823 = vunpack.c.l.b16 %v673
        %v824 = vunpack.c.h.b16 %v673
        %v825 = vunpack.c.l.b16 %v674
        %v826 = vunpack.c.l.b16 %v675
        %v827 = vunpack.c.h.b16 %v675
        %v828 = vunpack.c.l.b16 %v676
        %v829 = vunpack.c.l.b16 %v677
        %v830 = vunpack.c.h.b16 %v677
        %v831 = vunpack.c.l.b16 %v678
        %v832 = vpack.c.b16 %v775, %v772
        %v833 = vpack.c.b16 %v776, %v773
        %v834 = vpack.c.b16 %v777, %v774
        %v835 = vpack.c.b16 %v781, %v778
        %v836 = vpack.c.b16 %v782, %v779
        %v837 = vpack.c.b16 %v783, %v780
        %v838 = vpack.c.b16 %v787, %v784
        %v839 = vpack.c.b16 %v788, %v785
        %v840 = vpack.c.b16 %v789, %v786
        %v841 = vpack.c.b16 %v793, %v790
        %v842 = vpack.c.b16 %v794, %v791
        %v843 = vpack.c.b16 %v795, %v792
        %v844 = vpack.c.b16 %v799, %v796
        %v845 = vpack.c.b16 %v800, %v797
        %v846 = vpack.c.b16 %v801, %v798
        %v847 = vpack.c.b16 %v805, %v802
        %v848 = vpack.c.b16 %v806, %v803
        %v849 = vpack.c.b16 %v807, %v804
        %v850 = vpack.c.b16 %v811, %v808
        %v851 = vpack.c.b16 %v812, %v809
        %v852 = vpack.c.b16 %v813, %v810
        %v853 = vpack.c.b16 %v817, %v814
        %v854 = vpack.c.b16 %v818, %v815
        %v855 = vpack.c.b16 %v819, %v816
        %v856 = vpack.c.b16 %v823, %v820
        %v857 = vpack.c.b16 %v824, %v821
        %v858 = vpack.c.b16 %v825, %v822
        %v859 = vpack.c.b16 %v829, %v826
        %v860 = vpack.c.b16 %v830, %v827
        %v861 = vpack.c.b16 %v831, %v828
        %vm892 = vcmask 261120
        %v894 = vsel %vm892, %v721, 0
        %v897 = vsel %vm892, %v723, 0
        %v900 = vsel %vm892, %v725, 0
        %v903 = vsel %vm892, %v727, 0
        %905 = vmatprep.subr.bf16.mxu0 %v833
        %906 = vmatpush1.bf16.msra.mxu0 %v832
        %907 = vmatprep.subr.bf16.mxu0 %v836
        %908 = vmatpush1.bf16.msra.mxu0 %v835
        %909 = vmatprep.subr.bf16.mxu0 %v839
        %910 = vmatpush1.bf16.msra.mxu0 %v838
        %911 = vmatprep.subr.bf16.mxu0 %v842
        %912 = vmatpush1.bf16.msra.mxu0 %v841
        %913 = vmatprep.subr.bf16.mxu0 %v845
        %914 = vmatpush1.bf16.msra.mxu0 %v844
        %915 = vmatprep.subr.bf16.mxu0 %v848
        %916 = vmatpush1.bf16.msra.mxu0 %v847
        %917 = vmatprep.subr.bf16.mxu0 %v851
        %918 = vmatpush1.bf16.msra.mxu0 %v850
        %919 = vmatprep.subr.bf16.mxu0 %v854
        %920 = vmatpush1.bf16.msra.mxu0 %v853
        %921 = vmatprep.subr.bf16.mxu0 %v857
        %922 = vmatpush1.bf16.msra.mxu0 %v856
        %923 = vmatprep.subr.bf16.mxu0 %v860
        %924 = vmatpush1.bf16.msra.mxu0 %v859
        %925 = vmatprep.subr.bf16.mxu0 0
        %926 = vmatpush1.bf16.msra.mxu0 0
        %927 = vmatprep.subr.bf16.mxu0 0
        %928 = vmatpush1.bf16.msra.mxu0 0
        %929 = vmatprep.subr.bf16.mxu0 0
        %930 = vmatpush1.bf16.msra.mxu0 0
        %931 = vmatprep.subr.bf16.mxu0 0
        %932 = vmatpush1.bf16.msra.mxu0 0
        %933 = vmatprep.subr.bf16.mxu0 0
        %934 = vmatpush1.bf16.msra.mxu0 0
        %935 = vmatprep.subr.bf16.mxu0 0
        %936 = vmatpush1.bf16.msra.mxu0 0
        %937 = vmatprep.mubr.bf16.mxu0 %v894
        %938 = vmatmul.mubr.bf16.gmra.mrb[0].mxu0 %v720
        %v939 = vpop.f32.mrb[0].mxu0
        %v940 = vadd.f32 %v684, %v939
        %v941 = vpop.f32.mrb[0].mxu0
        %v942 = vadd.f32 %v688, %v941
        %v943 = vpop.f32.mrb[0].mxu0
        %v944 = vadd.f32 %v684, %v943
        %v945 = vpop.f32.mrb[0].mxu0
        %v946 = vadd.f32 %v688, %v945
        %947 = vmatprep.mubr.bf16.mxu0 %v897
        %948 = vmatmul.mubr.bf16.gmra.mrb[0].mxu0 %v722
        %v949 = vpop.f32.mrb[0].mxu0
        %v950 = vadd.f32 %v684, %v949
        %v951 = vpop.f32.mrb[0].mxu0
        %v952 = vadd.f32 %v688, %v951
        %v953 = vpop.f32.mrb[0].mxu0
        %v954 = vadd.f32 %v684, %v953
        %v955 = vpop.f32.mrb[0].mxu0
        %v956 = vadd.f32 %v688, %v955
        %957 = vmatprep.mubr.bf16.mxu0 %v900
        %958 = vmatmul.mubr.bf16.gmra.mrb[0].mxu0 %v724
        %v959 = vpop.f32.mrb[0].mxu0
        %v960 = vadd.f32 %v684, %v959
        %v961 = vpop.f32.mrb[0].mxu0
        %v962 = vadd.f32 %v688, %v961
        %v963 = vpop.f32.mrb[0].mxu0
        %v964 = vadd.f32 %v684, %v963
        %v965 = vpop.f32.mrb[0].mxu0
        %v966 = vadd.f32 %v688, %v965
        %967 = vmatprep.mubr.bf16.mxu0 %v903
        %968 = vmatmul.mubr.bf16.gmra.mrb[0].mxu0 %v726
        %v969 = vpop.f32.mrb[0].mxu0
        %v970 = vadd.f32 %v684, %v969
        %v971 = vpop.f32.mrb[0].mxu0
        %v972 = vadd.f32 %v688, %v971
        %v973 = vpop.f32.mrb[0].mxu0
        %v974 = vadd.f32 %v684, %v973
        %v975 = vpop.f32.mrb[0].mxu0
        %v976 = vadd.f32 %v688, %v975
        %977 = vdwg.mxu0
        %978 = vmatprep.subr.bf16.mxu0 0
        %979 = vmatpush1.bf16.msra.mxu0 %v834
        %980 = vmatprep.subr.bf16.mxu0 0
        %981 = vmatpush1.bf16.msra.mxu0 %v837
        %982 = vmatprep.subr.bf16.mxu0 0
        %983 = vmatpush1.bf16.msra.mxu0 %v840
        %984 = vmatprep.subr.bf16.mxu0 0
        %985 = vmatpush1.bf16.msra.mxu0 %v843
        %986 = vmatprep.subr.bf16.mxu0 0
        %987 = vmatpush1.bf16.msra.mxu0 %v846
        %988 = vmatprep.subr.bf16.mxu0 0
        %989 = vmatpush1.bf16.msra.mxu0 %v849
        %990 = vmatprep.subr.bf16.mxu0 0
        %991 = vmatpush1.bf16.msra.mxu0 %v852
        %992 = vmatprep.subr.bf16.mxu0 0
        %993 = vmatpush1.bf16.msra.mxu0 %v855
        %994 = vmatprep.subr.bf16.mxu0 0
        %995 = vmatpush1.bf16.msra.mxu0 %v858
        %996 = vmatprep.subr.bf16.mxu0 0
        %997 = vmatpush1.bf16.msra.mxu0 %v861
        %998 = vmatprep.subr.bf16.mxu0 0
        %999 = vmatpush1.bf16.msra.mxu0 0
        %1000 = vmatprep.subr.bf16.mxu0 0
        %1001 = vmatpush1.bf16.msra.mxu0 0
        %1002 = vmatprep.subr.bf16.mxu0 0
        %1003 = vmatpush1.bf16.msra.mxu0 0
        %1004 = vmatprep.subr.bf16.mxu0 0
        %1005 = vmatpush1.bf16.msra.mxu0 0
        %1006 = vmatprep.subr.bf16.mxu0 0
        %1007 = vmatpush1.bf16.msra.mxu0 0
        %1008 = vmatprep.subr.bf16.mxu0 0
        %1009 = vmatpush1.bf16.msra.mxu0 0
        %1010 = vmatprep.mubr.bf16.mxu0 %v894
        %1011 = vmatmul.mubr.bf16.gmra.mrb[0].mxu0 %v720
        %v1012 = vpop.f32.mrb[0].mxu0
        %v1013 = vadd.f32 %v692, %v1012
        %v1014 = vpop.f32.mrb[0].mxu0
        %v1015 = vpop.f32.mrb[0].mxu0
        %v1016 = vadd.f32 %v692, %v1015
        %v1017 = vpop.f32.mrb[0].mxu0
        %1018 = vmatprep.mubr.bf16.mxu0 %v897
        %1019 = vmatmul.mubr.bf16.gmra.mrb[0].mxu0 %v722
        %v1020 = vpop.f32.mrb[0].mxu0
        %v1021 = vadd.f32 %v692, %v1020
        %v1022 = vpop.f32.mrb[0].mxu0
        %v1023 = vpop.f32.mrb[0].mxu0
        %v1024 = vadd.f32 %v692, %v1023
        %v1025 = vpop.f32.mrb[0].mxu0
        %1026 = vmatprep.mubr.bf16.mxu0 %v900
        %1027 = vmatmul.mubr.bf16.gmra.mrb[0].mxu0 %v724
        %v1028 = vpop.f32.mrb[0].mxu0
        %v1029 = vadd.f32 %v692, %v1028
        %v1030 = vpop.f32.mrb[0].mxu0
        %v1031 = vpop.f32.mrb[0].mxu0
        %v1032 = vadd.f32 %v692, %v1031
        %v1033 = vpop.f32.mrb[0].mxu0
        %1034 = vmatprep.mubr.bf16.mxu0 %v903
        %1035 = vmatmul.mubr.bf16.gmra.mrb[0].mxu0 %v726
        %v1036 = vpop.f32.mrb[0].mxu0
        %v1037 = vadd.f32 %v692, %v1036
        %v1038 = vpop.f32.mrb[0].mxu0
        %v1039 = vpop.f32.mrb[0].mxu0
        %v1040 = vadd.f32 %v692, %v1039
        %v1041 = vpop.f32.mrb[0].mxu0
        %1042 = vdwg.mxu0
        %v1043 = vmax.f32 %v940, 0.0
        %v1044 = vmax.f32 %v942, 0.0
        %v1045 = vmax.f32 %v1013, 0.0
        %v1046 = vmax.f32 %v944, 0.0
        %v1047 = vmax.f32 %v946, 0.0
        %v1048 = vmax.f32 %v1016, 0.0
        %v1049 = vmax.f32 %v950, 0.0
        %v1050 = vmax.f32 %v952, 0.0
        %v1051 = vmax.f32 %v1021, 0.0
        %v1052 = vmax.f32 %v954, 0.0
        %v1053 = vmax.f32 %v956, 0.0
        %v1054 = vmax.f32 %v1024, 0.0
        %v1055 = vmax.f32 %v960, 0.0
        %v1056 = vmax.f32 %v962, 0.0
        %v1057 = vmax.f32 %v1029, 0.0
        %v1058 = vmax.f32 %v964, 0.0
        %v1059 = vmax.f32 %v966, 0.0
        %v1060 = vmax.f32 %v1032, 0.0
        %v1061 = vmax.f32 %v970, 0.0
        %v1062 = vmax.f32 %v972, 0.0
        %v1063 = vmax.f32 %v1037, 0.0
        %v1064 = vmax.f32 %v974, 0.0
        %v1065 = vmax.f32 %v976, 0.0
        %v1066 = vmax.f32 %v1040, 0.0
        %v1067 = vrot.slane %v1043, 4
        %v1068 = vmax.f32 %v1043, %v1067
        %v1069 = vrot.slane %v1068, 2
        %v1070 = vmax.f32 %v1068, %v1069
        %v1071 = vrot.slane %v1070, 1
        %v1072 = vmax.f32 %v1070, %v1071
        %v1073 = vrot.slane %v1044, 4
        %v1074 = vmax.f32 %v1044, %v1073
        %v1075 = vrot.slane %v1074, 2
        %v1076 = vmax.f32 %v1074, %v1075
        %v1077 = vrot.slane %v1076, 1
        %v1078 = vmax.f32 %v1076, %v1077
        %v1079 = vrot.slane %v1045, 4
        %v1080 = vmax.f32 %v1045, %v1079
        %v1081 = vrot.slane %v1080, 2
        %v1082 = vmax.f32 %v1080, %v1081
        %v1083 = vrot.slane %v1082, 1
        %v1084 = vmax.f32 %v1082, %v1083
        %v1085 = vrot.slane %v1046, 4
        %v1086 = vmax.f32 %v1046, %v1085
        %v1087 = vrot.slane %v1086, 2
        %v1088 = vmax.f32 %v1086, %v1087
        %v1089 = vrot.slane %v1088, 1
        %v1090 = vmax.f32 %v1088, %v1089
        %v1091 = vrot.slane %v1047, 4
        %v1092 = vmax.f32 %v1047, %v1091
        %v1093 = vrot.slane %v1092, 2
        %v1094 = vmax.f32 %v1092, %v1093
        %v1095 = vrot.slane %v1094, 1
        %v1096 = vmax.f32 %v1094, %v1095
        %v1097 = vrot.slane %v1048, 4
        %v1098 = vmax.f32 %v1048, %v1097
        %v1099 = vrot.slane %v1098, 2
        %v1100 = vmax.f32 %v1098, %v1099
        %v1101 = vrot.slane %v1100, 1
        %v1102 = vmax.f32 %v1100, %v1101
        %v1103 = vrot.slane %v1049, 4
        %v1104 = vmax.f32 %v1049, %v1103
        %v1105 = vrot.slane %v1104, 2
        %v1106 = vmax.f32 %v1104, %v1105
        %v1107 = vrot.slane %v1106, 1
        %v1108 = vmax.f32 %v1106, %v1107
        %v1109 = vrot.slane %v1050, 4
        %v1110 = vmax.f32 %v1050, %v1109
        %v1111 = vrot.slane %v1110, 2
        %v1112 = vmax.f32 %v1110, %v1111
        %v1113 = vrot.slane %v1112, 1
        %v1114 = vmax.f32 %v1112, %v1113
        %v1115 = vrot.slane %v1051, 4
        %v1116 = vmax.f32 %v1051, %v1115
        %v1117 = vrot.slane %v1116, 2
        %v1118 = vmax.f32 %v1116, %v1117
        %v1119 = vrot.slane %v1118, 1
        %v1120 = vmax.f32 %v1118, %v1119
        %v1121 = vrot.slane %v1052, 4
        %v1122 = vmax.f32 %v1052, %v1121
        %v1123 = vrot.slane %v1122, 2
        %v1124 = vmax.f32 %v1122, %v1123
        %v1125 = vrot.slane %v1124, 1
        %v1126 = vmax.f32 %v1124, %v1125
        %v1127 = vrot.slane %v1053, 4
        %v1128 = vmax.f32 %v1053, %v1127
        %v1129 = vrot.slane %v1128, 2
        %v1130 = vmax.f32 %v1128, %v1129
        %v1131 = vrot.slane %v1130, 1
        %v1132 = vmax.f32 %v1130, %v1131
        %v1133 = vrot.slane %v1054, 4
        %v1134 = vmax.f32 %v1054, %v1133
        %v1135 = vrot.slane %v1134, 2
        %v1136 = vmax.f32 %v1134, %v1135
        %v1137 = vrot.slane %v1136, 1
        %v1138 = vmax.f32 %v1136, %v1137
        %v1139 = vrot.slane %v1055, 4
        %v1140 = vmax.f32 %v1055, %v1139
        %v1141 = vrot.slane %v1140, 2
        %v1142 = vmax.f32 %v1140, %v1141
        %v1143 = vrot.slane %v1142, 1
        %v1144 = vmax.f32 %v1142, %v1143
        %v1145 = vrot.slane %v1056, 4
        %v1146 = vmax.f32 %v1056, %v1145
        %v1147 = vrot.slane %v1146, 2
        %v1148 = vmax.f32 %v1146, %v1147
        %v1149 = vrot.slane %v1148, 1
        %v1150 = vmax.f32 %v1148, %v1149
        %v1151 = vrot.slane %v1057, 4
        %v1152 = vmax.f32 %v1057, %v1151
        %v1153 = vrot.slane %v1152, 2
        %v1154 = vmax.f32 %v1152, %v1153
        %v1155 = vrot.slane %v1154, 1
        %v1156 = vmax.f32 %v1154, %v1155
        %v1157 = vrot.slane %v1058, 4
        %v1158 = vmax.f32 %v1058, %v1157
        %v1159 = vrot.slane %v1158, 2
        %v1160 = vmax.f32 %v1158, %v1159
        %v1161 = vrot.slane %v1160, 1
        %v1162 = vmax.f32 %v1160, %v1161
        %v1163 = vrot.slane %v1059, 4
        %v1164 = vmax.f32 %v1059, %v1163
        %v1165 = vrot.slane %v1164, 2
        %v1166 = vmax.f32 %v1164, %v1165
        %v1167 = vrot.slane %v1166, 1
        %v1168 = vmax.f32 %v1166, %v1167
        %v1169 = vrot.slane %v1060, 4
        %v1170 = vmax.f32 %v1060, %v1169
        %v1171 = vrot.slane %v1170, 2
        %v1172 = vmax.f32 %v1170, %v1171
        %v1173 = vrot.slane %v1172, 1
        %v1174 = vmax.f32 %v1172, %v1173
        %v1175 = vrot.slane %v1061, 4
        %v1176 = vmax.f32 %v1061, %v1175
        %v1177 = vrot.slane %v1176, 2
        %v1178 = vmax.f32 %v1176, %v1177
        %v1179 = vrot.slane %v1178, 1
        %v1180 = vmax.f32 %v1178, %v1179
        %v1181 = vrot.slane %v1062, 4
        %v1182 = vmax.f32 %v1062, %v1181
        %v1183 = vrot.slane %v1182, 2
        %v1184 = vmax.f32 %v1182, %v1183
        %v1185 = vrot.slane %v1184, 1
        %v1186 = vmax.f32 %v1184, %v1185
        %v1187 = vrot.slane %v1063, 4
        %v1188 = vmax.f32 %v1063, %v1187
        %v1189 = vrot.slane %v1188, 2
        %v1190 = vmax.f32 %v1188, %v1189
        %v1191 = vrot.slane %v1190, 1
        %v1192 = vmax.f32 %v1190, %v1191
        %v1193 = vrot.slane %v1064, 4
        %v1194 = vmax.f32 %v1064, %v1193
        %v1195 = vrot.slane %v1194, 2
        %v1196 = vmax.f32 %v1194, %v1195
        %v1197 = vrot.slane %v1196, 1
        %v1198 = vmax.f32 %v1196, %v1197
        %v1199 = vrot.slane %v1065, 4
        %v1200 = vmax.f32 %v1065, %v1199
        %v1201 = vrot.slane %v1200, 2
        %v1202 = vmax.f32 %v1200, %v1201
        %v1203 = vrot.slane %v1202, 1
        %v1204 = vmax.f32 %v1202, %v1203
        %v1205 = vrot.slane %v1066, 4
        %v1206 = vmax.f32 %v1066, %v1205
        %v1207 = vrot.slane %v1206, 2
        %v1208 = vmax.f32 %v1206, %v1207
        %v1209 = vrot.slane %v1208, 1
        %v1210 = vmax.f32 %v1208, %v1209
        %v1211 = vpack.c.bf16 %v1046, %v1043
        %v1212 = vpack.c.bf16 %v1047, %v1044
        %v1213 = vpack.c.bf16 %v1048, %v1045
        %v1214 = vpack.c.bf16 %v1052, %v1049
        %v1215 = vpack.c.bf16 %v1053, %v1050
        %v1216 = vpack.c.bf16 %v1054, %v1051
        %v1217 = vpack.c.bf16 %v1058, %v1055
        %v1218 = vpack.c.bf16 %v1059, %v1056
        %v1219 = vpack.c.bf16 %v1060, %v1057
        %v1220 = vpack.c.bf16 %v1064, %v1061
        %v1221 = vpack.c.bf16 %v1065, %v1062
        %v1222 = vpack.c.bf16 %v1066, %v1063
        %v1223 = vpack.c.bf16 %v1072, %v1072
        %v1224 = vpack.c.bf16 %v1078, %v1078
        %v1225 = vpack.c.bf16 %v1084, %v1084
        %v1226 = vpack.c.bf16 %v1090, %v1090
        %v1227 = vpack.c.bf16 %v1096, %v1096
        %v1228 = vpack.c.bf16 %v1102, %v1102
        %v1229 = vpack.c.bf16 %v1108, %v1108
        %v1230 = vpack.c.bf16 %v1114, %v1114
        %v1231 = vpack.c.bf16 %v1120, %v1120
        %v1232 = vpack.c.bf16 %v1126, %v1126
        %v1233 = vpack.c.bf16 %v1132, %v1132
        %v1234 = vpack.c.bf16 %v1138, %v1138
        %v1235 = vpack.c.bf16 %v1144, %v1144
        %v1236 = vpack.c.bf16 %v1150, %v1150
        %v1237 = vpack.c.bf16 %v1156, %v1156
        %v1238 = vpack.c.bf16 %v1162, %v1162
        %v1239 = vpack.c.bf16 %v1168, %v1168
        %v1240 = vpack.c.bf16 %v1174, %v1174
        %v1241 = vpack.c.bf16 %v1180, %v1180
        %v1242 = vpack.c.bf16 %v1186, %v1186
        %v1243 = vpack.c.bf16 %v1192, %v1192
        %v1244 = vpack.c.bf16 %v1198, %v1198
        %v1245 = vpack.c.bf16 %v1204, %v1204
        %v1246 = vpack.c.bf16 %v1210, %v1210
        %v1247 = vld [vmem:[#allocation7] sm:$0xff]
        %v1248 = vld [vmem:[#allocation7 + $0x8] sm:$0xf]
        %v1249 = vld [vmem:[#allocation7 + $0xc] sm:$0xff]
        %v1250 = vld [vmem:[#allocation7 + $0x14] sm:$0xf]
        %v1251 = vld [vmem:[#allocation7 + $0x18] sm:$0xff]
        %v1252 = vld [vmem:[#allocation7 + $0x20] sm:$0xf]
        %v1253 = vld [vmem:[#allocation7 + $0x24] sm:$0xff]
        %v1254 = vld [vmem:[#allocation7 + $0x2c] sm:$0xf]
        %v1255 = vld [vmem:[#allocation7 + $0x30] sm:$0xff]
        %v1256 = vld [vmem:[#allocation7 + $0x38] sm:$0xf]
        %v1257 = vld [vmem:[#allocation7 + $0x3c] sm:$0xff]
        %v1258 = vld [vmem:[#allocation7 + $0x44] sm:$0xf]
        %v1259 = vld [vmem:[#allocation7 + $0x48] sm:$0xff]
        %v1260 = vld [vmem:[#allocation7 + $0x50] sm:$0xf]
        %v1261 = vld [vmem:[#allocation7 + $0x54] sm:$0xff]
        %v1262 = vld [vmem:[#allocation7 + $0x5c] sm:$0xf]
        %v1263 = vld [vmem:[#allocation7 + $0x60] sm:$0xff]
        %v1264 = vld [vmem:[#allocation7 + $0x68] sm:$0xf]
        %v1265 = vld [vmem:[#allocation7 + $0x6c] sm:$0xff]
        %v1266 = vld [vmem:[#allocation7 + $0x74] sm:$0xf]
        %v1267 = vld [vmem:[#allocation7 + $0x78] sm:$0xff]
        %v1268 = vld [vmem:[#allocation7 + $0x80] sm:$0xf]
        %v1269 = vld [vmem:[#allocation7 + $0x84] sm:$0xff]
        %v1270 = vld [vmem:[#allocation7 + $0x8c] sm:$0xf]
        %v1271 = vld [vmem:[#allocation7 + $0x90] sm:$0xff]
        %v1272 = vld [vmem:[#allocation7 + $0x98] sm:$0xf]
        %v1273 = vld [vmem:[#allocation7 + $0x9c] sm:$0xff]
        %v1274 = vld [vmem:[#allocation7 + $0xa4] sm:$0xf]
        %v1275 = vld [vmem:[#allocation7 + $0xa8] sm:$0xff]
        %v1276 = vld [vmem:[#allocation7 + $0xb0] sm:$0xf]
        %v1277 = vld [vmem:[#allocation7 + $0xb4] sm:$0xff]
        %v1278 = vld [vmem:[#allocation7 + $0xbc] sm:$0xf]
        %v1279 = vld [vmem:[#allocation7 + $0xc0] sm:$0xff]
        %v1280 = vld [vmem:[#allocation7 + $0xc8] sm:$0xf]
        %v1281 = vld [vmem:[#allocation7 + $0xcc] sm:$0xff]
        %v1282 = vld [vmem:[#allocation7 + $0xd4] sm:$0xf]
        %v1283 = vld [vmem:[#allocation7 + $0xd8] sm:$0xff]
        %v1284 = vld [vmem:[#allocation7 + $0xe0] sm:$0xf]
        %v1285 = vld [vmem:[#allocation7 + $0xe4] sm:$0xff]
        %v1286 = vld [vmem:[#allocation7 + $0xec] sm:$0xf]
        %v1287 = vld [vmem:[#allocation7 + $0xf0] sm:$0xff]
        %v1288 = vld [vmem:[#allocation7 + $0xf8] sm:$0xf]
        %v1289 = vld [vmem:[#allocation7 + $0xfc] sm:$0xff]
        %v1290 = vld [vmem:[#allocation7 + $0x104] sm:$0xf]
        %v1291 = vld [vmem:[#allocation7 + $0x108] sm:$0xff]
        %v1292 = vld [vmem:[#allocation7 + $0x110] sm:$0xf]
        %v1293 = vld [vmem:[#allocation7 + $0x114] sm:$0xff]
        %v1294 = vld [vmem:[#allocation7 + $0x11c] sm:$0xf]
        %v1295 = vld [vmem:[#allocation7 + $0x120] sm:$0xff]
        %v1296 = vld [vmem:[#allocation7 + $0x128] sm:$0xf]
        %v1297 = vld [vmem:[#allocation7 + $0x12c] sm:$0xff]
        %v1298 = vld [vmem:[#allocation7 + $0x134] sm:$0xf]
        %v1299 = vld [vmem:[#allocation7 + $0x138] sm:$0xff]
        %v1300 = vld [vmem:[#allocation7 + $0x140] sm:$0xf]
        %v1301 = vld [vmem:[#allocation7 + $0x144] sm:$0xff]
        %v1302 = vld [vmem:[#allocation7 + $0x14c] sm:$0xf]
        %v1303 = vld [vmem:[#allocation7 + $0x150] sm:$0xff]
        %v1304 = vld [vmem:[#allocation7 + $0x158] sm:$0xf]
        %v1305 = vld [vmem:[#allocation7 + $0x15c] sm:$0xff]
        %v1306 = vld [vmem:[#allocation7 + $0x164] sm:$0xf]
        %v1307 = vld [vmem:[#allocation7 + $0x168] sm:$0xff]
        %v1308 = vld [vmem:[#allocation7 + $0x170] sm:$0xf]
        %v1309 = vld [vmem:[#allocation7 + $0x174] sm:$0xff]
        %v1310 = vld [vmem:[#allocation7 + $0x17c] sm:$0xf]
        %v1311 = vld [vmem:[#allocation7 + $0x180] sm:$0xff]
        %v1312 = vld [vmem:[#allocation7 + $0x188] sm:$0xf]
        %v1313 = vld [vmem:[#allocation7 + $0x18c] sm:$0xff]
        %v1314 = vld [vmem:[#allocation7 + $0x194] sm:$0xf]
        %v1315 = vld [vmem:[#allocation7 + $0x198] sm:$0xff]
        %v1316 = vld [vmem:[#allocation7 + $0x1a0] sm:$0xf]
        %v1317 = vld [vmem:[#allocation7 + $0x1a4] sm:$0xff]
        %v1318 = vld [vmem:[#allocation7 + $0x1ac] sm:$0xf]
        %v1319 = vld [vmem:[#allocation7 + $0x1b0] sm:$0xff]
        %v1320 = vld [vmem:[#allocation7 + $0x1b8] sm:$0xf]
        %v1321 = vld [vmem:[#allocation7 + $0x1bc] sm:$0xff]
        %v1322 = vld [vmem:[#allocation7 + $0x1c4] sm:$0xf]
        %v1323 = vld [vmem:[#allocation7 + $0x1c8] sm:$0xff]
        %v1324 = vld [vmem:[#allocation7 + $0x1d0] sm:$0xf]
        %v1325 = vld [vmem:[#allocation7 + $0x1d4] sm:$0xff]
        %v1326 = vld [vmem:[#allocation7 + $0x1dc] sm:$0xf]
        %v1327 = vld [vmem:[#allocation7 + $0x1e0] sm:$0xff]
        %v1328 = vld [vmem:[#allocation7 + $0x1e8] sm:$0xf]
        %v1329 = vld [vmem:[#allocation7 + $0x1ec] sm:$0xff]
        %v1330 = vld [vmem:[#allocation7 + $0x1f4] sm:$0xf]
        %v1331 = vld [vmem:[#allocation7 + $0x1f8] sm:$0xff]
        %v1332 = vld [vmem:[#allocation7 + $0x200] sm:$0xf]
        %v1333 = vld [vmem:[#allocation7 + $0x204] sm:$0xff]
        %v1334 = vld [vmem:[#allocation7 + $0x20c] sm:$0xf]
        %v1335 = vld [vmem:[#allocation7 + $0x210] sm:$0xff]
        %v1336 = vld [vmem:[#allocation7 + $0x218] sm:$0xf]
        %v1337 = vld [vmem:[#allocation7 + $0x21c] sm:$0xff]
        %v1338 = vld [vmem:[#allocation7 + $0x224] sm:$0xf]
        %v1339 = vld [vmem:[#allocation7 + $0x228] sm:$0xff]
        %v1340 = vld [vmem:[#allocation7 + $0x230] sm:$0xf]
        %v1341 = vld [vmem:[#allocation7 + $0x234] sm:$0xff]
        %v1342 = vld [vmem:[#allocation7 + $0x23c] sm:$0xf]
        %v1343 = vld [vmem:[%s5] sm:$0x7]
        %v1345 = vlaneseq
        %v1346 = vshrl.u32 %v1345, 7
        %v1347 = vsub.s32 0, %v1346
        %v1348 = vrot.slane %v1343, %v1347
        %v1349 = vlaneseq
        %v1350 = vshrl.u32 %v1349, 7
        %v1351 = vsub.s32 1, %v1350
        %v1352 = vrot.slane %v1343, %v1351
        %v1353 = vlaneseq
        %v1354 = vshrl.u32 %v1353, 7
        %v1355 = vsub.s32 2, %v1354
        %v1356 = vrot.slane %v1343, %v1355
        %v1384 = vunpack.c.l.b16 %v1223
        %v1385 = vunpack.c.l.b16 %v1224
        %v1386 = vunpack.c.l.b16 %v1225
        %v1387 = vunpack.c.l.b16 %v1226
        %v1388 = vunpack.c.l.b16 %v1227
        %v1389 = vunpack.c.l.b16 %v1228
        %v1390 = vunpack.c.l.b16 %v1229
        %v1391 = vunpack.c.l.b16 %v1230
        %v1392 = vunpack.c.l.b16 %v1231
        %v1393 = vunpack.c.l.b16 %v1232
        %v1394 = vunpack.c.l.b16 %v1233
        %v1395 = vunpack.c.l.b16 %v1234
        %v1396 = vunpack.c.l.b16 %v1235
        %v1397 = vunpack.c.l.b16 %v1236
        %v1398 = vunpack.c.l.b16 %v1237
        %v1399 = vunpack.c.l.b16 %v1238
        %v1400 = vunpack.c.l.b16 %v1239
        %v1401 = vunpack.c.l.b16 %v1240
        %v1402 = vunpack.c.l.b16 %v1241
        %v1403 = vunpack.c.l.b16 %v1242
        %v1404 = vunpack.c.l.b16 %v1243
        %v1405 = vunpack.c.l.b16 %v1244
        %v1406 = vunpack.c.l.b16 %v1245
        %v1407 = vunpack.c.l.b16 %v1246
        %vm1408 = vcmask 1041409
        %v1409 = vsel %vm1408, %v1387, %v1384
        %vm1410 = vcmask 1042434
        %v1411 = vsel %vm1410, %v1390, %v1409
        %vm1412 = vcmask 1043459
        %v1413 = vsel %vm1412, %v1393, %v1411
        %vm1414 = vcmask 1044484
        %v1415 = vsel %vm1414, %v1396, %v1413
        %vm1416 = vcmask 1045509
        %v1417 = vsel %vm1416, %v1399, %v1415
        %vm1418 = vcmask 1046534
        %v1419 = vsel %vm1418, %v1402, %v1417
        %vm1420 = vcmask 1047559
        %v1421 = vsel %vm1420, %v1405, %v1419
        %v1422 = vsel %vm1408, %v1388, %v1385
        %v1423 = vsel %vm1410, %v1391, %v1422
        %v1424 = vsel %vm1412, %v1394, %v1423
        %v1425 = vsel %vm1414, %v1397, %v1424
        %v1426 = vsel %vm1416, %v1400, %v1425
        %v1427 = vsel %vm1418, %v1403, %v1426
        %v1428 = vsel %vm1420, %v1406, %v1427
        %v1429 = vsel %vm1408, %v1389, %v1386
        %v1430 = vsel %vm1410, %v1392, %v1429
        %v1431 = vsel %vm1412, %v1395, %v1430
        %v1432 = vsel %vm1414, %v1398, %v1431
        %v1433 = vsel %vm1416, %v1401, %v1432
        %v1434 = vsel %vm1418, %v1404, %v1433
        %v1435 = vsel %vm1420, %v1407, %v1434
        %v1436 = vpack.c.b16 %v1421, %v1421
        %v1437 = vpack.c.b16 %v1428, %v1428
        %v1438 = vpack.c.b16 %v1435, %v1435
        %v1538 = vunpack.c.l.b16 %v1247
        %v1539 = vunpack.c.h.b16 %v1247
        %v1540 = vunpack.c.l.b16 %v1248
        %v1541 = vunpack.c.l.b16 %v1249
        %v1542 = vunpack.c.h.b16 %v1249
        %v1543 = vunpack.c.l.b16 %v1250
        %v1544 = vunpack.c.l.b16 %v1251
        %v1545 = vunpack.c.h.b16 %v1251
        %v1546 = vunpack.c.l.b16 %v1252
        %v1547 = vunpack.c.l.b16 %v1253
        %v1548 = vunpack.c.h.b16 %v1253
        %v1549 = vunpack.c.l.b16 %v1254
        %v1550 = vunpack.c.l.b16 %v1255
        %v1551 = vunpack.c.h.b16 %v1255
        %v1552 = vunpack.c.l.b16 %v1256
        %v1553 = vunpack.c.l.b16 %v1257
        %v1554 = vunpack.c.h.b16 %v1257
        %v1555 = vunpack.c.l.b16 %v1258
        %v1556 = vunpack.c.l.b16 %v1259
        %v1557 = vunpack.c.h.b16 %v1259
        %v1558 = vunpack.c.l.b16 %v1260
        %v1559 = vunpack.c.l.b16 %v1261
        %v1560 = vunpack.c.h.b16 %v1261
        %v1561 = vunpack.c.l.b16 %v1262
        %v1562 = vunpack.c.l.b16 %v1263
        %v1563 = vunpack.c.h.b16 %v1263
        %v1564 = vunpack.c.l.b16 %v1264
        %v1565 = vunpack.c.l.b16 %v1265
        %v1566 = vunpack.c.h.b16 %v1265
        %v1567 = vunpack.c.l.b16 %v1266
        %v1568 = vunpack.c.l.b16 %v1267
        %v1569 = vunpack.c.h.b16 %v1267
        %v1570 = vunpack.c.l.b16 %v1268
        %v1571 = vunpack.c.l.b16 %v1269
        %v1572 = vunpack.c.h.b16 %v1269
        %v1573 = vunpack.c.l.b16 %v1270
        %v1574 = vunpack.c.l.b16 %v1271
        %v1575 = vunpack.c.h.b16 %v1271
        %v1576 = vunpack.c.l.b16 %v1272
        %v1577 = vunpack.c.l.b16 %v1273
        %v1578 = vunpack.c.h.b16 %v1273
        %v1579 = vunpack.c.l.b16 %v1274
        %v1580 = vunpack.c.l.b16 %v1275
        %v1581 = vunpack.c.h.b16 %v1275
        %v1582 = vunpack.c.l.b16 %v1276
        %v1583 = vunpack.c.l.b16 %v1277
        %v1584 = vunpack.c.h.b16 %v1277
        %v1585 = vunpack.c.l.b16 %v1278
        %v1586 = vunpack.c.l.b16 %v1279
        %v1587 = vunpack.c.h.b16 %v1279
        %v1588 = vunpack.c.l.b16 %v1280
        %v1589 = vunpack.c.l.b16 %v1281
        %v1590 = vunpack.c.h.b16 %v1281
        %v1591 = vunpack.c.l.b16 %v1282
        %v1592 = vunpack.c.l.b16 %v1283
        %v1593 = vunpack.c.h.b16 %v1283
        %v1594 = vunpack.c.l.b16 %v1284
        %v1595 = vunpack.c.l.b16 %v1285
        %v1596 = vunpack.c.h.b16 %v1285
        %v1597 = vunpack.c.l.b16 %v1286
        %v1598 = vunpack.c.l.b16 %v1287
        %v1599 = vunpack.c.h.b16 %v1287
        %v1600 = vunpack.c.l.b16 %v1288
        %v1601 = vunpack.c.l.b16 %v1289
        %v1602 = vunpack.c.h.b16 %v1289
        %v1603 = vunpack.c.l.b16 %v1290
        %v1604 = vunpack.c.l.b16 %v1291
        %v1605 = vunpack.c.h.b16 %v1291
        %v1606 = vunpack.c.l.b16 %v1292
        %v1607 = vunpack.c.l.b16 %v1293
        %v1608 = vunpack.c.h.b16 %v1293
        %v1609 = vunpack.c.l.b16 %v1294
        %v1610 = vunpack.c.l.b16 %v1295
        %v1611 = vunpack.c.h.b16 %v1295
        %v1612 = vunpack.c.l.b16 %v1296
        %v1613 = vunpack.c.l.b16 %v1297
        %v1614 = vunpack.c.h.b16 %v1297
        %v1615 = vunpack.c.l.b16 %v1298
        %v1616 = vunpack.c.l.b16 %v1299
        %v1617 = vunpack.c.h.b16 %v1299
        %v1618 = vunpack.c.l.b16 %v1300
        %v1619 = vunpack.c.l.b16 %v1301
        %v1620 = vunpack.c.h.b16 %v1301
        %v1621 = vunpack.c.l.b16 %v1302
        %v1622 = vunpack.c.l.b16 %v1303
        %v1623 = vunpack.c.h.b16 %v1303
        %v1624 = vunpack.c.l.b16 %v1304
        %v1625 = vunpack.c.l.b16 %v1305
        %v1626 = vunpack.c.h.b16 %v1305
        %v1627 = vunpack.c.l.b16 %v1306
        %v1628 = vunpack.c.l.b16 %v1307
        %v1629 = vunpack.c.h.b16 %v1307
        %v1630 = vunpack.c.l.b16 %v1308
        %v1631 = vunpack.c.l.b16 %v1309
        %v1632 = vunpack.c.h.b16 %v1309
        %v1633 = vunpack.c.l.b16 %v1310
        %v1634 = vunpack.c.l.b16 %v1311
        %v1635 = vunpack.c.h.b16 %v1311
        %v1636 = vunpack.c.l.b16 %v1312
        %v1637 = vunpack.c.l.b16 %v1313
        %v1638 = vunpack.c.h.b16 %v1313
        %v1639 = vunpack.c.l.b16 %v1314
        %v1640 = vunpack.c.l.b16 %v1315
        %v1641 = vunpack.c.h.b16 %v1315
        %v1642 = vunpack.c.l.b16 %v1316
        %v1643 = vunpack.c.l.b16 %v1317
        %v1644 = vunpack.c.h.b16 %v1317
        %v1645 = vunpack.c.l.b16 %v1318
        %v1646 = vunpack.c.l.b16 %v1319
        %v1647 = vunpack.c.h.b16 %v1319
        %v1648 = vunpack.c.l.b16 %v1320
        %v1649 = vunpack.c.l.b16 %v1321
        %v1650 = vunpack.c.h.b16 %v1321
        %v1651 = vunpack.c.l.b16 %v1322
        %v1652 = vunpack.c.l.b16 %v1323
        %v1653 = vunpack.c.h.b16 %v1323
        %v1654 = vunpack.c.l.b16 %v1324
        %v1655 = vunpack.c.l.b16 %v1325
        %v1656 = vunpack.c.h.b16 %v1325
        %v1657 = vunpack.c.l.b16 %v1326
        %v1658 = vunpack.c.l.b16 %v1327
        %v1659 = vunpack.c.h.b16 %v1327
        %v1660 = vunpack.c.l.b16 %v1328
        %v1661 = vunpack.c.l.b16 %v1329
        %v1662 = vunpack.c.h.b16 %v1329
        %v1663 = vunpack.c.l.b16 %v1330
        %v1664 = vunpack.c.l.b16 %v1331
        %v1665 = vunpack.c.h.b16 %v1331
        %v1666 = vunpack.c.l.b16 %v1332
        %v1667 = vunpack.c.l.b16 %v1333
        %v1668 = vunpack.c.h.b16 %v1333
        %v1669 = vunpack.c.l.b16 %v1334
        %v1670 = vunpack.c.l.b16 %v1335
        %v1671 = vunpack.c.h.b16 %v1335
        %v1672 = vunpack.c.l.b16 %v1336
        %v1673 = vunpack.c.l.b16 %v1337
        %v1674 = vunpack.c.h.b16 %v1337
        %v1675 = vunpack.c.l.b16 %v1338
        %v1676 = vunpack.c.l.b16 %v1339
        %v1677 = vunpack.c.h.b16 %v1339
        %v1678 = vunpack.c.l.b16 %v1340
        %v1679 = vunpack.c.l.b16 %v1341
        %v1680 = vunpack.c.h.b16 %v1341
        %v1681 = vunpack.c.l.b16 %v1342
        %v1682 = vpack.c.b16 %v1541, %v1538
        %v1683 = vpack.c.b16 %v1542, %v1539
        %v1684 = vpack.c.b16 %v1543, %v1540
        %v1685 = vpack.c.b16 %v1547, %v1544
        %v1686 = vpack.c.b16 %v1548, %v1545
        %v1687 = vpack.c.b16 %v1549, %v1546
        %v1688 = vpack.c.b16 %v1553, %v1550
        %v1689 = vpack.c.b16 %v1554, %v1551
        %v1690 = vpack.c.b16 %v1555, %v1552
        %v1691 = vpack.c.b16 %v1559, %v1556
        %v1692 = vpack.c.b16 %v1560, %v1557
        %v1693 = vpack.c.b16 %v1561, %v1558
        %v1694 = vpack.c.b16 %v1565, %v1562
        %v1695 = vpack.c.b16 %v1566, %v1563
        %v1696 = vpack.c.b16 %v1567, %v1564
        %v1697 = vpack.c.b16 %v1571, %v1568
        %v1698 = vpack.c.b16 %v1572, %v1569
        %v1699 = vpack.c.b16 %v1573, %v1570
        %v1700 = vpack.c.b16 %v1577, %v1574
        %v1701 = vpack.c.b16 %v1578, %v1575
        %v1702 = vpack.c.b16 %v1579, %v1576
        %v1703 = vpack.c.b16 %v1583, %v1580
        %v1704 = vpack.c.b16 %v1584, %v1581
        %v1705 = vpack.c.b16 %v1585, %v1582
        %v1706 = vpack.c.b16 %v1589, %v1586
        %v1707 = vpack.c.b16 %v1590, %v1587
        %v1708 = vpack.c.b16 %v1591, %v1588
        %v1709 = vpack.c.b16 %v1595, %v1592
        %v1710 = vpack.c.b16 %v1596, %v1593
        %v1711 = vpack.c.b16 %v1597, %v1594
        %v1712 = vpack.c.b16 %v1601, %v1598
        %v1713 = vpack.c.b16 %v1602, %v1599
        %v1714 = vpack.c.b16 %v1603, %v1600
        %v1715 = vpack.c.b16 %v1607, %v1604
        %v1716 = vpack.c.b16 %v1608, %v1605
        %v1717 = vpack.c.b16 %v1609, %v1606
        %v1718 = vpack.c.b16 %v1613, %v1610
        %v1719 = vpack.c.b16 %v1614, %v1611
        %v1720 = vpack.c.b16 %v1615, %v1612
        %v1721 = vpack.c.b16 %v1619, %v1616
        %v1722 = vpack.c.b16 %v1620, %v1617
        %v1723 = vpack.c.b16 %v1621, %v1618
        %v1724 = vpack.c.b16 %v1625, %v1622
        %v1725 = vpack.c.b16 %v1626, %v1623
        %v1726 = vpack.c.b16 %v1627, %v1624
        %v1727 = vpack.c.b16 %v1631, %v1628
        %v1728 = vpack.c.b16 %v1632, %v1629
        %v1729 = vpack.c.b16 %v1633, %v1630
        %v1730 = vpack.c.b16 %v1637, %v1634
        %v1731 = vpack.c.b16 %v1638, %v1635
        %v1732 = vpack.c.b16 %v1639, %v1636
        %v1733 = vpack.c.b16 %v1643, %v1640
        %v1734 = vpack.c.b16 %v1644, %v1641
        %v1735 = vpack.c.b16 %v1645, %v1642
        %v1736 = vpack.c.b16 %v1649, %v1646
        %v1737 = vpack.c.b16 %v1650, %v1647
        %v1738 = vpack.c.b16 %v1651, %v1648
        %v1739 = vpack.c.b16 %v1655, %v1652
        %v1740 = vpack.c.b16 %v1656, %v1653
        %v1741 = vpack.c.b16 %v1657, %v1654
        %v1742 = vpack.c.b16 %v1661, %v1658
        %v1743 = vpack.c.b16 %v1662, %v1659
        %v1744 = vpack.c.b16 %v1663, %v1660
        %v1745 = vpack.c.b16 %v1667, %v1664
        %v1746 = vpack.c.b16 %v1668, %v1665
        %v1747 = vpack.c.b16 %v1669, %v1666
        %v1748 = vpack.c.b16 %v1673, %v1670
        %v1749 = vpack.c.b16 %v1674, %v1671
        %v1750 = vpack.c.b16 %v1675, %v1672
        %v1751 = vpack.c.b16 %v1679, %v1676
        %v1752 = vpack.c.b16 %v1680, %v1677
        %v1753 = vpack.c.b16 %v1681, %v1678
        %1826 = vmatprep.subr.bf16.mxu0 %v1683
        %1827 = vmatpush1.bf16.msra.mxu0 %v1682
        %1828 = vmatprep.subr.bf16.mxu0 %v1686
        %1829 = vmatpush1.bf16.msra.mxu0 %v1685
        %1830 = vmatprep.subr.bf16.mxu0 %v1689
        %1831 = vmatpush1.bf16.msra.mxu0 %v1688
        %1832 = vmatprep.subr.bf16.mxu0 %v1692
        %1833 = vmatpush1.bf16.msra.mxu0 %v1691
        %1834 = vmatprep.subr.bf16.mxu0 %v1695
        %1835 = vmatpush1.bf16.msra.mxu0 %v1694
        %1836 = vmatprep.subr.bf16.mxu0 %v1698
        %1837 = vmatpush1.bf16.msra.mxu0 %v1697
        %1838 = vmatprep.subr.bf16.mxu0 %v1701
        %1839 = vmatpush1.bf16.msra.mxu0 %v1700
        %1840 = vmatprep.subr.bf16.mxu0 %v1704
        %1841 = vmatpush1.bf16.msra.mxu0 %v1703
        %1842 = vmatprep.subr.bf16.mxu0 %v1707
        %1843 = vmatpush1.bf16.msra.mxu0 %v1706
        %1844 = vmatprep.subr.bf16.mxu0 %v1710
        %1845 = vmatpush1.bf16.msra.mxu0 %v1709
        %1846 = vmatprep.subr.bf16.mxu0 %v1713
        %1847 = vmatpush1.bf16.msra.mxu0 %v1712
        %1848 = vmatprep.subr.bf16.mxu0 %v1716
        %1849 = vmatpush1.bf16.msra.mxu0 %v1715
        %1850 = vmatprep.subr.bf16.mxu0 %v1719
        %1851 = vmatpush1.bf16.msra.mxu0 %v1718
        %1852 = vmatprep.subr.bf16.mxu0 %v1722
        %1853 = vmatpush1.bf16.msra.mxu0 %v1721
        %1854 = vmatprep.subr.bf16.mxu0 %v1725
        %1855 = vmatpush1.bf16.msra.mxu0 %v1724
        %1856 = vmatprep.subr.bf16.mxu0 %v1728
        %1857 = vmatpush1.bf16.msra.mxu0 %v1727
        %1858 = vmatprep.mubr.bf16.mxu0 %v1437
        %1859 = vmatmul.mubr.bf16.gmra.mrb[0].mxu0 %v1436
        %v1860 = vpop.f32.mrb[0].mxu0
        %v1861 = vadd.f32 %v1348, %v1860
        %v1862 = vpop.f32.mrb[0].mxu0
        %v1863 = vadd.f32 %v1352, %v1862
        %v1864 = vpop.f32.mrb[0].mxu0
        %v1865 = vpop.f32.mrb[0].mxu0
        %1866 = vdwg.mxu0
        %1867 = vmatprep.subr.bf16.mxu0 %v1731
        %1868 = vmatpush1.bf16.msra.mxu0 %v1730
        %1869 = vmatprep.subr.bf16.mxu0 %v1734
        %1870 = vmatpush1.bf16.msra.mxu0 %v1733
        %1871 = vmatprep.subr.bf16.mxu0 %v1737
        %1872 = vmatpush1.bf16.msra.mxu0 %v1736
        %1873 = vmatprep.subr.bf16.mxu0 %v1740
        %1874 = vmatpush1.bf16.msra.mxu0 %v1739
        %1875 = vmatprep.subr.bf16.mxu0 %v1743
        %1876 = vmatpush1.bf16.msra.mxu0 %v1742
        %1877 = vmatprep.subr.bf16.mxu0 %v1746
        %1878 = vmatpush1.bf16.msra.mxu0 %v1745
        %1879 = vmatprep.subr.bf16.mxu0 %v1749
        %1880 = vmatpush1.bf16.msra.mxu0 %v1748
        %1881 = vmatprep.subr.bf16.mxu0 %v1752
        %1882 = vmatpush1.bf16.msra.mxu0 %v1751
        %1883 = vmatprep.subr.bf16.mxu0 0
        %1884 = vmatpush1.bf16.msra.mxu0 0
        %1885 = vmatprep.subr.bf16.mxu0 0
        %1886 = vmatpush1.bf16.msra.mxu0 0
        %1887 = vmatprep.subr.bf16.mxu0 0
        %1888 = vmatpush1.bf16.msra.mxu0 0
        %1889 = vmatprep.subr.bf16.mxu0 0
        %1890 = vmatpush1.bf16.msra.mxu0 0
        %1891 = vmatprep.subr.bf16.mxu0 0
        %1892 = vmatpush1.bf16.msra.mxu0 0
        %1893 = vmatprep.subr.bf16.mxu0 0
        %1894 = vmatpush1.bf16.msra.mxu0 0
        %1895 = vmatprep.subr.bf16.mxu0 0
        %1896 = vmatpush1.bf16.msra.mxu0 0
        %1897 = vmatprep.subr.bf16.mxu0 0
        %1898 = vmatpush1.bf16.msra.mxu0 0
        %1899 = vmatprep.mubr.bf16.mxu0 0
        %1900 = vmatmul.mubr.bf16.gmra.mrb[0].mxu0 %v1438
        %v1901 = vpop.f32.mrb[0].mxu0
        %v1902 = vadd.f32 %v1861, %v1901
        %v1903 = vpop.f32.mrb[0].mxu0
        %v1904 = vadd.f32 %v1863, %v1903
        %v1905 = vpop.f32.mrb[0].mxu0
        %v1906 = vpop.f32.mrb[0].mxu0
        %1907 = vdwg.mxu0
        %1908 = vmatprep.subr.bf16.mxu0 0
        %1909 = vmatpush1.bf16.msra.mxu0 %v1684
        %1910 = vmatprep.subr.bf16.mxu0 0
        %1911 = vmatpush1.bf16.msra.mxu0 %v1687
        %1912 = vmatprep.subr.bf16.mxu0 0
        %1913 = vmatpush1.bf16.msra.mxu0 %v1690
        %1914 = vmatprep.subr.bf16.mxu0 0
        %1915 = vmatpush1.bf16.msra.mxu0 %v1693
        %1916 = vmatprep.subr.bf16.mxu0 0
        %1917 = vmatpush1.bf16.msra.mxu0 %v1696
        %1918 = vmatprep.subr.bf16.mxu0 0
        %1919 = vmatpush1.bf16.msra.mxu0 %v1699
        %1920 = vmatprep.subr.bf16.mxu0 0
        %1921 = vmatpush1.bf16.msra.mxu0 %v1702
        %1922 = vmatprep.subr.bf16.mxu0 0
        %1923 = vmatpush1.bf16.msra.mxu0 %v1705
        %1924 = vmatprep.subr.bf16.mxu0 0
        %1925 = vmatpush1.bf16.msra.mxu0 %v1708
        %1926 = vmatprep.subr.bf16.mxu0 0
        %1927 = vmatpush1.bf16.msra.mxu0 %v1711
        %1928 = vmatprep.subr.bf16.mxu0 0
        %1929 = vmatpush1.bf16.msra.mxu0 %v1714
        %1930 = vmatprep.subr.bf16.mxu0 0
        %1931 = vmatpush1.bf16.msra.mxu0 %v1717
        %1932 = vmatprep.subr.bf16.mxu0 0
        %1933 = vmatpush1.bf16.msra.mxu0 %v1720
        %1934 = vmatprep.subr.bf16.mxu0 0
        %1935 = vmatpush1.bf16.msra.mxu0 %v1723
        %1936 = vmatprep.subr.bf16.mxu0 0
        %1937 = vmatpush1.bf16.msra.mxu0 %v1726
        %1938 = vmatprep.subr.bf16.mxu0 0
        %1939 = vmatpush1.bf16.msra.mxu0 %v1729
        %1940 = vmatprep.mubr.bf16.mxu0 %v1437
        %1941 = vmatmul.mubr.bf16.gmra.mrb[0].mxu0 %v1436
        %v1942 = vpop.f32.mrb[0].mxu0
        %v1943 = vadd.f32 %v1356, %v1942
        %v1944 = vpop.f32.mrb[0].mxu0
        %v1945 = vpop.f32.mrb[0].mxu0
        %v1946 = vpop.f32.mrb[0].mxu0
        %1947 = vdwg.mxu0
        %1948 = vmatprep.subr.bf16.mxu0 0
        %1949 = vmatpush1.bf16.msra.mxu0 %v1732
        %1950 = vmatprep.subr.bf16.mxu0 0
        %1951 = vmatpush1.bf16.msra.mxu0 %v1735
        %1952 = vmatprep.subr.bf16.mxu0 0
        %1953 = vmatpush1.bf16.msra.mxu0 %v1738
        %1954 = vmatprep.subr.bf16.mxu0 0
        %1955 = vmatpush1.bf16.msra.mxu0 %v1741
        %1956 = vmatprep.subr.bf16.mxu0 0
        %1957 = vmatpush1.bf16.msra.mxu0 %v1744
        %1958 = vmatprep.subr.bf16.mxu0 0
        %1959 = vmatpush1.bf16.msra.mxu0 %v1747
        %1960 = vmatprep.subr.bf16.mxu0 0
        %1961 = vmatpush1.bf16.msra.mxu0 %v1750
        %1962 = vmatprep.subr.bf16.mxu0 0
        %1963 = vmatpush1.bf16.msra.mxu0 %v1753
        %1964 = vmatprep.subr.bf16.mxu0 0
        %1965 = vmatpush1.bf16.msra.mxu0 0
        %1966 = vmatprep.subr.bf16.mxu0 0
        %1967 = vmatpush1.bf16.msra.mxu0 0
        %1968 = vmatprep.subr.bf16.mxu0 0
        %1969 = vmatpush1.bf16.msra.mxu0 0
        %1970 = vmatprep.subr.bf16.mxu0 0
        %1971 = vmatpush1.bf16.msra.mxu0 0
        %1972 = vmatprep.subr.bf16.mxu0 0
        %1973 = vmatpush1.bf16.msra.mxu0 0
        %1974 = vmatprep.subr.bf16.mxu0 0
        %1975 = vmatpush1.bf16.msra.mxu0 0
        %1976 = vmatprep.subr.bf16.mxu0 0
        %1977 = vmatpush1.bf16.msra.mxu0 0
        %1978 = vmatprep.subr.bf16.mxu0 0
        %1979 = vmatpush1.bf16.msra.mxu0 0
        %1980 = vmatprep.mubr.bf16.mxu0 0
        %1981 = vmatmul.mubr.bf16.gmra.mrb[0].mxu0 %v1438
        %v1982 = vpop.f32.mrb[0].mxu0
        %v1983 = vadd.f32 %v1943, %v1982
        %v1984 = vpop.f32.mrb[0].mxu0
        %v1985 = vpop.f32.mrb[0].mxu0
        %v1986 = vpop.f32.mrb[0].mxu0
        %1987 = vdwg.mxu0
        %v1988 = vld [vmem:[#allocation8] sm:$0xff]
        %v1989 = vld [vmem:[#allocation8 + $0x8] sm:$0xff]
        %v1990 = vld [vmem:[#allocation8 + $0x10] sm:$0xff]
        %v1991 = vld [vmem:[#allocation8 + $0x18] sm:$0xff]
        %v1992 = vld [vmem:[#allocation8 + $0x20] sm:$0xff]
        %v1993 = vld [vmem:[#allocation8 + $0x28] sm:$0xff]
        %v1994 = vld [vmem:[#allocation8 + $0x30] sm:$0xff]
        %v1995 = vld [vmem:[#allocation8 + $0x38] sm:$0xff]
        %v1996 = vld [vmem:[#allocation8 + $0x40] sm:$0xff]
        %v1997 = vld [vmem:[#allocation8 + $0x48] sm:$0xff]
        %v1998 = vld [vmem:[#allocation8 + $0x50] sm:$0xff]
        %v1999 = vld [vmem:[#allocation8 + $0x58] sm:$0xff]
        %v2000 = vld [vmem:[#allocation8 + $0x60] sm:$0xff]
        %v2001 = vld [vmem:[#allocation8 + $0x68] sm:$0xff]
        %v2002 = vld [vmem:[#allocation8 + $0x70] sm:$0xff]
        %v2003 = vld [vmem:[#allocation8 + $0x78] sm:$0xff]
        %v2004 = vld [vmem:[#allocation8 + $0x80] sm:$0xff]
        %v2005 = vld [vmem:[#allocation8 + $0x88] sm:$0xff]
        %v2006 = vld [vmem:[#allocation8 + $0x90] sm:$0xff]
        %v2007 = vld [vmem:[#allocation8 + $0x98] sm:$0xff]
        %v2008 = vld [vmem:[#allocation8 + $0xa0] sm:$0xff]
        %v2009 = vld [vmem:[#allocation8 + $0xa8] sm:$0xff]
        %v2010 = vld [vmem:[#allocation8 + $0xb0] sm:$0xff]
        %v2011 = vld [vmem:[#allocation8 + $0xb8] sm:$0xff]
        %v2012 = vld [vmem:[#allocation8 + $0xc0] sm:$0xff]
        %v2013 = vld [vmem:[#allocation8 + $0xc8] sm:$0xff]
        %v2014 = vld [vmem:[#allocation8 + $0xd0] sm:$0xff]
        %v2015 = vld [vmem:[#allocation8 + $0xd8] sm:$0xff]
        %v2016 = vld [vmem:[#allocation8 + $0xe0] sm:$0xff]
        %v2017 = vld [vmem:[#allocation8 + $0xe8] sm:$0xff]
        %v2018 = vld [vmem:[#allocation8 + $0xf0] sm:$0xff]
        %v2019 = vld [vmem:[#allocation8 + $0xf8] sm:$0xff]
        %v2020 = vld [vmem:[#allocation8 + $0x100] sm:$0xff]
        %v2021 = vld [vmem:[#allocation8 + $0x108] sm:$0xff]
        %v2022 = vld [vmem:[#allocation8 + $0x110] sm:$0xff]
        %v2023 = vld [vmem:[#allocation8 + $0x118] sm:$0xff]
        %v2024 = vld [vmem:[#allocation8 + $0x120] sm:$0xff]
        %v2025 = vld [vmem:[#allocation8 + $0x128] sm:$0xff]
        %v2026 = vld [vmem:[#allocation8 + $0x130] sm:$0xff]
        %v2027 = vld [vmem:[#allocation8 + $0x138] sm:$0xff]
        %v2028 = vld [vmem:[#allocation8 + $0x140] sm:$0xff]
        %v2029 = vld [vmem:[#allocation8 + $0x148] sm:$0xff]
        %v2030 = vld [vmem:[#allocation8 + $0x150] sm:$0xff]
        %v2031 = vld [vmem:[#allocation8 + $0x158] sm:$0xff]
        %v2032 = vld [vmem:[#allocation8 + $0x160] sm:$0xff]
        %v2033 = vld [vmem:[#allocation8 + $0x168] sm:$0xff]
        %v2034 = vld [vmem:[#allocation8 + $0x170] sm:$0xff]
        %v2035 = vld [vmem:[#allocation8 + $0x178] sm:$0xff]
        %v2036 = vld [vmem:[#allocation8 + $0x180] sm:$0xff]
        %v2037 = vld [vmem:[#allocation8 + $0x188] sm:$0xff]
        %v2038 = vld [vmem:[#allocation8 + $0x190] sm:$0xff]
        %v2039 = vld [vmem:[#allocation8 + $0x198] sm:$0xff]
        %v2040 = vld [vmem:[#allocation8 + $0x1a0] sm:$0xff]
        %v2041 = vld [vmem:[#allocation8 + $0x1a8] sm:$0xff]
        %v2042 = vld [vmem:[#allocation8 + $0x1b0] sm:$0xff]
        %v2043 = vld [vmem:[#allocation8 + $0x1b8] sm:$0xff]
        %v2044 = vld [vmem:[#allocation8 + $0x1c0] sm:$0xff]
        %v2045 = vld [vmem:[#allocation8 + $0x1c8] sm:$0xff]
        %v2046 = vld [vmem:[#allocation8 + $0x1d0] sm:$0xff]
        %v2047 = vld [vmem:[#allocation8 + $0x1d8] sm:$0xff]
        %v2048 = vld [vmem:[#allocation8 + $0x1e0] sm:$0xff]
        %v2049 = vld [vmem:[#allocation8 + $0x1e8] sm:$0xff]
        %v2050 = vld [vmem:[#allocation8 + $0x1f0] sm:$0xff]
        %v2051 = vld [vmem:[#allocation8 + $0x1f8] sm:$0xff]
        %v2052 = vld [vmem:[#allocation8 + $0x200] sm:$0xff]
        %v2053 = vld [vmem:[#allocation8 + $0x208] sm:$0xff]
        %v2054 = vld [vmem:[#allocation8 + $0x210] sm:$0xff]
        %v2055 = vld [vmem:[#allocation8 + $0x218] sm:$0xff]
        %v2056 = vld [vmem:[#allocation8 + $0x220] sm:$0xff]
        %v2057 = vld [vmem:[#allocation8 + $0x228] sm:$0xff]
        %v2058 = vld [vmem:[#allocation8 + $0x230] sm:$0xff]
        %v2059 = vld [vmem:[#allocation8 + $0x238] sm:$0xff]
        %v2060 = vld [vmem:[#allocation8 + $0x240] sm:$0xff]
        %v2061 = vld [vmem:[#allocation8 + $0x248] sm:$0xff]
        %v2062 = vld [vmem:[#allocation8 + $0x250] sm:$0xff]
        %v2063 = vld [vmem:[#allocation8 + $0x258] sm:$0xff]
        %v2064 = vld [vmem:[#allocation8 + $0x260] sm:$0xff]
        %v2065 = vld [vmem:[#allocation8 + $0x268] sm:$0xff]
        %v2066 = vld [vmem:[#allocation8 + $0x270] sm:$0xff]
        %v2067 = vld [vmem:[#allocation8 + $0x278] sm:$0xff]
        %v2068 = vld [vmem:[#allocation8 + $0x280] sm:$0xff]
        %v2069 = vld [vmem:[#allocation8 + $0x288] sm:$0xff]
        %v2070 = vld [vmem:[#allocation8 + $0x290] sm:$0xff]
        %v2071 = vld [vmem:[#allocation8 + $0x298] sm:$0xff]
        %v2072 = vld [vmem:[#allocation8 + $0x2a0] sm:$0xff]
        %v2073 = vld [vmem:[#allocation8 + $0x2a8] sm:$0xff]
        %v2074 = vld [vmem:[#allocation8 + $0x2b0] sm:$0xff]
        %v2075 = vld [vmem:[#allocation8 + $0x2b8] sm:$0xff]
        %v2076 = vld [vmem:[#allocation8 + $0x2c0] sm:$0xff]
        %v2077 = vld [vmem:[#allocation8 + $0x2c8] sm:$0xff]
        %v2078 = vld [vmem:[#allocation8 + $0x2d0] sm:$0xff]
        %v2079 = vld [vmem:[#allocation8 + $0x2d8] sm:$0xff]
        %v2080 = vld [vmem:[#allocation8 + $0x2e0] sm:$0xff]
        %v2081 = vld [vmem:[#allocation8 + $0x2e8] sm:$0xff]
        %v2082 = vld [vmem:[#allocation8 + $0x2f0] sm:$0xff]
        %v2083 = vld [vmem:[#allocation8 + $0x2f8] sm:$0xff]
        %v2084 = vld [vmem:[#allocation8 + $0x300] sm:$0xff]
        %v2085 = vld [vmem:[#allocation8 + $0x308] sm:$0xff]
        %v2086 = vld [vmem:[#allocation8 + $0x310] sm:$0xff]
        %v2087 = vld [vmem:[#allocation8 + $0x318] sm:$0xff]
        %v2088 = vld [vmem:[#allocation8 + $0x320] sm:$0xff]
        %v2089 = vld [vmem:[#allocation8 + $0x328] sm:$0xff]
        %v2090 = vld [vmem:[#allocation8 + $0x330] sm:$0xff]
        %v2091 = vld [vmem:[#allocation8 + $0x338] sm:$0xff]
        %v2092 = vld [vmem:[#allocation8 + $0x340] sm:$0xff]
        %v2093 = vld [vmem:[#allocation8 + $0x348] sm:$0xff]
        %v2094 = vld [vmem:[#allocation8 + $0x350] sm:$0xff]
        %v2095 = vld [vmem:[#allocation8 + $0x358] sm:$0xff]
        %v2096 = vld [vmem:[#allocation8 + $0x360] sm:$0xff]
        %v2097 = vld [vmem:[#allocation8 + $0x368] sm:$0xff]
        %v2098 = vld [vmem:[#allocation8 + $0x370] sm:$0xff]
        %v2099 = vld [vmem:[#allocation8 + $0x378] sm:$0xff]
        %v2100 = vld [vmem:[#allocation8 + $0x380] sm:$0xff]
        %v2101 = vld [vmem:[#allocation8 + $0x388] sm:$0xff]
        %v2102 = vld [vmem:[#allocation8 + $0x390] sm:$0xff]
        %v2103 = vld [vmem:[#allocation8 + $0x398] sm:$0xff]
        %v2104 = vld [vmem:[#allocation8 + $0x3a0] sm:$0xff]
        %v2105 = vld [vmem:[#allocation8 + $0x3a8] sm:$0xff]
        %v2106 = vld [vmem:[#allocation8 + $0x3b0] sm:$0xff]
        %v2107 = vld [vmem:[#allocation8 + $0x3b8] sm:$0xff]
        %v2108 = vld [vmem:[#allocation8 + $0x3c0] sm:$0xff]
        %v2109 = vld [vmem:[#allocation8 + $0x3c8] sm:$0xff]
        %v2110 = vld [vmem:[#allocation8 + $0x3d0] sm:$0xff]
        %v2111 = vld [vmem:[#allocation8 + $0x3d8] sm:$0xff]
        %v2112 = vld [vmem:[#allocation8 + $0x3e0] sm:$0xff]
        %v2113 = vld [vmem:[#allocation8 + $0x3e8] sm:$0xff]
        %v2114 = vld [vmem:[#allocation8 + $0x3f0] sm:$0xff]
        %v2115 = vld [vmem:[#allocation8 + $0x3f8] sm:$0xff]
        %v2116 = vld [vmem:[#allocation8 + $0x400] sm:$0xff]
        %v2117 = vld [vmem:[#allocation8 + $0x408] sm:$0xff]
        %v2118 = vld [vmem:[#allocation8 + $0x410] sm:$0xff]
        %v2119 = vld [vmem:[#allocation8 + $0x418] sm:$0xff]
        %v2120 = vld [vmem:[#allocation8 + $0x420] sm:$0xff]
        %v2121 = vld [vmem:[#allocation8 + $0x428] sm:$0xff]
        %v2122 = vld [vmem:[#allocation8 + $0x430] sm:$0xff]
        %v2123 = vld [vmem:[#allocation8 + $0x438] sm:$0xff]
        %v2124 = vld [vmem:[#allocation8 + $0x440] sm:$0xff]
        %v2125 = vld [vmem:[#allocation8 + $0x448] sm:$0xff]
        %v2126 = vld [vmem:[#allocation8 + $0x450] sm:$0xff]
        %v2127 = vld [vmem:[#allocation8 + $0x458] sm:$0xff]
        %v2128 = vld [vmem:[#allocation8 + $0x460] sm:$0xff]
        %v2129 = vld [vmem:[#allocation8 + $0x468] sm:$0xff]
        %v2130 = vld [vmem:[#allocation8 + $0x470] sm:$0xff]
        %v2131 = vld [vmem:[#allocation8 + $0x478] sm:$0xff]
        %v2132 = vld [vmem:[%s7] sm:$0x3f]
        %v2134 = vlaneseq
        %v2135 = vshrl.u32 %v2134, 7
        %v2136 = vsub.s32 0, %v2135
        %v2137 = vrot.slane %v2132, %v2136
        %v2138 = vlaneseq
        %v2139 = vshrl.u32 %v2138, 7
        %v2140 = vsub.s32 1, %v2139
        %v2141 = vrot.slane %v2132, %v2140
        %v2142 = vlaneseq
        %v2143 = vshrl.u32 %v2142, 7
        %v2144 = vsub.s32 2, %v2143
        %v2145 = vrot.slane %v2132, %v2144
        %v2146 = vlaneseq
        %v2147 = vshrl.u32 %v2146, 7
        %v2148 = vsub.s32 3, %v2147
        %v2149 = vrot.slane %v2132, %v2148
        %v2150 = vlaneseq
        %v2151 = vshrl.u32 %v2150, 7
        %v2152 = vsub.s32 4, %v2151
        %v2153 = vrot.slane %v2132, %v2152
        %v2154 = vlaneseq
        %v2155 = vshrl.u32 %v2154, 7
        %v2156 = vsub.s32 5, %v2155
        %v2157 = vrot.slane %v2132, %v2156
        %v2308 = vunpack.c.l.b16 %v1988
        %v2309 = vunpack.c.h.b16 %v1988
        %v2310 = vunpack.c.l.b16 %v1989
        %v2311 = vunpack.c.h.b16 %v1989
        %v2312 = vunpack.c.l.b16 %v1990
        %v2313 = vunpack.c.h.b16 %v1990
        %v2314 = vunpack.c.l.b16 %v1991
        %v2315 = vunpack.c.h.b16 %v1991
        %v2316 = vunpack.c.l.b16 %v1992
        %v2317 = vunpack.c.h.b16 %v1992
        %v2318 = vunpack.c.l.b16 %v1993
        %v2319 = vunpack.c.h.b16 %v1993
        %v2320 = vunpack.c.l.b16 %v1994
        %v2321 = vunpack.c.h.b16 %v1994
        %v2322 = vunpack.c.l.b16 %v1995
        %v2323 = vunpack.c.h.b16 %v1995
        %v2324 = vunpack.c.l.b16 %v1996
        %v2325 = vunpack.c.h.b16 %v1996
        %v2326 = vunpack.c.l.b16 %v1997
        %v2327 = vunpack.c.h.b16 %v1997
        %v2328 = vunpack.c.l.b16 %v1998
        %v2329 = vunpack.c.h.b16 %v1998
        %v2330 = vunpack.c.l.b16 %v1999
        %v2331 = vunpack.c.h.b16 %v1999
        %v2332 = vunpack.c.l.b16 %v2000
        %v2333 = vunpack.c.h.b16 %v2000
        %v2334 = vunpack.c.l.b16 %v2001
        %v2335 = vunpack.c.h.b16 %v2001
        %v2336 = vunpack.c.l.b16 %v2002
        %v2337 = vunpack.c.h.b16 %v2002
        %v2338 = vunpack.c.l.b16 %v2003
        %v2339 = vunpack.c.h.b16 %v2003
        %v2340 = vunpack.c.l.b16 %v2004
        %v2341 = vunpack.c.h.b16 %v2004
        %v2342 = vunpack.c.l.b16 %v2005
        %v2343 = vunpack.c.h.b16 %v2005
        %v2344 = vunpack.c.l.b16 %v2006
        %v2345 = vunpack.c.h.b16 %v2006
        %v2346 = vunpack.c.l.b16 %v2007
        %v2347 = vunpack.c.h.b16 %v2007
        %v2348 = vunpack.c.l.b16 %v2008
        %v2349 = vunpack.c.h.b16 %v2008
        %v2350 = vunpack.c.l.b16 %v2009
        %v2351 = vunpack.c.h.b16 %v2009
        %v2352 = vunpack.c.l.b16 %v2010
        %v2353 = vunpack.c.h.b16 %v2010
        %v2354 = vunpack.c.l.b16 %v2011
        %v2355 = vunpack.c.h.b16 %v2011
        %v2356 = vunpack.c.l.b16 %v2012
        %v2357 = vunpack.c.h.b16 %v2012
        %v2358 = vunpack.c.l.b16 %v2013
        %v2359 = vunpack.c.h.b16 %v2013
        %v2360 = vunpack.c.l.b16 %v2014
        %v2361 = vunpack.c.h.b16 %v2014
        %v2362 = vunpack.c.l.b16 %v2015
        %v2363 = vunpack.c.h.b16 %v2015
        %v2364 = vunpack.c.l.b16 %v2016
        %v2365 = vunpack.c.h.b16 %v2016
        %v2366 = vunpack.c.l.b16 %v2017
        %v2367 = vunpack.c.h.b16 %v2017
        %v2368 = vunpack.c.l.b16 %v2018
        %v2369 = vunpack.c.h.b16 %v2018
        %v2370 = vunpack.c.l.b16 %v2019
        %v2371 = vunpack.c.h.b16 %v2019
        %v2372 = vunpack.c.l.b16 %v2020
        %v2373 = vunpack.c.h.b16 %v2020
        %v2374 = vunpack.c.l.b16 %v2021
        %v2375 = vunpack.c.h.b16 %v2021
        %v2376 = vunpack.c.l.b16 %v2022
        %v2377 = vunpack.c.h.b16 %v2022
        %v2378 = vunpack.c.l.b16 %v2023
        %v2379 = vunpack.c.h.b16 %v2023
        %v2380 = vunpack.c.l.b16 %v2024
        %v2381 = vunpack.c.h.b16 %v2024
        %v2382 = vunpack.c.l.b16 %v2025
        %v2383 = vunpack.c.h.b16 %v2025
        %v2384 = vunpack.c.l.b16 %v2026
        %v2385 = vunpack.c.h.b16 %v2026
        %v2386 = vunpack.c.l.b16 %v2027
        %v2387 = vunpack.c.h.b16 %v2027
        %v2388 = vunpack.c.l.b16 %v2028
        %v2389 = vunpack.c.h.b16 %v2028
        %v2390 = vunpack.c.l.b16 %v2029
        %v2391 = vunpack.c.h.b16 %v2029
        %v2392 = vunpack.c.l.b16 %v2030
        %v2393 = vunpack.c.h.b16 %v2030
        %v2394 = vunpack.c.l.b16 %v2031
        %v2395 = vunpack.c.h.b16 %v2031
        %v2396 = vunpack.c.l.b16 %v2032
        %v2397 = vunpack.c.h.b16 %v2032
        %v2398 = vunpack.c.l.b16 %v2033
        %v2399 = vunpack.c.h.b16 %v2033
        %v2400 = vunpack.c.l.b16 %v2034
        %v2401 = vunpack.c.h.b16 %v2034
        %v2402 = vunpack.c.l.b16 %v2035
        %v2403 = vunpack.c.h.b16 %v2035
        %v2404 = vunpack.c.l.b16 %v2036
        %v2405 = vunpack.c.h.b16 %v2036
        %v2406 = vunpack.c.l.b16 %v2037
        %v2407 = vunpack.c.h.b16 %v2037
        %v2408 = vunpack.c.l.b16 %v2038
        %v2409 = vunpack.c.h.b16 %v2038
        %v2410 = vunpack.c.l.b16 %v2039
        %v2411 = vunpack.c.h.b16 %v2039
        %v2412 = vunpack.c.l.b16 %v2040
        %v2413 = vunpack.c.h.b16 %v2040
        %v2414 = vunpack.c.l.b16 %v2041
        %v2415 = vunpack.c.h.b16 %v2041
        %v2416 = vunpack.c.l.b16 %v2042
        %v2417 = vunpack.c.h.b16 %v2042
        %v2418 = vunpack.c.l.b16 %v2043
        %v2419 = vunpack.c.h.b16 %v2043
        %v2420 = vunpack.c.l.b16 %v2044
        %v2421 = vunpack.c.h.b16 %v2044
        %v2422 = vunpack.c.l.b16 %v2045
        %v2423 = vunpack.c.h.b16 %v2045
        %v2424 = vunpack.c.l.b16 %v2046
        %v2425 = vunpack.c.h.b16 %v2046
        %v2426 = vunpack.c.l.b16 %v2047
        %v2427 = vunpack.c.h.b16 %v2047
        %v2428 = vunpack.c.l.b16 %v2048
        %v2429 = vunpack.c.h.b16 %v2048
        %v2430 = vunpack.c.l.b16 %v2049
        %v2431 = vunpack.c.h.b16 %v2049
        %v2432 = vunpack.c.l.b16 %v2050
        %v2433 = vunpack.c.h.b16 %v2050
        %v2434 = vunpack.c.l.b16 %v2051
        %v2435 = vunpack.c.h.b16 %v2051
        %v2436 = vunpack.c.l.b16 %v2052
        %v2437 = vunpack.c.h.b16 %v2052
        %v2438 = vunpack.c.l.b16 %v2053
        %v2439 = vunpack.c.h.b16 %v2053
        %v2440 = vunpack.c.l.b16 %v2054
        %v2441 = vunpack.c.h.b16 %v2054
        %v2442 = vunpack.c.l.b16 %v2055
        %v2443 = vunpack.c.h.b16 %v2055
        %v2444 = vunpack.c.l.b16 %v2056
        %v2445 = vunpack.c.h.b16 %v2056
        %v2446 = vunpack.c.l.b16 %v2057
        %v2447 = vunpack.c.h.b16 %v2057
        %v2448 = vunpack.c.l.b16 %v2058
        %v2449 = vunpack.c.h.b16 %v2058
        %v2450 = vunpack.c.l.b16 %v2059
        %v2451 = vunpack.c.h.b16 %v2059
        %v2452 = vunpack.c.l.b16 %v2060
        %v2453 = vunpack.c.h.b16 %v2060
        %v2454 = vunpack.c.l.b16 %v2061
        %v2455 = vunpack.c.h.b16 %v2061
        %v2456 = vunpack.c.l.b16 %v2062
        %v2457 = vunpack.c.h.b16 %v2062
        %v2458 = vunpack.c.l.b16 %v2063
        %v2459 = vunpack.c.h.b16 %v2063
        %v2460 = vunpack.c.l.b16 %v2064
        %v2461 = vunpack.c.h.b16 %v2064
        %v2462 = vunpack.c.l.b16 %v2065
        %v2463 = vunpack.c.h.b16 %v2065
        %v2464 = vunpack.c.l.b16 %v2066
        %v2465 = vunpack.c.h.b16 %v2066
        %v2466 = vunpack.c.l.b16 %v2067
        %v2467 = vunpack.c.h.b16 %v2067
        %v2468 = vunpack.c.l.b16 %v2068
        %v2469 = vunpack.c.h.b16 %v2068
        %v2470 = vunpack.c.l.b16 %v2069
        %v2471 = vunpack.c.h.b16 %v2069
        %v2472 = vunpack.c.l.b16 %v2070
        %v2473 = vunpack.c.h.b16 %v2070
        %v2474 = vunpack.c.l.b16 %v2071
        %v2475 = vunpack.c.h.b16 %v2071
        %v2476 = vunpack.c.l.b16 %v2072
        %v2477 = vunpack.c.h.b16 %v2072
        %v2478 = vunpack.c.l.b16 %v2073
        %v2479 = vunpack.c.h.b16 %v2073
        %v2480 = vunpack.c.l.b16 %v2074
        %v2481 = vunpack.c.h.b16 %v2074
        %v2482 = vunpack.c.l.b16 %v2075
        %v2483 = vunpack.c.h.b16 %v2075
        %v2484 = vunpack.c.l.b16 %v2076
        %v2485 = vunpack.c.h.b16 %v2076
        %v2486 = vunpack.c.l.b16 %v2077
        %v2487 = vunpack.c.h.b16 %v2077
        %v2488 = vunpack.c.l.b16 %v2078
        %v2489 = vunpack.c.h.b16 %v2078
        %v2490 = vunpack.c.l.b16 %v2079
        %v2491 = vunpack.c.h.b16 %v2079
        %v2492 = vunpack.c.l.b16 %v2080
        %v2493 = vunpack.c.h.b16 %v2080
        %v2494 = vunpack.c.l.b16 %v2081
        %v2495 = vunpack.c.h.b16 %v2081
        %v2496 = vunpack.c.l.b16 %v2082
        %v2497 = vunpack.c.h.b16 %v2082
        %v2498 = vunpack.c.l.b16 %v2083
        %v2499 = vunpack.c.h.b16 %v2083
        %v2500 = vunpack.c.l.b16 %v2084
        %v2501 = vunpack.c.h.b16 %v2084
        %v2502 = vunpack.c.l.b16 %v2085
        %v2503 = vunpack.c.h.b16 %v2085
        %v2504 = vunpack.c.l.b16 %v2086
        %v2505 = vunpack.c.h.b16 %v2086
        %v2506 = vunpack.c.l.b16 %v2087
        %v2507 = vunpack.c.h.b16 %v2087
        %v2508 = vunpack.c.l.b16 %v2088
        %v2509 = vunpack.c.h.b16 %v2088
        %v2510 = vunpack.c.l.b16 %v2089
        %v2511 = vunpack.c.h.b16 %v2089
        %v2512 = vunpack.c.l.b16 %v2090
        %v2513 = vunpack.c.h.b16 %v2090
        %v2514 = vunpack.c.l.b16 %v2091
        %v2515 = vunpack.c.h.b16 %v2091
        %v2516 = vunpack.c.l.b16 %v2092
        %v2517 = vunpack.c.h.b16 %v2092
        %v2518 = vunpack.c.l.b16 %v2093
        %v2519 = vunpack.c.h.b16 %v2093
        %v2520 = vunpack.c.l.b16 %v2094
        %v2521 = vunpack.c.h.b16 %v2094
        %v2522 = vunpack.c.l.b16 %v2095
        %v2523 = vunpack.c.h.b16 %v2095
        %v2524 = vunpack.c.l.b16 %v2096
        %v2525 = vunpack.c.h.b16 %v2096
        %v2526 = vunpack.c.l.b16 %v2097
        %v2527 = vunpack.c.h.b16 %v2097
        %v2528 = vunpack.c.l.b16 %v2098
        %v2529 = vunpack.c.h.b16 %v2098
        %v2530 = vunpack.c.l.b16 %v2099
        %v2531 = vunpack.c.h.b16 %v2099
        %v2532 = vunpack.c.l.b16 %v2100
        %v2533 = vunpack.c.h.b16 %v2100
        %v2534 = vunpack.c.l.b16 %v2101
        %v2535 = vunpack.c.h.b16 %v2101
        %v2536 = vunpack.c.l.b16 %v2102
        %v2537 = vunpack.c.h.b16 %v2102
        %v2538 = vunpack.c.l.b16 %v2103
        %v2539 = vunpack.c.h.b16 %v2103
        %v2540 = vunpack.c.l.b16 %v2104
        %v2541 = vunpack.c.h.b16 %v2104
        %v2542 = vunpack.c.l.b16 %v2105
        %v2543 = vunpack.c.h.b16 %v2105
        %v2544 = vunpack.c.l.b16 %v2106
        %v2545 = vunpack.c.h.b16 %v2106
        %v2546 = vunpack.c.l.b16 %v2107
        %v2547 = vunpack.c.h.b16 %v2107
        %v2548 = vunpack.c.l.b16 %v2108
        %v2549 = vunpack.c.h.b16 %v2108
        %v2550 = vunpack.c.l.b16 %v2109
        %v2551 = vunpack.c.h.b16 %v2109
        %v2552 = vunpack.c.l.b16 %v2110
        %v2553 = vunpack.c.h.b16 %v2110
        %v2554 = vunpack.c.l.b16 %v2111
        %v2555 = vunpack.c.h.b16 %v2111
        %v2556 = vunpack.c.l.b16 %v2112
        %v2557 = vunpack.c.h.b16 %v2112
        %v2558 = vunpack.c.l.b16 %v2113
        %v2559 = vunpack.c.h.b16 %v2113
        %v2560 = vunpack.c.l.b16 %v2114
        %v2561 = vunpack.c.h.b16 %v2114
        %v2562 = vunpack.c.l.b16 %v2115
        %v2563 = vunpack.c.h.b16 %v2115
        %v2564 = vunpack.c.l.b16 %v2116
        %v2565 = vunpack.c.h.b16 %v2116
        %v2566 = vunpack.c.l.b16 %v2117
        %v2567 = vunpack.c.h.b16 %v2117
        %v2568 = vunpack.c.l.b16 %v2118
        %v2569 = vunpack.c.h.b16 %v2118
        %v2570 = vunpack.c.l.b16 %v2119
        %v2571 = vunpack.c.h.b16 %v2119
        %v2572 = vunpack.c.l.b16 %v2120
        %v2573 = vunpack.c.h.b16 %v2120
        %v2574 = vunpack.c.l.b16 %v2121
        %v2575 = vunpack.c.h.b16 %v2121
        %v2576 = vunpack.c.l.b16 %v2122
        %v2577 = vunpack.c.h.b16 %v2122
        %v2578 = vunpack.c.l.b16 %v2123
        %v2579 = vunpack.c.h.b16 %v2123
        %v2580 = vunpack.c.l.b16 %v2124
        %v2581 = vunpack.c.h.b16 %v2124
        %v2582 = vunpack.c.l.b16 %v2125
        %v2583 = vunpack.c.h.b16 %v2125
        %v2584 = vunpack.c.l.b16 %v2126
        %v2585 = vunpack.c.h.b16 %v2126
        %v2586 = vunpack.c.l.b16 %v2127
        %v2587 = vunpack.c.h.b16 %v2127
        %v2588 = vunpack.c.l.b16 %v2128
        %v2589 = vunpack.c.h.b16 %v2128
        %v2590 = vunpack.c.l.b16 %v2129
        %v2591 = vunpack.c.h.b16 %v2129
        %v2592 = vunpack.c.l.b16 %v2130
        %v2593 = vunpack.c.h.b16 %v2130
        %v2594 = vunpack.c.l.b16 %v2131
        %v2595 = vunpack.c.h.b16 %v2131
        %v2596 = vpack.c.b16 %v2314, %v2308
        %v2597 = vpack.c.b16 %v2315, %v2309
        %v2598 = vpack.c.b16 %v2316, %v2310
        %v2599 = vpack.c.b16 %v2317, %v2311
        %v2600 = vpack.c.b16 %v2318, %v2312
        %v2601 = vpack.c.b16 %v2319, %v2313
        %v2602 = vpack.c.b16 %v2326, %v2320
        %v2603 = vpack.c.b16 %v2327, %v2321
        %v2604 = vpack.c.b16 %v2328, %v2322
        %v2605 = vpack.c.b16 %v2329, %v2323
        %v2606 = vpack.c.b16 %v2330, %v2324
        %v2607 = vpack.c.b16 %v2331, %v2325
        %v2608 = vpack.c.b16 %v2338, %v2332
        %v2609 = vpack.c.b16 %v2339, %v2333
        %v2610 = vpack.c.b16 %v2340, %v2334
        %v2611 = vpack.c.b16 %v2341, %v2335
        %v2612 = vpack.c.b16 %v2342, %v2336
        %v2613 = vpack.c.b16 %v2343, %v2337
        %v2614 = vpack.c.b16 %v2350, %v2344
        %v2615 = vpack.c.b16 %v2351, %v2345
        %v2616 = vpack.c.b16 %v2352, %v2346
        %v2617 = vpack.c.b16 %v2353, %v2347
        %v2618 = vpack.c.b16 %v2354, %v2348
        %v2619 = vpack.c.b16 %v2355, %v2349
        %v2620 = vpack.c.b16 %v2362, %v2356
        %v2621 = vpack.c.b16 %v2363, %v2357
        %v2622 = vpack.c.b16 %v2364, %v2358
        %v2623 = vpack.c.b16 %v2365, %v2359
        %v2624 = vpack.c.b16 %v2366, %v2360
        %v2625 = vpack.c.b16 %v2367, %v2361
        %v2626 = vpack.c.b16 %v2374, %v2368
        %v2627 = vpack.c.b16 %v2375, %v2369
        %v2628 = vpack.c.b16 %v2376, %v2370
        %v2629 = vpack.c.b16 %v2377, %v2371
        %v2630 = vpack.c.b16 %v2378, %v2372
        %v2631 = vpack.c.b16 %v2379, %v2373
        %v2632 = vpack.c.b16 %v2386, %v2380
        %v2633 = vpack.c.b16 %v2387, %v2381
        %v2634 = vpack.c.b16 %v2388, %v2382
        %v2635 = vpack.c.b16 %v2389, %v2383
        %v2636 = vpack.c.b16 %v2390, %v2384
        %v2637 = vpack.c.b16 %v2391, %v2385
        %v2638 = vpack.c.b16 %v2398, %v2392
        %v2639 = vpack.c.b16 %v2399, %v2393
        %v2640 = vpack.c.b16 %v2400, %v2394
        %v2641 = vpack.c.b16 %v2401, %v2395
        %v2642 = vpack.c.b16 %v2402, %v2396
        %v2643 = vpack.c.b16 %v2403, %v2397
        %v2644 = vpack.c.b16 %v2410, %v2404
        %v2645 = vpack.c.b16 %v2411, %v2405
        %v2646 = vpack.c.b16 %v2412, %v2406
        %v2647 = vpack.c.b16 %v2413, %v2407
        %v2648 = vpack.c.b16 %v2414, %v2408
        %v2649 = vpack.c.b16 %v2415, %v2409
        %v2650 = vpack.c.b16 %v2422, %v2416
        %v2651 = vpack.c.b16 %v2423, %v2417
        %v2652 = vpack.c.b16 %v2424, %v2418
        %v2653 = vpack.c.b16 %v2425, %v2419
        %v2654 = vpack.c.b16 %v2426, %v2420
        %v2655 = vpack.c.b16 %v2427, %v2421
        %v2656 = vpack.c.b16 %v2434, %v2428
        %v2657 = vpack.c.b16 %v2435, %v2429
        %v2658 = vpack.c.b16 %v2436, %v2430
        %v2659 = vpack.c.b16 %v2437, %v2431
        %v2660 = vpack.c.b16 %v2438, %v2432
        %v2661 = vpack.c.b16 %v2439, %v2433
        %v2662 = vpack.c.b16 %v2446, %v2440
        %v2663 = vpack.c.b16 %v2447, %v2441
        %v2664 = vpack.c.b16 %v2448, %v2442
        %v2665 = vpack.c.b16 %v2449, %v2443
        %v2666 = vpack.c.b16 %v2450, %v2444
        %v2667 = vpack.c.b16 %v2451, %v2445
        %v2668 = vpack.c.b16 %v2458, %v2452
        %v2669 = vpack.c.b16 %v2459, %v2453
        %v2670 = vpack.c.b16 %v2460, %v2454
        %v2671 = vpack.c.b16 %v2461, %v2455
        %v2672 = vpack.c.b16 %v2462, %v2456
        %v2673 = vpack.c.b16 %v2463, %v2457
        %v2674 = vpack.c.b16 %v2470, %v2464
        %v2675 = vpack.c.b16 %v2471, %v2465
        %v2676 = vpack.c.b16 %v2472, %v2466
        %v2677 = vpack.c.b16 %v2473, %v2467
        %v2678 = vpack.c.b16 %v2474, %v2468
        %v2679 = vpack.c.b16 %v2475, %v2469
        %v2680 = vpack.c.b16 %v2482, %v2476
        %v2681 = vpack.c.b16 %v2483, %v2477
        %v2682 = vpack.c.b16 %v2484, %v2478
        %v2683 = vpack.c.b16 %v2485, %v2479
        %v2684 = vpack.c.b16 %v2486, %v2480
        %v2685 = vpack.c.b16 %v2487, %v2481
        %v2686 = vpack.c.b16 %v2494, %v2488
        %v2687 = vpack.c.b16 %v2495, %v2489
        %v2688 = vpack.c.b16 %v2496, %v2490
        %v2689 = vpack.c.b16 %v2497, %v2491
        %v2690 = vpack.c.b16 %v2498, %v2492
        %v2691 = vpack.c.b16 %v2499, %v2493
        %v2692 = vpack.c.b16 %v2506, %v2500
        %v2693 = vpack.c.b16 %v2507, %v2501
        %v2694 = vpack.c.b16 %v2508, %v2502
        %v2695 = vpack.c.b16 %v2509, %v2503
        %v2696 = vpack.c.b16 %v2510, %v2504
        %v2697 = vpack.c.b16 %v2511, %v2505
        %v2698 = vpack.c.b16 %v2518, %v2512
        %v2699 = vpack.c.b16 %v2519, %v2513
        %v2700 = vpack.c.b16 %v2520, %v2514
        %v2701 = vpack.c.b16 %v2521, %v2515
        %v2702 = vpack.c.b16 %v2522, %v2516
        %v2703 = vpack.c.b16 %v2523, %v2517
        %v2704 = vpack.c.b16 %v2530, %v2524
        %v2705 = vpack.c.b16 %v2531, %v2525
        %v2706 = vpack.c.b16 %v2532, %v2526
        %v2707 = vpack.c.b16 %v2533, %v2527
        %v2708 = vpack.c.b16 %v2534, %v2528
        %v2709 = vpack.c.b16 %v2535, %v2529
        %v2710 = vpack.c.b16 %v2542, %v2536
        %v2711 = vpack.c.b16 %v2543, %v2537
        %v2712 = vpack.c.b16 %v2544, %v2538
        %v2713 = vpack.c.b16 %v2545, %v2539
        %v2714 = vpack.c.b16 %v2546, %v2540
        %v2715 = vpack.c.b16 %v2547, %v2541
        %v2716 = vpack.c.b16 %v2554, %v2548
        %v2717 = vpack.c.b16 %v2555, %v2549
        %v2718 = vpack.c.b16 %v2556, %v2550
        %v2719 = vpack.c.b16 %v2557, %v2551
        %v2720 = vpack.c.b16 %v2558, %v2552
        %v2721 = vpack.c.b16 %v2559, %v2553
        %v2722 = vpack.c.b16 %v2566, %v2560
        %v2723 = vpack.c.b16 %v2567, %v2561
        %v2724 = vpack.c.b16 %v2568, %v2562
        %v2725 = vpack.c.b16 %v2569, %v2563
        %v2726 = vpack.c.b16 %v2570, %v2564
        %v2727 = vpack.c.b16 %v2571, %v2565
        %v2728 = vpack.c.b16 %v2578, %v2572
        %v2729 = vpack.c.b16 %v2579, %v2573
        %v2730 = vpack.c.b16 %v2580, %v2574
        %v2731 = vpack.c.b16 %v2581, %v2575
        %v2732 = vpack.c.b16 %v2582, %v2576
        %v2733 = vpack.c.b16 %v2583, %v2577
        %v2734 = vpack.c.b16 %v2590, %v2584
        %v2735 = vpack.c.b16 %v2591, %v2585
        %v2736 = vpack.c.b16 %v2592, %v2586
        %v2737 = vpack.c.b16 %v2593, %v2587
        %v2738 = vpack.c.b16 %v2594, %v2588
        %v2739 = vpack.c.b16 %v2595, %v2589
        %2884 = vmatprep.subr.bf16.mxu0 %v2597
        %2885 = vmatpush1.bf16.msra.mxu0 %v2596
        %2886 = vmatprep.subr.bf16.mxu0 %v2603
        %2887 = vmatpush1.bf16.msra.mxu0 %v2602
        %2888 = vmatprep.subr.bf16.mxu0 %v2609
        %2889 = vmatpush1.bf16.msra.mxu0 %v2608
        %2890 = vmatprep.subr.bf16.mxu0 %v2615
        %2891 = vmatpush1.bf16.msra.mxu0 %v2614
        %2892 = vmatprep.subr.bf16.mxu0 %v2621
        %2893 = vmatpush1.bf16.msra.mxu0 %v2620
        %2894 = vmatprep.subr.bf16.mxu0 %v2627
        %2895 = vmatpush1.bf16.msra.mxu0 %v2626
        %2896 = vmatprep.subr.bf16.mxu0 %v2633
        %2897 = vmatpush1.bf16.msra.mxu0 %v2632
        %2898 = vmatprep.subr.bf16.mxu0 %v2639
        %2899 = vmatpush1.bf16.msra.mxu0 %v2638
        %2900 = vmatprep.subr.bf16.mxu0 %v2645
        %2901 = vmatpush1.bf16.msra.mxu0 %v2644
        %2902 = vmatprep.subr.bf16.mxu0 %v2651
        %2903 = vmatpush1.bf16.msra.mxu0 %v2650
        %2904 = vmatprep.subr.bf16.mxu0 %v2657
        %2905 = vmatpush1.bf16.msra.mxu0 %v2656
        %2906 = vmatprep.subr.bf16.mxu0 %v2663
        %2907 = vmatpush1.bf16.msra.mxu0 %v2662
        %2908 = vmatprep.subr.bf16.mxu0 %v2669
        %2909 = vmatpush1.bf16.msra.mxu0 %v2668
        %2910 = vmatprep.subr.bf16.mxu0 %v2675
        %2911 = vmatpush1.bf16.msra.mxu0 %v2674
        %2912 = vmatprep.subr.bf16.mxu0 %v2681
        %2913 = vmatpush1.bf16.msra.mxu0 %v2680
        %2914 = vmatprep.subr.bf16.mxu0 %v2687
        %2915 = vmatpush1.bf16.msra.mxu0 %v2686
        %2916 = vmatprep.mubr.bf16.mxu0 %v1212
        %2917 = vmatmul.mubr.bf16.gmra.mrb[0].mxu0 %v1211
        %v2918 = vpop.f32.mrb[0].mxu0
        %v2919 = vadd.f32 %v2137, %v2918
        %v2920 = vpop.f32.mrb[0].mxu0
        %v2921 = vadd.f32 %v2141, %v2920
        %v2922 = vpop.f32.mrb[0].mxu0
        %v2923 = vadd.f32 %v2137, %v2922
        %v2924 = vpop.f32.mrb[0].mxu0
        %v2925 = vadd.f32 %v2141, %v2924
        %2926 = vmatprep.mubr.bf16.mxu0 %v1215
        %2927 = vmatmul.mubr.bf16.gmra.mrb[0].mxu0 %v1214
        %v2928 = vpop.f32.mrb[0].mxu0
        %v2929 = vadd.f32 %v2137, %v2928
        %v2930 = vpop.f32.mrb[0].mxu0
        %v2931 = vadd.f32 %v2141, %v2930
        %v2932 = vpop.f32.mrb[0].mxu0
        %v2933 = vadd.f32 %v2137, %v2932
        %v2934 = vpop.f32.mrb[0].mxu0
        %v2935 = vadd.f32 %v2141, %v2934
        %2936 = vmatprep.mubr.bf16.mxu0 %v1218
        %2937 = vmatmul.mubr.bf16.gmra.mrb[0].mxu0 %v1217
        %v2938 = vpop.f32.mrb[0].mxu0
        %v2939 = vadd.f32 %v2137, %v2938
        %v2940 = vpop.f32.mrb[0].mxu0
        %v2941 = vadd.f32 %v2141, %v2940
        %v2942 = vpop.f32.mrb[0].mxu0
        %v2943 = vadd.f32 %v2137, %v2942
        %v2944 = vpop.f32.mrb[0].mxu0
        %v2945 = vadd.f32 %v2141, %v2944
        %2946 = vmatprep.mubr.bf16.mxu0 %v1221
        %2947 = vmatmul.mubr.bf16.gmra.mrb[0].mxu0 %v1220
        %v2948 = vpop.f32.mrb[0].mxu0
        %v2949 = vadd.f32 %v2137, %v2948
        %v2950 = vpop.f32.mrb[0].mxu0
        %v2951 = vadd.f32 %v2141, %v2950
        %v2952 = vpop.f32.mrb[0].mxu0
        %v2953 = vadd.f32 %v2137, %v2952
        %v2954 = vpop.f32.mrb[0].mxu0
        %v2955 = vadd.f32 %v2141, %v2954
        %2956 = vdwg.mxu0
        %2957 = vmatprep.subr.bf16.mxu0 %v2693
        %2958 = vmatpush1.bf16.msra.mxu0 %v2692
        %2959 = vmatprep.subr.bf16.mxu0 %v2699
        %2960 = vmatpush1.bf16.msra.mxu0 %v2698
        %2961 = vmatprep.subr.bf16.mxu0 %v2705
        %2962 = vmatpush1.bf16.msra.mxu0 %v2704
        %2963 = vmatprep.subr.bf16.mxu0 %v2711
        %2964 = vmatpush1.bf16.msra.mxu0 %v2710
        %2965 = vmatprep.subr.bf16.mxu0 %v2717
        %2966 = vmatpush1.bf16.msra.mxu0 %v2716
        %2967 = vmatprep.subr.bf16.mxu0 %v2723
        %2968 = vmatpush1.bf16.msra.mxu0 %v2722
        %2969 = vmatprep.subr.bf16.mxu0 %v2729
        %2970 = vmatpush1.bf16.msra.mxu0 %v2728
        %2971 = vmatprep.subr.bf16.mxu0 %v2735
        %2972 = vmatpush1.bf16.msra.mxu0 %v2734
        %2973 = vmatprep.subr.bf16.mxu0 0
        %2974 = vmatpush1.bf16.msra.mxu0 0
        %2975 = vmatprep.subr.bf16.mxu0 0
        %2976 = vmatpush1.bf16.msra.mxu0 0
        %2977 = vmatprep.subr.bf16.mxu0 0
        %2978 = vmatpush1.bf16.msra.mxu0 0
        %2979 = vmatprep.subr.bf16.mxu0 0
        %2980 = vmatpush1.bf16.msra.mxu0 0
        %2981 = vmatprep.subr.bf16.mxu0 0
        %2982 = vmatpush1.bf16.msra.mxu0 0
        %2983 = vmatprep.subr.bf16.mxu0 0
        %2984 = vmatpush1.bf16.msra.mxu0 0
        %2985 = vmatprep.subr.bf16.mxu0 0
        %2986 = vmatpush1.bf16.msra.mxu0 0
        %2987 = vmatprep.subr.bf16.mxu0 0
        %2988 = vmatpush1.bf16.msra.mxu0 0
        %2989 = vmatprep.mubr.bf16.mxu0 0
        %2990 = vmatmul.mubr.bf16.gmra.mrb[0].mxu0 %v1213
        %v2991 = vpop.f32.mrb[0].mxu0
        %v2992 = vadd.f32 %v2919, %v2991
        %v2993 = vpop.f32.mrb[0].mxu0
        %v2994 = vadd.f32 %v2921, %v2993
        %v2995 = vpop.f32.mrb[0].mxu0
        %v2996 = vadd.f32 %v2923, %v2995
        %v2997 = vpop.f32.mrb[0].mxu0
        %v2998 = vadd.f32 %v2925, %v2997
        %2999 = vmatprep.mubr.bf16.mxu0 0
        %3000 = vmatmul.mubr.bf16.gmra.mrb[0].mxu0 %v1216
        %v3001 = vpop.f32.mrb[0].mxu0
        %v3002 = vadd.f32 %v2929, %v3001
        %v3003 = vpop.f32.mrb[0].mxu0
        %v3004 = vadd.f32 %v2931, %v3003
        %v3005 = vpop.f32.mrb[0].mxu0
        %v3006 = vadd.f32 %v2933, %v3005
        %v3007 = vpop.f32.mrb[0].mxu0
        %v3008 = vadd.f32 %v2935, %v3007
        %3009 = vmatprep.mubr.bf16.mxu0 0
        %3010 = vmatmul.mubr.bf16.gmra.mrb[0].mxu0 %v1219
        %v3011 = vpop.f32.mrb[0].mxu0
        %v3012 = vadd.f32 %v2939, %v3011
        %v3013 = vpop.f32.mrb[0].mxu0
        %v3014 = vadd.f32 %v2941, %v3013
        %v3015 = vpop.f32.mrb[0].mxu0
        %v3016 = vadd.f32 %v2943, %v3015
        %v3017 = vpop.f32.mrb[0].mxu0
        %v3018 = vadd.f32 %v2945, %v3017
        %3019 = vmatprep.mubr.bf16.mxu0 0
        %3020 = vmatmul.mubr.bf16.gmra.mrb[0].mxu0 %v1222
        %v3021 = vpop.f32.mrb[0].mxu0
        %v3022 = vadd.f32 %v2949, %v3021
        %v3023 = vpop.f32.mrb[0].mxu0
        %v3024 = vadd.f32 %v2951, %v3023
        %v3025 = vpop.f32.mrb[0].mxu0
        %v3026 = vadd.f32 %v2953, %v3025
        %v3027 = vpop.f32.mrb[0].mxu0
        %v3028 = vadd.f32 %v2955, %v3027
        %3029 = vdwg.mxu0
        %3030 = vmatprep.subr.bf16.mxu0 %v2599
        %3031 = vmatpush1.bf16.msra.mxu0 %v2598
        %3032 = vmatprep.subr.bf16.mxu0 %v2605
        %3033 = vmatpush1.bf16.msra.mxu0 %v2604
        %3034 = vmatprep.subr.bf16.mxu0 %v2611
        %3035 = vmatpush1.bf16.msra.mxu0 %v2610
        %3036 = vmatprep.subr.bf16.mxu0 %v2617
        %3037 = vmatpush1.bf16.msra.mxu0 %v2616
        %3038 = vmatprep.subr.bf16.mxu0 %v2623
        %3039 = vmatpush1.bf16.msra.mxu0 %v2622
        %3040 = vmatprep.subr.bf16.mxu0 %v2629
        %3041 = vmatpush1.bf16.msra.mxu0 %v2628
        %3042 = vmatprep.subr.bf16.mxu0 %v2635
        %3043 = vmatpush1.bf16.msra.mxu0 %v2634
        %3044 = vmatprep.subr.bf16.mxu0 %v2641
        %3045 = vmatpush1.bf16.msra.mxu0 %v2640
        %3046 = vmatprep.subr.bf16.mxu0 %v2647
        %3047 = vmatpush1.bf16.msra.mxu0 %v2646
        %3048 = vmatprep.subr.bf16.mxu0 %v2653
        %3049 = vmatpush1.bf16.msra.mxu0 %v2652
        %3050 = vmatprep.subr.bf16.mxu0 %v2659
        %3051 = vmatpush1.bf16.msra.mxu0 %v2658
        %3052 = vmatprep.subr.bf16.mxu0 %v2665
        %3053 = vmatpush1.bf16.msra.mxu0 %v2664
        %3054 = vmatprep.subr.bf16.mxu0 %v2671
        %3055 = vmatpush1.bf16.msra.mxu0 %v2670
        %3056 = vmatprep.subr.bf16.mxu0 %v2677
        %3057 = vmatpush1.bf16.msra.mxu0 %v2676
        %3058 = vmatprep.subr.bf16.mxu0 %v2683
        %3059 = vmatpush1.bf16.msra.mxu0 %v2682
        %3060 = vmatprep.subr.bf16.mxu0 %v2689
        %3061 = vmatpush1.bf16.msra.mxu0 %v2688
        %3062 = vmatprep.mubr.bf16.mxu0 %v1212
        %3063 = vmatmul.mubr.bf16.gmra.mrb[0].mxu0 %v1211
        %v3064 = vpop.f32.mrb[0].mxu0
        %v3065 = vadd.f32 %v2145, %v3064
        %v3066 = vpop.f32.mrb[0].mxu0
        %v3067 = vadd.f32 %v2149, %v3066
        %v3068 = vpop.f32.mrb[0].mxu0
        %v3069 = vadd.f32 %v2145, %v3068
        %v3070 = vpop.f32.mrb[0].mxu0
        %v3071 = vadd.f32 %v2149, %v3070
        %3072 = vmatprep.mubr.bf16.mxu0 %v1215
        %3073 = vmatmul.mubr.bf16.gmra.mrb[0].mxu0 %v1214
        %v3074 = vpop.f32.mrb[0].mxu0
        %v3075 = vadd.f32 %v2145, %v3074
        %v3076 = vpop.f32.mrb[0].mxu0
        %v3077 = vadd.f32 %v2149, %v3076
        %v3078 = vpop.f32.mrb[0].mxu0
        %v3079 = vadd.f32 %v2145, %v3078
        %v3080 = vpop.f32.mrb[0].mxu0
        %v3081 = vadd.f32 %v2149, %v3080
        %3082 = vmatprep.mubr.bf16.mxu0 %v1218
        %3083 = vmatmul.mubr.bf16.gmra.mrb[0].mxu0 %v1217
        %v3084 = vpop.f32.mrb[0].mxu0
        %v3085 = vadd.f32 %v2145, %v3084
        %v3086 = vpop.f32.mrb[0].mxu0
        %v3087 = vadd.f32 %v2149, %v3086
        %v3088 = vpop.f32.mrb[0].mxu0
        %v3089 = vadd.f32 %v2145, %v3088
        %v3090 = vpop.f32.mrb[0].mxu0
        %v3091 = vadd.f32 %v2149, %v3090
        %3092 = vmatprep.mubr.bf16.mxu0 %v1221
        %3093 = vmatmul.mubr.bf16.gmra.mrb[0].mxu0 %v1220
        %v3094 = vpop.f32.mrb[0].mxu0
        %v3095 = vadd.f32 %v2145, %v3094
        %v3096 = vpop.f32.mrb[0].mxu0
        %v3097 = vadd.f32 %v2149, %v3096
        %v3098 = vpop.f32.mrb[0].mxu0
        %v3099 = vadd.f32 %v2145, %v3098
        %v3100 = vpop.f32.mrb[0].mxu0
        %v3101 = vadd.f32 %v2149, %v3100
        %3102 = vdwg.mxu0
        %3103 = vmatprep.subr.bf16.mxu0 %v2695
        %3104 = vmatpush1.bf16.msra.mxu0 %v2694
        %3105 = vmatprep.subr.bf16.mxu0 %v2701
        %3106 = vmatpush1.bf16.msra.mxu0 %v2700
        %3107 = vmatprep.subr.bf16.mxu0 %v2707
        %3108 = vmatpush1.bf16.msra.mxu0 %v2706
        %3109 = vmatprep.subr.bf16.mxu0 %v2713
        %3110 = vmatpush1.bf16.msra.mxu0 %v2712
        %3111 = vmatprep.subr.bf16.mxu0 %v2719
        %3112 = vmatpush1.bf16.msra.mxu0 %v2718
        %3113 = vmatprep.subr.bf16.mxu0 %v2725
        %3114 = vmatpush1.bf16.msra.mxu0 %v2724
        %3115 = vmatprep.subr.bf16.mxu0 %v2731
        %3116 = vmatpush1.bf16.msra.mxu0 %v2730
        %3117 = vmatprep.subr.bf16.mxu0 %v2737
        %3118 = vmatpush1.bf16.msra.mxu0 %v2736
        %3119 = vmatprep.subr.bf16.mxu0 0
        %3120 = vmatpush1.bf16.msra.mxu0 0
        %3121 = vmatprep.subr.bf16.mxu0 0
        %3122 = vmatpush1.bf16.msra.mxu0 0
        %3123 = vmatprep.subr.bf16.mxu0 0
        %3124 = vmatpush1.bf16.msra.mxu0 0
        %3125 = vmatprep.subr.bf16.mxu0 0
        %3126 = vmatpush1.bf16.msra.mxu0 0
        %3127 = vmatprep.subr.bf16.mxu0 0
        %3128 = vmatpush1.bf16.msra.mxu0 0
        %3129 = vmatprep.subr.bf16.mxu0 0
        %3130 = vmatpush1.bf16.msra.mxu0 0
        %3131 = vmatprep.subr.bf16.mxu0 0
        %3132 = vmatpush1.bf16.msra.mxu0 0
        %3133 = vmatprep.subr.bf16.mxu0 0
        %3134 = vmatpush1.bf16.msra.mxu0 0
        %3135 = vmatprep.mubr.bf16.mxu0 0
        %3136 = vmatmul.mubr.bf16.gmra.mrb[0].mxu0 %v1213
        %v3137 = vpop.f32.mrb[0].mxu0
        %v3138 = vadd.f32 %v3065, %v3137
        %v3139 = vpop.f32.mrb[0].mxu0
        %v3140 = vadd.f32 %v3067, %v3139
        %v3141 = vpop.f32.mrb[0].mxu0
        %v3142 = vadd.f32 %v3069, %v3141
        %v3143 = vpop.f32.mrb[0].mxu0
        %v3144 = vadd.f32 %v3071, %v3143
        %3145 = vmatprep.mubr.bf16.mxu0 0
        %3146 = vmatmul.mubr.bf16.gmra.mrb[0].mxu0 %v1216
        %v3147 = vpop.f32.mrb[0].mxu0
        %v3148 = vadd.f32 %v3075, %v3147
        %v3149 = vpop.f32.mrb[0].mxu0
        %v3150 = vadd.f32 %v3077, %v3149
        %v3151 = vpop.f32.mrb[0].mxu0
        %v3152 = vadd.f32 %v3079, %v3151
        %v3153 = vpop.f32.mrb[0].mxu0
        %v3154 = vadd.f32 %v3081, %v3153
        %3155 = vmatprep.mubr.bf16.mxu0 0
        %3156 = vmatmul.mubr.bf16.gmra.mrb[0].mxu0 %v1219
        %v3157 = vpop.f32.mrb[0].mxu0
        %v3158 = vadd.f32 %v3085, %v3157
        %v3159 = vpop.f32.mrb[0].mxu0
        %v3160 = vadd.f32 %v3087, %v3159
        %v3161 = vpop.f32.mrb[0].mxu0
        %v3162 = vadd.f32 %v3089, %v3161
        %v3163 = vpop.f32.mrb[0].mxu0
        %v3164 = vadd.f32 %v3091, %v3163
        %3165 = vmatprep.mubr.bf16.mxu0 0
        %3166 = vmatmul.mubr.bf16.gmra.mrb[0].mxu0 %v1222
        %v3167 = vpop.f32.mrb[0].mxu0
        %v3168 = vadd.f32 %v3095, %v3167
        %v3169 = vpop.f32.mrb[0].mxu0
        %v3170 = vadd.f32 %v3097, %v3169
        %v3171 = vpop.f32.mrb[0].mxu0
        %v3172 = vadd.f32 %v3099, %v3171
        %v3173 = vpop.f32.mrb[0].mxu0
        %v3174 = vadd.f32 %v3101, %v3173
        %3175 = vdwg.mxu0
        %3176 = vmatprep.subr.bf16.mxu0 %v2601
        %3177 = vmatpush1.bf16.msra.mxu0 %v2600
        %3178 = vmatprep.subr.bf16.mxu0 %v2607
        %3179 = vmatpush1.bf16.msra.mxu0 %v2606
        %3180 = vmatprep.subr.bf16.mxu0 %v2613
        %3181 = vmatpush1.bf16.msra.mxu0 %v2612
        %3182 = vmatprep.subr.bf16.mxu0 %v2619
        %3183 = vmatpush1.bf16.msra.mxu0 %v2618
        %3184 = vmatprep.subr.bf16.mxu0 %v2625
        %3185 = vmatpush1.bf16.msra.mxu0 %v2624
        %3186 = vmatprep.subr.bf16.mxu0 %v2631
        %3187 = vmatpush1.bf16.msra.mxu0 %v2630
        %3188 = vmatprep.subr.bf16.mxu0 %v2637
        %3189 = vmatpush1.bf16.msra.mxu0 %v2636
        %3190 = vmatprep.subr.bf16.mxu0 %v2643
        %3191 = vmatpush1.bf16.msra.mxu0 %v2642
        %3192 = vmatprep.subr.bf16.mxu0 %v2649
        %3193 = vmatpush1.bf16.msra.mxu0 %v2648
        %3194 = vmatprep.subr.bf16.mxu0 %v2655
        %3195 = vmatpush1.bf16.msra.mxu0 %v2654
        %3196 = vmatprep.subr.bf16.mxu0 %v2661
        %3197 = vmatpush1.bf16.msra.mxu0 %v2660
        %3198 = vmatprep.subr.bf16.mxu0 %v2667
        %3199 = vmatpush1.bf16.msra.mxu0 %v2666
        %3200 = vmatprep.subr.bf16.mxu0 %v2673
        %3201 = vmatpush1.bf16.msra.mxu0 %v2672
        %3202 = vmatprep.subr.bf16.mxu0 %v2679
        %3203 = vmatpush1.bf16.msra.mxu0 %v2678
        %3204 = vmatprep.subr.bf16.mxu0 %v2685
        %3205 = vmatpush1.bf16.msra.mxu0 %v2684
        %3206 = vmatprep.subr.bf16.mxu0 %v2691
        %3207 = vmatpush1.bf16.msra.mxu0 %v2690
        %3208 = vmatprep.mubr.bf16.mxu0 %v1212
        %3209 = vmatmul.mubr.bf16.gmra.mrb[0].mxu0 %v1211
        %v3210 = vpop.f32.mrb[0].mxu0
        %v3211 = vadd.f32 %v2153, %v3210
        %v3212 = vpop.f32.mrb[0].mxu0
        %v3213 = vadd.f32 %v2157, %v3212
        %v3214 = vpop.f32.mrb[0].mxu0
        %v3215 = vadd.f32 %v2153, %v3214
        %v3216 = vpop.f32.mrb[0].mxu0
        %v3217 = vadd.f32 %v2157, %v3216
        %3218 = vmatprep.mubr.bf16.mxu0 %v1215
        %3219 = vmatmul.mubr.bf16.gmra.mrb[0].mxu0 %v1214
        %v3220 = vpop.f32.mrb[0].mxu0
        %v3221 = vadd.f32 %v2153, %v3220
        %v3222 = vpop.f32.mrb[0].mxu0
        %v3223 = vadd.f32 %v2157, %v3222
        %v3224 = vpop.f32.mrb[0].mxu0
        %v3225 = vadd.f32 %v2153, %v3224
        %v3226 = vpop.f32.mrb[0].mxu0
        %v3227 = vadd.f32 %v2157, %v3226
        %3228 = vmatprep.mubr.bf16.mxu0 %v1218
        %3229 = vmatmul.mubr.bf16.gmra.mrb[0].mxu0 %v1217
        %v3230 = vpop.f32.mrb[0].mxu0
        %v3231 = vadd.f32 %v2153, %v3230
        %v3232 = vpop.f32.mrb[0].mxu0
        %v3233 = vadd.f32 %v2157, %v3232
        %v3234 = vpop.f32.mrb[0].mxu0
        %v3235 = vadd.f32 %v2153, %v3234
        %v3236 = vpop.f32.mrb[0].mxu0
        %v3237 = vadd.f32 %v2157, %v3236
        %3238 = vmatprep.mubr.bf16.mxu0 %v1221
        %3239 = vmatmul.mubr.bf16.gmra.mrb[0].mxu0 %v1220
        %v3240 = vpop.f32.mrb[0].mxu0
        %v3241 = vadd.f32 %v2153, %v3240
        %v3242 = vpop.f32.mrb[0].mxu0
        %v3243 = vadd.f32 %v2157, %v3242
        %v3244 = vpop.f32.mrb[0].mxu0
        %v3245 = vadd.f32 %v2153, %v3244
        %v3246 = vpop.f32.mrb[0].mxu0
        %v3247 = vadd.f32 %v2157, %v3246
        %3248 = vdwg.mxu0
        %3249 = vmatprep.subr.bf16.mxu0 %v2697
        %3250 = vmatpush1.bf16.msra.mxu0 %v2696
        %3251 = vmatprep.subr.bf16.mxu0 %v2703
        %3252 = vmatpush1.bf16.msra.mxu0 %v2702
        %3253 = vmatprep.subr.bf16.mxu0 %v2709
        %3254 = vmatpush1.bf16.msra.mxu0 %v2708
        %3255 = vmatprep.subr.bf16.mxu0 %v2715
        %3256 = vmatpush1.bf16.msra.mxu0 %v2714
        %3257 = vmatprep.subr.bf16.mxu0 %v2721
        %3258 = vmatpush1.bf16.msra.mxu0 %v2720
        %3259 = vmatprep.subr.bf16.mxu0 %v2727
        %3260 = vmatpush1.bf16.msra.mxu0 %v2726
        %3261 = vmatprep.subr.bf16.mxu0 %v2733
        %3262 = vmatpush1.bf16.msra.mxu0 %v2732
        %3263 = vmatprep.subr.bf16.mxu0 %v2739
        %3264 = vmatpush1.bf16.msra.mxu0 %v2738
        %3265 = vmatprep.subr.bf16.mxu0 0
        %3266 = vmatpush1.bf16.msra.mxu0 0
        %3267 = vmatprep.subr.bf16.mxu0 0
        %3268 = vmatpush1.bf16.msra.mxu0 0
        %3269 = vmatprep.subr.bf16.mxu0 0
        %3270 = vmatpush1.bf16.msra.mxu0 0
        %3271 = vmatprep.subr.bf16.mxu0 0
        %3272 = vmatpush1.bf16.msra.mxu0 0
        %3273 = vmatprep.subr.bf16.mxu0 0
        %3274 = vmatpush1.bf16.msra.mxu0 0
        %3275 = vmatprep.subr.bf16.mxu0 0
        %3276 = vmatpush1.bf16.msra.mxu0 0
        %3277 = vmatprep.subr.bf16.mxu0 0
        %3278 = vmatpush1.bf16.msra.mxu0 0
        %3279 = vmatprep.subr.bf16.mxu0 0
        %3280 = vmatpush1.bf16.msra.mxu0 0
        %3281 = vmatprep.mubr.bf16.mxu0 0
        %3282 = vmatmul.mubr.bf16.gmra.mrb[0].mxu0 %v1213
        %v3283 = vpop.f32.mrb[0].mxu0
        %v3284 = vadd.f32 %v3211, %v3283
        %v3285 = vpop.f32.mrb[0].mxu0
        %v3286 = vadd.f32 %v3213, %v3285
        %v3287 = vpop.f32.mrb[0].mxu0
        %v3288 = vadd.f32 %v3215, %v3287
        %v3289 = vpop.f32.mrb[0].mxu0
        %v3290 = vadd.f32 %v3217, %v3289
        %3291 = vmatprep.mubr.bf16.mxu0 0
        %3292 = vmatmul.mubr.bf16.gmra.mrb[0].mxu0 %v1216
        %v3293 = vpop.f32.mrb[0].mxu0
        %v3294 = vadd.f32 %v3221, %v3293
        %v3295 = vpop.f32.mrb[0].mxu0
        %v3296 = vadd.f32 %v3223, %v3295
        %v3297 = vpop.f32.mrb[0].mxu0
        %v3298 = vadd.f32 %v3225, %v3297
        %v3299 = vpop.f32.mrb[0].mxu0
        %v3300 = vadd.f32 %v3227, %v3299
        %3301 = vmatprep.mubr.bf16.mxu0 0
        %3302 = vmatmul.mubr.bf16.gmra.mrb[0].mxu0 %v1219
        %v3303 = vpop.f32.mrb[0].mxu0
        %v3304 = vadd.f32 %v3231, %v3303
        %v3305 = vpop.f32.mrb[0].mxu0
        %v3306 = vadd.f32 %v3233, %v3305
        %v3307 = vpop.f32.mrb[0].mxu0
        %v3308 = vadd.f32 %v3235, %v3307
        %v3309 = vpop.f32.mrb[0].mxu0
        %v3310 = vadd.f32 %v3237, %v3309
        %3311 = vmatprep.mubr.bf16.mxu0 0
        %3312 = vmatmul.mubr.bf16.gmra.mrb[0].mxu0 %v1222
        %v3313 = vpop.f32.mrb[0].mxu0
        %v3314 = vadd.f32 %v3241, %v3313
        %v3315 = vpop.f32.mrb[0].mxu0
        %v3316 = vadd.f32 %v3243, %v3315
        %v3317 = vpop.f32.mrb[0].mxu0
        %v3318 = vadd.f32 %v3245, %v3317
        %v3319 = vpop.f32.mrb[0].mxu0
        %v3320 = vadd.f32 %v3247, %v3319
        %3321 = vdwg.mxu0
        %v3325 = vcombine.low %v1902, %v1904
        %v3326 = vcombine.high %v1902, %v1904
        %v3327 = vcombine.high %v1983, %v1983
        %v3329 = vunpack.c.l.s4 1966171168
        %v3330 = vunpack.c.0.s8 %v3329
        %v3331 = vlaneseq
        %v3332 = vshrl.u32 %v3331, 7
        %v3333 = vsub.s32 %v3330, %v3332
        %v3334 = vrot.slane %v3325, %v3333
        %v3336 = vunpack.c.l.s4 1966171168
        %v3337 = vunpack.c.0.s8 %v3336
        %v3338 = vlaneseq
        %v3339 = vshrl.u32 %v3338, 7
        %v3340 = vsub.s32 %v3337, %v3339
        %v3341 = vrot.slane %v3326, %v3340
        %v3343 = vunpack.c.l.s4 1966171168
        %v3344 = vunpack.c.0.s8 %v3343
        %v3345 = vlaneseq
        %v3346 = vshrl.u32 %v3345, 7
        %v3347 = vsub.s32 %v3344, %v3346
        %v3348 = vrot.slane %v1983, %v3347
        %v3350 = vunpack.c.l.s4 1966171168
        %v3351 = vunpack.c.0.s8 %v3350
        %v3352 = vlaneseq
        %v3353 = vshrl.u32 %v3352, 7
        %v3354 = vsub.s32 %v3351, %v3353
        %v3355 = vrot.slane %v3327, %v3354
        %v3356 = vcombine.low %v3334, %v3348
        %v3357 = vcombine.high %v3334, %v3348
        %v3358 = vcombine.low %v3341, %v3355
        %v3359 = vcombine.high %v3341, %v3355
        %v3361 = vunpack.c.l.s4 1966171168
        %v3362 = vunpack.c.0.s8 %v3361
        %v3363 = vlaneseq
        %v3364 = vshrl.u32 %v3363, 7
        %v3365 = vsub.s32 %v3362, %v3364
        %v3366 = vrot.slane %v3356, %v3365
        %v3368 = vunpack.c.l.s4 1966171168
        %v3369 = vunpack.c.0.s8 %v3368
        %v3370 = vlaneseq
        %v3371 = vshrl.u32 %v3370, 7
        %v3372 = vsub.s32 %v3369, %v3371
        %v3373 = vrot.slane %v3358, %v3372
        %v3375 = vunpack.c.l.s4 1966171168
        %v3376 = vunpack.c.0.s8 %v3375
        %v3377 = vlaneseq
        %v3378 = vshrl.u32 %v3377, 7
        %v3379 = vsub.s32 %v3376, %v3378
        %v3380 = vrot.slane %v3357, %v3379
        %v3382 = vunpack.c.l.s4 1966171168
        %v3383 = vunpack.c.0.s8 %v3382
        %v3384 = vlaneseq
        %v3385 = vshrl.u32 %v3384, 7
        %v3386 = vsub.s32 %v3383, %v3385
        %v3387 = vrot.slane %v3359, %v3386
        %v3388 = vcombine.high %v3366, %v3366
        %v3389 = vcombine.high %v3373, %v3373
        %v3390 = vcombine.high %v3380, %v3380
        %v3391 = vcombine.high %v3387, %v3387
        %v3392 = vlaneseq
        %v3393 = vshrl.u32 %v3392, 7
        %v3394 = vsub.s32 0, %v3393
        %v3395 = vrot.slane %v3366, %v3394
        %v3396 = vlaneseq
        %v3397 = vshrl.u32 %v3396, 7
        %v3398 = vsub.s32 1, %v3397
        %v3399 = vrot.slane %v3366, %v3398
        %v3400 = vlaneseq
        %v3401 = vshrl.u32 %v3400, 7
        %v3402 = vsub.s32 2, %v3401
        %v3403 = vrot.slane %v3366, %v3402
        %v3404 = vlaneseq
        %v3405 = vshrl.u32 %v3404, 7
        %v3406 = vsub.s32 0, %v3405
        %v3407 = vrot.slane %v3380, %v3406
        %v3408 = vlaneseq
        %v3409 = vshrl.u32 %v3408, 7
        %v3410 = vsub.s32 1, %v3409
        %v3411 = vrot.slane %v3380, %v3410
        %v3412 = vlaneseq
        %v3413 = vshrl.u32 %v3412, 7
        %v3414 = vsub.s32 2, %v3413
        %v3415 = vrot.slane %v3380, %v3414
        %v3416 = vlaneseq
        %v3417 = vshrl.u32 %v3416, 7
        %v3418 = vsub.s32 0, %v3417
        %v3419 = vrot.slane %v3388, %v3418
        %v3420 = vlaneseq
        %v3421 = vshrl.u32 %v3420, 7
        %v3422 = vsub.s32 1, %v3421
        %v3423 = vrot.slane %v3388, %v3422
        %v3424 = vlaneseq
        %v3425 = vshrl.u32 %v3424, 7
        %v3426 = vsub.s32 2, %v3425
        %v3427 = vrot.slane %v3388, %v3426
        %v3428 = vlaneseq
        %v3429 = vshrl.u32 %v3428, 7
        %v3430 = vsub.s32 0, %v3429
        %v3431 = vrot.slane %v3390, %v3430
        %v3432 = vlaneseq
        %v3433 = vshrl.u32 %v3432, 7
        %v3434 = vsub.s32 1, %v3433
        %v3435 = vrot.slane %v3390, %v3434
        %v3436 = vlaneseq
        %v3437 = vshrl.u32 %v3436, 7
        %v3438 = vsub.s32 2, %v3437
        %v3439 = vrot.slane %v3390, %v3438
        %v3440 = vlaneseq
        %v3441 = vshrl.u32 %v3440, 7
        %v3442 = vsub.s32 0, %v3441
        %v3443 = vrot.slane %v3373, %v3442
        %v3444 = vlaneseq
        %v3445 = vshrl.u32 %v3444, 7
        %v3446 = vsub.s32 1, %v3445
        %v3447 = vrot.slane %v3373, %v3446
        %v3448 = vlaneseq
        %v3449 = vshrl.u32 %v3448, 7
        %v3450 = vsub.s32 2, %v3449
        %v3451 = vrot.slane %v3373, %v3450
        %v3452 = vlaneseq
        %v3453 = vshrl.u32 %v3452, 7
        %v3454 = vsub.s32 0, %v3453
        %v3455 = vrot.slane %v3387, %v3454
        %v3456 = vlaneseq
        %v3457 = vshrl.u32 %v3456, 7
        %v3458 = vsub.s32 1, %v3457
        %v3459 = vrot.slane %v3387, %v3458
        %v3460 = vlaneseq
        %v3461 = vshrl.u32 %v3460, 7
        %v3462 = vsub.s32 2, %v3461
        %v3463 = vrot.slane %v3387, %v3462
        %v3464 = vlaneseq
        %v3465 = vshrl.u32 %v3464, 7
        %v3466 = vsub.s32 0, %v3465
        %v3467 = vrot.slane %v3389, %v3466
        %v3468 = vlaneseq
        %v3469 = vshrl.u32 %v3468, 7
        %v3470 = vsub.s32 1, %v3469
        %v3471 = vrot.slane %v3389, %v3470
        %v3472 = vlaneseq
        %v3473 = vshrl.u32 %v3472, 7
        %v3474 = vsub.s32 2, %v3473
        %v3475 = vrot.slane %v3389, %v3474
        %v3476 = vlaneseq
        %v3477 = vshrl.u32 %v3476, 7
        %v3478 = vsub.s32 0, %v3477
        %v3479 = vrot.slane %v3391, %v3478
        %v3480 = vlaneseq
        %v3481 = vshrl.u32 %v3480, 7
        %v3482 = vsub.s32 1, %v3481
        %v3483 = vrot.slane %v3391, %v3482
        %v3484 = vlaneseq
        %v3485 = vshrl.u32 %v3484, 7
        %v3486 = vsub.s32 2, %v3485
        %v3487 = vrot.slane %v3391, %v3486
        %v3512 = vmul.f32 %v3395, %v2992
        %v3513 = vmul.f32 %v3399, %v2994
        %v3514 = vmul.f32 %v3403, %v3138
        %v3515 = vmul.f32 %v3407, %v2996
        %v3516 = vmul.f32 %v3411, %v2998
        %v3517 = vmul.f32 %v3415, %v3142
        %v3518 = vmul.f32 %v3419, %v3002
        %v3519 = vmul.f32 %v3423, %v3004
        %v3520 = vmul.f32 %v3427, %v3148
        %v3521 = vmul.f32 %v3431, %v3006
        %v3522 = vmul.f32 %v3435, %v3008
        %v3523 = vmul.f32 %v3439, %v3152
        %v3524 = vmul.f32 %v3443, %v3012
        %v3525 = vmul.f32 %v3447, %v3014
        %v3526 = vmul.f32 %v3451, %v3158
        %v3527 = vmul.f32 %v3455, %v3016
        %v3528 = vmul.f32 %v3459, %v3018
        %v3529 = vmul.f32 %v3463, %v3162
        %v3530 = vmul.f32 %v3467, %v3022
        %v3531 = vmul.f32 %v3471, %v3024
        %v3532 = vmul.f32 %v3475, %v3168
        %v3533 = vmul.f32 %v3479, %v3026
        %v3534 = vmul.f32 %v3483, %v3028
        %v3535 = vmul.f32 %v3487, %v3172
        %v3536 = vadd.f32 %v3512, %v3513
        %v3537 = vadd.f32 %v3536, %v3514
        %3538 = vadd.xlane.f32.xlu0 %v3537
        %v3539 = vpop.xlane.xlu0 %3538
        %v3540 = vadd.f32 %v3515, %v3516
        %v3541 = vadd.f32 %v3540, %v3517
        %3542 = vadd.xlane.f32.xlu0 %v3541
        %v3543 = vpop.xlane.xlu0 %3542
        %v3544 = vadd.f32 %v3518, %v3519
        %v3545 = vadd.f32 %v3544, %v3520
        %3546 = vadd.xlane.f32.xlu0 %v3545
        %v3547 = vpop.xlane.xlu0 %3546
        %v3548 = vadd.f32 %v3521, %v3522
        %v3549 = vadd.f32 %v3548, %v3523
        %3550 = vadd.xlane.f32.xlu0 %v3549
        %v3551 = vpop.xlane.xlu0 %3550
        %v3552 = vadd.f32 %v3524, %v3525
        %v3553 = vadd.f32 %v3552, %v3526
        %3554 = vadd.xlane.f32.xlu0 %v3553
        %v3555 = vpop.xlane.xlu0 %3554
        %v3556 = vadd.f32 %v3527, %v3528
        %v3557 = vadd.f32 %v3556, %v3529
        %3558 = vadd.xlane.f32.xlu0 %v3557
        %v3559 = vpop.xlane.xlu0 %3558
        %v3560 = vadd.f32 %v3530, %v3531
        %v3561 = vadd.f32 %v3560, %v3532
        %3562 = vadd.xlane.f32.xlu0 %v3561
        %v3563 = vpop.xlane.xlu0 %3562
        %v3564 = vadd.f32 %v3533, %v3534
        %v3565 = vadd.f32 %v3564, %v3535
        %3566 = vadd.xlane.f32.xlu0 %v3565
        %v3567 = vpop.xlane.xlu0 %3566
        %v3568 = vmul.f32 %v3539, 0.057735026
        %v3569 = vmul.f32 %v3543, 0.057735026
        %v3570 = vmul.f32 %v3547, 0.057735026
        %v3571 = vmul.f32 %v3551, 0.057735026
        %v3572 = vmul.f32 %v3555, 0.057735026
        %v3573 = vmul.f32 %v3559, 0.057735026
        %v3574 = vmul.f32 %v3563, 0.057735026
        %v3575 = vmul.f32 %v3567, 0.057735026
        %v3576 = vld [vmem:[%s625] sm:$0xff]
        %vm3577 = vcmp.ne.f32.partialorder %v3576, 0.0
        %v3578 = vsel %vm3577, -1e+30, 0.0
        %v3580 = vlaneseq
        %v3581 = vshrl.u32 %v3580, 7
        %v3582 = vsub.s32 0, %v3581
        %v3583 = vrot.slane %v3578, %v3582
        %3585 = vbcast.lane.b32.xlu0 %v3583, 256
        %v3586 = vpop.permute.xlu0 %3585
        %v3587 = vlaneseq
        %v3588 = vshrl.u32 %v3587, 7
        %v3589 = vsub.s32 1, %v3588
        %v3590 = vrot.slane %v3578, %v3589
        %3592 = vbcast.lane.b32.xlu0 %v3590, 256
        %v3593 = vpop.permute.xlu0 %3592
        %v3594 = vlaneseq
        %v3595 = vshrl.u32 %v3594, 7
        %v3596 = vsub.s32 2, %v3595
        %v3597 = vrot.slane %v3578, %v3596
        %3599 = vbcast.lane.b32.xlu0 %v3597, 256
        %v3600 = vpop.permute.xlu0 %3599
        %v3601 = vlaneseq
        %v3602 = vshrl.u32 %v3601, 7
        %v3603 = vsub.s32 3, %v3602
        %v3604 = vrot.slane %v3578, %v3603
        %3606 = vbcast.lane.b32.xlu0 %v3604, 256
        %v3607 = vpop.permute.xlu0 %3606
        %v3608 = vlaneseq
        %v3609 = vshrl.u32 %v3608, 7
        %v3610 = vsub.s32 4, %v3609
        %v3611 = vrot.slane %v3578, %v3610
        %3613 = vbcast.lane.b32.xlu0 %v3611, 256
        %v3614 = vpop.permute.xlu0 %3613
        %v3615 = vlaneseq
        %v3616 = vshrl.u32 %v3615, 7
        %v3617 = vsub.s32 5, %v3616
        %v3618 = vrot.slane %v3578, %v3617
        %3620 = vbcast.lane.b32.xlu0 %v3618, 256
        %v3621 = vpop.permute.xlu0 %3620
        %v3622 = vlaneseq
        %v3623 = vshrl.u32 %v3622, 7
        %v3624 = vsub.s32 6, %v3623
        %v3625 = vrot.slane %v3578, %v3624
        %3627 = vbcast.lane.b32.xlu0 %v3625, 256
        %v3628 = vpop.permute.xlu0 %3627
        %v3629 = vlaneseq
        %v3630 = vshrl.u32 %v3629, 7
        %v3631 = vsub.s32 7, %v3630
        %v3632 = vrot.slane %v3578, %v3631
        %3634 = vbcast.lane.b32.xlu0 %v3632, 256
        %v3635 = vpop.permute.xlu0 %3634
        %v3644 = vadd.f32 %v3568, %v3586
        %v3645 = vadd.f32 %v3569, %v3593
        %v3646 = vadd.f32 %v3570, %v3600
        %v3647 = vadd.f32 %v3571, %v3607
        %v3648 = vadd.f32 %v3572, %v3614
        %v3649 = vadd.f32 %v3573, %v3621
        %v3650 = vadd.f32 %v3574, %v3628
        %v3651 = vadd.f32 %v3575, %v3635
        %3660 = vset.pattern.permute.xlu0 0
        %3661 = vperm.xlu0 %3660, %v3644
        %v3662 = vpop.permute.xlu0 %3661
        %3663 = vset.pattern.permute.xlu0 0
        %3664 = vperm.xlu0 %3663, %v3645
        %v3665 = vpop.permute.xlu0 %3664
        %3666 = vset.pattern.permute.xlu0 0
        %3667 = vperm.xlu0 %3666, %v3646
        %v3668 = vpop.permute.xlu0 %3667
        %3669 = vset.pattern.permute.xlu0 0
        %3670 = vperm.xlu0 %3669, %v3647
        %v3671 = vpop.permute.xlu0 %3670
        %3672 = vset.pattern.permute.xlu0 0
        %3673 = vperm.xlu0 %3672, %v3648
        %v3674 = vpop.permute.xlu0 %3673
        %3675 = vset.pattern.permute.xlu0 0
        %3676 = vperm.xlu0 %3675, %v3649
        %v3677 = vpop.permute.xlu0 %3676
        %3678 = vset.pattern.permute.xlu0 0
        %3679 = vperm.xlu0 %3678, %v3650
        %v3680 = vpop.permute.xlu0 %3679
        %3681 = vset.pattern.permute.xlu0 0
        %3682 = vperm.xlu0 %3681, %v3651
        %v3683 = vpop.permute.xlu0 %3682
        %v3684 = vlaneseq
        %v3685 = vand.u32 %v3684, 127
        %v3686 = vlaneseq
        %v3687 = vshrl.u32 %v3686, 7
        %v3688 = vsub.s32 %v3685, %v3687
        %v3689 = vrot.slane %v3662, %v3688
        %v3690 = vlaneseq
        %v3691 = vshrl.u32 %v3690, 7
        %v3692 = vsub.s32 %v3685, %v3691
        %v3693 = vrot.slane %v3665, %v3692
        %v3694 = vlaneseq
        %v3695 = vshrl.u32 %v3694, 7
        %v3696 = vsub.s32 %v3685, %v3695
        %v3697 = vrot.slane %v3668, %v3696
        %v3698 = vlaneseq
        %v3699 = vshrl.u32 %v3698, 7
        %v3700 = vsub.s32 %v3685, %v3699
        %v3701 = vrot.slane %v3671, %v3700
        %v3702 = vlaneseq
        %v3703 = vshrl.u32 %v3702, 7
        %v3704 = vsub.s32 %v3685, %v3703
        %v3705 = vrot.slane %v3674, %v3704
        %v3706 = vlaneseq
        %v3707 = vshrl.u32 %v3706, 7
        %v3708 = vsub.s32 %v3685, %v3707
        %v3709 = vrot.slane %v3677, %v3708
        %v3710 = vlaneseq
        %v3711 = vshrl.u32 %v3710, 7
        %v3712 = vsub.s32 %v3685, %v3711
        %v3713 = vrot.slane %v3680, %v3712
        %v3714 = vlaneseq
        %v3715 = vshrl.u32 %v3714, 7
        %v3716 = vsub.s32 %v3685, %v3715
        %v3717 = vrot.slane %v3683, %v3716
        %v3718 = vsel %vm1408, %v3693, %v3689
        %v3719 = vsel %vm1410, %v3697, %v3718
        %v3720 = vsel %vm1412, %v3701, %v3719
        %v3721 = vsel %vm1414, %v3705, %v3720
        %v3722 = vsel %vm1416, %v3709, %v3721
        %v3723 = vsel %vm1418, %v3713, %v3722
        %v3724 = vsel %vm1420, %v3717, %v3723
        %vm3726 = vcmask 64512
        %v3727 = vsel %vm3726, %v3724, -inf
        %3728 = vmax.xlane.f32.xlu0 %v3727
        %v3729 = vpop.xlane.xlu0 %3728
        %v3731 = vlaneseq
        %v3732 = vshrl.u32 %v3731, 7
        %v3733 = vsub.s32 0, %v3732
        %v3734 = vrot.slane %v3729, %v3733
        %v3735 = vlaneseq
        %v3736 = vshrl.u32 %v3735, 7
        %v3737 = vsub.s32 1, %v3736
        %v3738 = vrot.slane %v3729, %v3737
        %v3739 = vlaneseq
        %v3740 = vshrl.u32 %v3739, 7
        %v3741 = vsub.s32 2, %v3740
        %v3742 = vrot.slane %v3729, %v3741
        %v3743 = vlaneseq
        %v3744 = vshrl.u32 %v3743, 7
        %v3745 = vsub.s32 3, %v3744
        %v3746 = vrot.slane %v3729, %v3745
        %v3747 = vlaneseq
        %v3748 = vshrl.u32 %v3747, 7
        %v3749 = vsub.s32 4, %v3748
        %v3750 = vrot.slane %v3729, %v3749
        %v3751 = vlaneseq
        %v3752 = vshrl.u32 %v3751, 7
        %v3753 = vsub.s32 5, %v3752
        %v3754 = vrot.slane %v3729, %v3753
        %v3755 = vlaneseq
        %v3756 = vshrl.u32 %v3755, 7
        %v3757 = vsub.s32 6, %v3756
        %v3758 = vrot.slane %v3729, %v3757
        %v3759 = vlaneseq
        %v3760 = vshrl.u32 %v3759, 7
        %v3761 = vsub.s32 7, %v3760
        %v3762 = vrot.slane %v3729, %v3761
        %v3771 = vsub.f32 %v3644, %v3734
        %v3772 = vsub.f32 %v3645, %v3738
        %v3773 = vsub.f32 %v3646, %v3742
        %v3774 = vsub.f32 %v3647, %v3746
        %v3775 = vsub.f32 %v3648, %v3750
        %v3776 = vsub.f32 %v3649, %v3754
        %v3777 = vsub.f32 %v3650, %v3758
        %v3778 = vsub.f32 %v3651, %v3762
        %v3779 = vmul.f32 %v3771, 1.442695
        %v3780 = vpow.pop %v3779
        %v3781 = vmul.f32 %v3772, 1.442695
        %v3782 = vpow.pop %v3781
        %v3783 = vmul.f32 %v3773, 1.442695
        %v3784 = vpow.pop %v3783
        %v3785 = vmul.f32 %v3774, 1.442695
        %v3786 = vpow.pop %v3785
        %v3787 = vmul.f32 %v3775, 1.442695
        %v3788 = vpow.pop %v3787
        %v3789 = vmul.f32 %v3776, 1.442695
        %v3790 = vpow.pop %v3789
        %v3791 = vmul.f32 %v3777, 1.442695
        %v3792 = vpow.pop %v3791
        %v3793 = vmul.f32 %v3778, 1.442695
        %v3794 = vpow.pop %v3793
        %3803 = vset.pattern.permute.xlu0 0
        %3804 = vperm.xlu0 %3803, %v3780
        %v3805 = vpop.permute.xlu0 %3804
        %3806 = vset.pattern.permute.xlu0 0
        %3807 = vperm.xlu0 %3806, %v3782
        %v3808 = vpop.permute.xlu0 %3807
        %3809 = vset.pattern.permute.xlu0 0
        %3810 = vperm.xlu0 %3809, %v3784
        %v3811 = vpop.permute.xlu0 %3810
        %3812 = vset.pattern.permute.xlu0 0
        %3813 = vperm.xlu0 %3812, %v3786
        %v3814 = vpop.permute.xlu0 %3813
        %3815 = vset.pattern.permute.xlu0 0
        %3816 = vperm.xlu0 %3815, %v3788
        %v3817 = vpop.permute.xlu0 %3816
        %3818 = vset.pattern.permute.xlu0 0
        %3819 = vperm.xlu0 %3818, %v3790
        %v3820 = vpop.permute.xlu0 %3819
        %3821 = vset.pattern.permute.xlu0 0
        %3822 = vperm.xlu0 %3821, %v3792
        %v3823 = vpop.permute.xlu0 %3822
        %3824 = vset.pattern.permute.xlu0 0
        %3825 = vperm.xlu0 %3824, %v3794
        %v3826 = vpop.permute.xlu0 %3825
        %v3827 = vlaneseq
        %v3828 = vshrl.u32 %v3827, 7
        %v3829 = vsub.s32 %v3685, %v3828
        %v3830 = vrot.slane %v3805, %v3829
        %v3831 = vlaneseq
        %v3832 = vshrl.u32 %v3831, 7
        %v3833 = vsub.s32 %v3685, %v3832
        %v3834 = vrot.slane %v3808, %v3833
        %v3835 = vlaneseq
        %v3836 = vshrl.u32 %v3835, 7
        %v3837 = vsub.s32 %v3685, %v3836
        %v3838 = vrot.slane %v3811, %v3837
        %v3839 = vlaneseq
        %v3840 = vshrl.u32 %v3839, 7
        %v3841 = vsub.s32 %v3685, %v3840
        %v3842 = vrot.slane %v3814, %v3841
        %v3843 = vlaneseq
        %v3844 = vshrl.u32 %v3843, 7
        %v3845 = vsub.s32 %v3685, %v3844
        %v3846 = vrot.slane %v3817, %v3845
        %v3847 = vlaneseq
        %v3848 = vshrl.u32 %v3847, 7
        %v3849 = vsub.s32 %v3685, %v3848
        %v3850 = vrot.slane %v3820, %v3849
        %v3851 = vlaneseq
        %v3852 = vshrl.u32 %v3851, 7
        %v3853 = vsub.s32 %v3685, %v3852
        %v3854 = vrot.slane %v3823, %v3853
        %v3855 = vlaneseq
        %v3856 = vshrl.u32 %v3855, 7
        %v3857 = vsub.s32 %v3685, %v3856
        %v3858 = vrot.slane %v3826, %v3857
        %v3859 = vsel %vm1408, %v3834, %v3830
        %v3860 = vsel %vm1410, %v3838, %v3859
        %v3861 = vsel %vm1412, %v3842, %v3860
        %v3862 = vsel %vm1414, %v3846, %v3861
        %v3863 = vsel %vm1416, %v3850, %v3862
        %v3864 = vsel %vm1418, %v3854, %v3863
        %v3865 = vsel %vm1420, %v3858, %v3864
        %v3867 = vsel %vm3726, %v3865, 0.0
        %3868 = vadd.xlane.f32.xlu0 %v3867
        %v3869 = vpop.xlane.xlu0 %3868
        %v3870 = vrcp.pop %v3869
        %v3872 = vlaneseq
        %v3873 = vshrl.u32 %v3872, 7
        %v3874 = vsub.s32 0, %v3873
        %v3875 = vrot.slane %v3870, %v3874
        %v3876 = vlaneseq
        %v3877 = vshrl.u32 %v3876, 7
        %v3878 = vsub.s32 1, %v3877
        %v3879 = vrot.slane %v3870, %v3878
        %v3880 = vlaneseq
        %v3881 = vshrl.u32 %v3880, 7
        %v3882 = vsub.s32 2, %v3881
        %v3883 = vrot.slane %v3870, %v3882
        %v3884 = vlaneseq
        %v3885 = vshrl.u32 %v3884, 7
        %v3886 = vsub.s32 3, %v3885
        %v3887 = vrot.slane %v3870, %v3886
        %v3888 = vlaneseq
        %v3889 = vshrl.u32 %v3888, 7
        %v3890 = vsub.s32 4, %v3889
        %v3891 = vrot.slane %v3870, %v3890
        %v3892 = vlaneseq
        %v3893 = vshrl.u32 %v3892, 7
        %v3894 = vsub.s32 5, %v3893
        %v3895 = vrot.slane %v3870, %v3894
        %v3896 = vlaneseq
        %v3897 = vshrl.u32 %v3896, 7
        %v3898 = vsub.s32 6, %v3897
        %v3899 = vrot.slane %v3870, %v3898
        %v3900 = vlaneseq
        %v3901 = vshrl.u32 %v3900, 7
        %v3902 = vsub.s32 7, %v3901
        %v3903 = vrot.slane %v3870, %v3902
        %v3912 = vmul.f32 %v3780, %v3875
        %v3913 = vmul.f32 %v3782, %v3879
        %v3914 = vmul.f32 %v3784, %v3883
        %v3915 = vmul.f32 %v3786, %v3887
        %v3916 = vmul.f32 %v3788, %v3891
        %v3917 = vmul.f32 %v3790, %v3895
        %v3918 = vmul.f32 %v3792, %v3899
        %v3919 = vmul.f32 %v3794, %v3903
        %3921 = vset.pattern.permute.xlu0 0
        %3922 = vperm.xlu0 %3921, %v3912
        %v3923 = vpop.permute.xlu0 %3922
        %3926 = vset.pattern.permute.xlu0 0
        %3927 = vperm.xlu0 %3926, %v3913
        %v3928 = vpop.permute.xlu0 %3927
        %3931 = vset.pattern.permute.xlu0 0
        %3932 = vperm.xlu0 %3931, %v3914
        %v3933 = vpop.permute.xlu0 %3932
        %3936 = vset.pattern.permute.xlu0 0
        %3937 = vperm.xlu0 %3936, %v3915
        %v3938 = vpop.permute.xlu0 %3937
        %3941 = vset.pattern.permute.xlu0 0
        %3942 = vperm.xlu0 %3941, %v3916
        %v3943 = vpop.permute.xlu0 %3942
        %3946 = vset.pattern.permute.xlu0 0
        %3947 = vperm.xlu0 %3946, %v3917
        %v3948 = vpop.permute.xlu0 %3947
        %3951 = vset.pattern.permute.xlu0 0
        %3952 = vperm.xlu0 %3951, %v3918
        %v3953 = vpop.permute.xlu0 %3952
        %3956 = vset.pattern.permute.xlu0 0
        %3957 = vperm.xlu0 %3956, %v3919
        %v3958 = vpop.permute.xlu0 %3957
        %v3960 = vmul.f32 %v3923, %v3140
        %v3961 = vmul.f32 %v3923, %v3284
        %v3962 = vmul.f32 %v3923, %v3286
        %v3963 = vmul.f32 %v3928, %v3144
        %v3964 = vmul.f32 %v3928, %v3288
        %v3965 = vmul.f32 %v3928, %v3290
        %v3966 = vmul.f32 %v3933, %v3150
        %v3967 = vmul.f32 %v3933, %v3294
        %v3968 = vmul.f32 %v3933, %v3296
        %v3969 = vmul.f32 %v3938, %v3154
        %v3970 = vmul.f32 %v3938, %v3298
        %v3971 = vmul.f32 %v3938, %v3300
        %v3972 = vmul.f32 %v3943, %v3160
        %v3973 = vmul.f32 %v3943, %v3304
        %v3974 = vmul.f32 %v3943, %v3306
        %v3975 = vmul.f32 %v3948, %v3164
        %v3976 = vmul.f32 %v3948, %v3308
        %v3977 = vmul.f32 %v3948, %v3310
        %v3978 = vmul.f32 %v3953, %v3170
        %v3979 = vmul.f32 %v3953, %v3314
        %v3980 = vmul.f32 %v3953, %v3316
        %v3981 = vmul.f32 %v3958, %v3174
        %v3982 = vmul.f32 %v3958, %v3318
        %v3983 = vmul.f32 %v3958, %v3320
        %v3984 = vrot.slane %v3960, 4
        %v3985 = vadd.f32 %v3960, %v3984
        %v3986 = vrot.slane %v3985, 2
        %v3987 = vadd.f32 %v3985, %v3986
        %v3988 = vrot.slane %v3987, 1
        %v3989 = vadd.f32 %v3987, %v3988
        %v3990 = vrot.slane %v3961, 4
        %v3991 = vadd.f32 %v3961, %v3990
        %v3992 = vrot.slane %v3991, 2
        %v3993 = vadd.f32 %v3991, %v3992
        %v3994 = vrot.slane %v3993, 1
        %v3995 = vadd.f32 %v3993, %v3994
        %v3996 = vrot.slane %v3962, 4
        %v3997 = vadd.f32 %v3962, %v3996
        %v3998 = vrot.slane %v3997, 2
        %v3999 = vadd.f32 %v3997, %v3998
        %v4000 = vrot.slane %v3999, 1
        %v4001 = vadd.f32 %v3999, %v4000
        %v4002 = vrot.slane %v3963, 4
        %v4003 = vadd.f32 %v3963, %v4002
        %v4004 = vrot.slane %v4003, 2
        %v4005 = vadd.f32 %v4003, %v4004
        %v4006 = vrot.slane %v4005, 1
        %v4007 = vadd.f32 %v4005, %v4006
        %v4008 = vrot.slane %v3964, 4
        %v4009 = vadd.f32 %v3964, %v4008
        %v4010 = vrot.slane %v4009, 2
        %v4011 = vadd.f32 %v4009, %v4010
        %v4012 = vrot.slane %v4011, 1
        %v4013 = vadd.f32 %v4011, %v4012
        %v4014 = vrot.slane %v3965, 4
        %v4015 = vadd.f32 %v3965, %v4014
        %v4016 = vrot.slane %v4015, 2
        %v4017 = vadd.f32 %v4015, %v4016
        %v4018 = vrot.slane %v4017, 1
        %v4019 = vadd.f32 %v4017, %v4018
        %v4020 = vrot.slane %v3966, 4
        %v4021 = vadd.f32 %v3966, %v4020
        %v4022 = vrot.slane %v4021, 2
        %v4023 = vadd.f32 %v4021, %v4022
        %v4024 = vrot.slane %v4023, 1
        %v4025 = vadd.f32 %v4023, %v4024
        %v4026 = vrot.slane %v3967, 4
        %v4027 = vadd.f32 %v3967, %v4026
        %v4028 = vrot.slane %v4027, 2
        %v4029 = vadd.f32 %v4027, %v4028
        %v4030 = vrot.slane %v4029, 1
        %v4031 = vadd.f32 %v4029, %v4030
        %v4032 = vrot.slane %v3968, 4
        %v4033 = vadd.f32 %v3968, %v4032
        %v4034 = vrot.slane %v4033, 2
        %v4035 = vadd.f32 %v4033, %v4034
        %v4036 = vrot.slane %v4035, 1
        %v4037 = vadd.f32 %v4035, %v4036
        %v4038 = vrot.slane %v3969, 4
        %v4039 = vadd.f32 %v3969, %v4038
        %v4040 = vrot.slane %v4039, 2
        %v4041 = vadd.f32 %v4039, %v4040
        %v4042 = vrot.slane %v4041, 1
        %v4043 = vadd.f32 %v4041, %v4042
        %v4044 = vrot.slane %v3970, 4
        %v4045 = vadd.f32 %v3970, %v4044
        %v4046 = vrot.slane %v4045, 2
        %v4047 = vadd.f32 %v4045, %v4046
        %v4048 = vrot.slane %v4047, 1
        %v4049 = vadd.f32 %v4047, %v4048
        %v4050 = vrot.slane %v3971, 4
        %v4051 = vadd.f32 %v3971, %v4050
        %v4052 = vrot.slane %v4051, 2
        %v4053 = vadd.f32 %v4051, %v4052
        %v4054 = vrot.slane %v4053, 1
        %v4055 = vadd.f32 %v4053, %v4054
        %v4056 = vrot.slane %v3972, 4
        %v4057 = vadd.f32 %v3972, %v4056
        %v4058 = vrot.slane %v4057, 2
        %v4059 = vadd.f32 %v4057, %v4058
        %v4060 = vrot.slane %v4059, 1
        %v4061 = vadd.f32 %v4059, %v4060
        %v4062 = vrot.slane %v3973, 4
        %v4063 = vadd.f32 %v3973, %v4062
        %v4064 = vrot.slane %v4063, 2
        %v4065 = vadd.f32 %v4063, %v4064
        %v4066 = vrot.slane %v4065, 1
        %v4067 = vadd.f32 %v4065, %v4066
        %v4068 = vrot.slane %v3974, 4
        %v4069 = vadd.f32 %v3974, %v4068
        %v4070 = vrot.slane %v4069, 2
        %v4071 = vadd.f32 %v4069, %v4070
        %v4072 = vrot.slane %v4071, 1
        %v4073 = vadd.f32 %v4071, %v4072
        %v4074 = vrot.slane %v3975, 4
        %v4075 = vadd.f32 %v3975, %v4074
        %v4076 = vrot.slane %v4075, 2
        %v4077 = vadd.f32 %v4075, %v4076
        %v4078 = vrot.slane %v4077, 1
        %v4079 = vadd.f32 %v4077, %v4078
        %v4080 = vrot.slane %v3976, 4
        %v4081 = vadd.f32 %v3976, %v4080
        %v4082 = vrot.slane %v4081, 2
        %v4083 = vadd.f32 %v4081, %v4082
        %v4084 = vrot.slane %v4083, 1
        %v4085 = vadd.f32 %v4083, %v4084
        %v4086 = vrot.slane %v3977, 4
        %v4087 = vadd.f32 %v3977, %v4086
        %v4088 = vrot.slane %v4087, 2
        %v4089 = vadd.f32 %v4087, %v4088
        %v4090 = vrot.slane %v4089, 1
        %v4091 = vadd.f32 %v4089, %v4090
        %v4092 = vrot.slane %v3978, 4
        %v4093 = vadd.f32 %v3978, %v4092
        %v4094 = vrot.slane %v4093, 2
        %v4095 = vadd.f32 %v4093, %v4094
        %v4096 = vrot.slane %v4095, 1
        %v4097 = vadd.f32 %v4095, %v4096
        %v4098 = vrot.slane %v3979, 4
        %v4099 = vadd.f32 %v3979, %v4098
        %v4100 = vrot.slane %v4099, 2
        %v4101 = vadd.f32 %v4099, %v4100
        %v4102 = vrot.slane %v4101, 1
        %v4103 = vadd.f32 %v4101, %v4102
        %v4104 = vrot.slane %v3980, 4
        %v4105 = vadd.f32 %v3980, %v4104
        %v4106 = vrot.slane %v4105, 2
        %v4107 = vadd.f32 %v4105, %v4106
        %v4108 = vrot.slane %v4107, 1
        %v4109 = vadd.f32 %v4107, %v4108
        %v4110 = vrot.slane %v3981, 4
        %v4111 = vadd.f32 %v3981, %v4110
        %v4112 = vrot.slane %v4111, 2
        %v4113 = vadd.f32 %v4111, %v4112
        %v4114 = vrot.slane %v4113, 1
        %v4115 = vadd.f32 %v4113, %v4114
        %v4116 = vrot.slane %v3982, 4
        %v4117 = vadd.f32 %v3982, %v4116
        %v4118 = vrot.slane %v4117, 2
        %v4119 = vadd.f32 %v4117, %v4118
        %v4120 = vrot.slane %v4119, 1
        %v4121 = vadd.f32 %v4119, %v4120
        %v4122 = vrot.slane %v3983, 4
        %v4123 = vadd.f32 %v3983, %v4122
        %v4124 = vrot.slane %v4123, 2
        %v4125 = vadd.f32 %v4123, %v4124
        %v4126 = vrot.slane %v4125, 1
        %v4127 = vadd.f32 %v4125, %v4126
        %v4128 = vpack.c.bf16 %v3989, %v3989
        %v4129 = vpack.c.bf16 %v3995, %v3995
        %v4130 = vpack.c.bf16 %v4001, %v4001
        %v4131 = vpack.c.bf16 %v4007, %v4007
        %v4132 = vpack.c.bf16 %v4013, %v4013
        %v4133 = vpack.c.bf16 %v4019, %v4019
        %v4134 = vpack.c.bf16 %v4025, %v4025
        %v4135 = vpack.c.bf16 %v4031, %v4031
        %v4136 = vpack.c.bf16 %v4037, %v4037
        %v4137 = vpack.c.bf16 %v4043, %v4043
        %v4138 = vpack.c.bf16 %v4049, %v4049
        %v4139 = vpack.c.bf16 %v4055, %v4055
        %v4140 = vpack.c.bf16 %v4061, %v4061
        %v4141 = vpack.c.bf16 %v4067, %v4067
        %v4142 = vpack.c.bf16 %v4073, %v4073
        %v4143 = vpack.c.bf16 %v4079, %v4079
        %v4144 = vpack.c.bf16 %v4085, %v4085
        %v4145 = vpack.c.bf16 %v4091, %v4091
        %v4146 = vpack.c.bf16 %v4097, %v4097
        %v4147 = vpack.c.bf16 %v4103, %v4103
        %v4148 = vpack.c.bf16 %v4109, %v4109
        %v4149 = vpack.c.bf16 %v4115, %v4115
        %v4150 = vpack.c.bf16 %v4121, %v4121
        %v4151 = vpack.c.bf16 %v4127, %v4127
        %v4152 = vld [vmem:[#allocation10] sm:$0xff]
        %v4153 = vld [vmem:[#allocation10 + $0x8] sm:$0xf]
        %v4154 = vld [vmem:[#allocation10 + $0xc] sm:$0xff]
        %v4155 = vld [vmem:[#allocation10 + $0x14] sm:$0xf]
        %v4156 = vld [vmem:[#allocation10 + $0x18] sm:$0xff]
        %v4157 = vld [vmem:[#allocation10 + $0x20] sm:$0xf]
        %v4158 = vld [vmem:[#allocation10 + $0x24] sm:$0xff]
        %v4159 = vld [vmem:[#allocation10 + $0x2c] sm:$0xf]
        %v4160 = vld [vmem:[#allocation10 + $0x30] sm:$0xff]
        %v4161 = vld [vmem:[#allocation10 + $0x38] sm:$0xf]
        %v4162 = vld [vmem:[#allocation10 + $0x3c] sm:$0xff]
        %v4163 = vld [vmem:[#allocation10 + $0x44] sm:$0xf]
        %v4164 = vld [vmem:[#allocation10 + $0x48] sm:$0xff]
        %v4165 = vld [vmem:[#allocation10 + $0x50] sm:$0xf]
        %v4166 = vld [vmem:[#allocation10 + $0x54] sm:$0xff]
        %v4167 = vld [vmem:[#allocation10 + $0x5c] sm:$0xf]
        %v4168 = vld [vmem:[#allocation10 + $0x60] sm:$0xff]
        %v4169 = vld [vmem:[#allocation10 + $0x68] sm:$0xf]
        %v4170 = vld [vmem:[#allocation10 + $0x6c] sm:$0xff]
        %v4171 = vld [vmem:[#allocation10 + $0x74] sm:$0xf]
        %v4172 = vld [vmem:[#allocation10 + $0x78] sm:$0xff]
        %v4173 = vld [vmem:[#allocation10 + $0x80] sm:$0xf]
        %v4174 = vld [vmem:[#allocation10 + $0x84] sm:$0xff]
        %v4175 = vld [vmem:[#allocation10 + $0x8c] sm:$0xf]
        %v4176 = vld [vmem:[#allocation10 + $0x90] sm:$0xff]
        %v4177 = vld [vmem:[#allocation10 + $0x98] sm:$0xf]
        %v4178 = vld [vmem:[#allocation10 + $0x9c] sm:$0xff]
        %v4179 = vld [vmem:[#allocation10 + $0xa4] sm:$0xf]
        %v4180 = vld [vmem:[#allocation10 + $0xa8] sm:$0xff]
        %v4181 = vld [vmem:[#allocation10 + $0xb0] sm:$0xf]
        %v4182 = vld [vmem:[#allocation10 + $0xb4] sm:$0xff]
        %v4183 = vld [vmem:[#allocation10 + $0xbc] sm:$0xf]
        %v4184 = vld [vmem:[#allocation10 + $0xc0] sm:$0xff]
        %v4185 = vld [vmem:[#allocation10 + $0xc8] sm:$0xf]
        %v4186 = vld [vmem:[#allocation10 + $0xcc] sm:$0xff]
        %v4187 = vld [vmem:[#allocation10 + $0xd4] sm:$0xf]
        %v4188 = vld [vmem:[#allocation10 + $0xd8] sm:$0xff]
        %v4189 = vld [vmem:[#allocation10 + $0xe0] sm:$0xf]
        %v4190 = vld [vmem:[#allocation10 + $0xe4] sm:$0xff]
        %v4191 = vld [vmem:[#allocation10 + $0xec] sm:$0xf]
        %v4192 = vld [vmem:[#allocation10 + $0xf0] sm:$0xff]
        %v4193 = vld [vmem:[#allocation10 + $0xf8] sm:$0xf]
        %v4194 = vld [vmem:[#allocation10 + $0xfc] sm:$0xff]
        %v4195 = vld [vmem:[#allocation10 + $0x104] sm:$0xf]
        %v4196 = vld [vmem:[#allocation10 + $0x108] sm:$0xff]
        %v4197 = vld [vmem:[#allocation10 + $0x110] sm:$0xf]
        %v4198 = vld [vmem:[#allocation10 + $0x114] sm:$0xff]
        %v4199 = vld [vmem:[#allocation10 + $0x11c] sm:$0xf]
        %v4200 = vld [vmem:[#allocation10 + $0x120] sm:$0xff]
        %v4201 = vld [vmem:[#allocation10 + $0x128] sm:$0xf]
        %v4202 = vld [vmem:[#allocation10 + $0x12c] sm:$0xff]
        %v4203 = vld [vmem:[#allocation10 + $0x134] sm:$0xf]
        %v4204 = vld [vmem:[#allocation10 + $0x138] sm:$0xff]
        %v4205 = vld [vmem:[#allocation10 + $0x140] sm:$0xf]
        %v4206 = vld [vmem:[#allocation10 + $0x144] sm:$0xff]
        %v4207 = vld [vmem:[#allocation10 + $0x14c] sm:$0xf]
        %v4208 = vld [vmem:[#allocation10 + $0x150] sm:$0xff]
        %v4209 = vld [vmem:[#allocation10 + $0x158] sm:$0xf]
        %v4210 = vld [vmem:[#allocation10 + $0x15c] sm:$0xff]
        %v4211 = vld [vmem:[#allocation10 + $0x164] sm:$0xf]
        %v4212 = vld [vmem:[#allocation10 + $0x168] sm:$0xff]
        %v4213 = vld [vmem:[#allocation10 + $0x170] sm:$0xf]
        %v4214 = vld [vmem:[#allocation10 + $0x174] sm:$0xff]
        %v4215 = vld [vmem:[#allocation10 + $0x17c] sm:$0xf]
        %v4216 = vld [vmem:[#allocation10 + $0x180] sm:$0xff]
        %v4217 = vld [vmem:[#allocation10 + $0x188] sm:$0xf]
        %v4218 = vld [vmem:[#allocation10 + $0x18c] sm:$0xff]
        %v4219 = vld [vmem:[#allocation10 + $0x194] sm:$0xf]
        %v4220 = vld [vmem:[#allocation10 + $0x198] sm:$0xff]
        %v4221 = vld [vmem:[#allocation10 + $0x1a0] sm:$0xf]
        %v4222 = vld [vmem:[#allocation10 + $0x1a4] sm:$0xff]
        %v4223 = vld [vmem:[#allocation10 + $0x1ac] sm:$0xf]
        %v4224 = vld [vmem:[#allocation10 + $0x1b0] sm:$0xff]
        %v4225 = vld [vmem:[#allocation10 + $0x1b8] sm:$0xf]
        %v4226 = vld [vmem:[#allocation10 + $0x1bc] sm:$0xff]
        %v4227 = vld [vmem:[#allocation10 + $0x1c4] sm:$0xf]
        %v4228 = vld [vmem:[#allocation10 + $0x1c8] sm:$0xff]
        %v4229 = vld [vmem:[#allocation10 + $0x1d0] sm:$0xf]
        %v4230 = vld [vmem:[#allocation10 + $0x1d4] sm:$0xff]
        %v4231 = vld [vmem:[#allocation10 + $0x1dc] sm:$0xf]
        %v4232 = vld [vmem:[#allocation10 + $0x1e0] sm:$0xff]
        %v4233 = vld [vmem:[#allocation10 + $0x1e8] sm:$0xf]
        %v4234 = vld [vmem:[#allocation10 + $0x1ec] sm:$0xff]
        %v4235 = vld [vmem:[#allocation10 + $0x1f4] sm:$0xf]
        %v4236 = vld [vmem:[#allocation10 + $0x1f8] sm:$0xff]
        %v4237 = vld [vmem:[#allocation10 + $0x200] sm:$0xf]
        %v4238 = vld [vmem:[#allocation10 + $0x204] sm:$0xff]
        %v4239 = vld [vmem:[#allocation10 + $0x20c] sm:$0xf]
        %v4240 = vld [vmem:[#allocation10 + $0x210] sm:$0xff]
        %v4241 = vld [vmem:[#allocation10 + $0x218] sm:$0xf]
        %v4242 = vld [vmem:[#allocation10 + $0x21c] sm:$0xff]
        %v4243 = vld [vmem:[#allocation10 + $0x224] sm:$0xf]
        %v4244 = vld [vmem:[#allocation10 + $0x228] sm:$0xff]
        %v4245 = vld [vmem:[#allocation10 + $0x230] sm:$0xf]
        %v4246 = vld [vmem:[#allocation10 + $0x234] sm:$0xff]
        %v4247 = vld [vmem:[#allocation10 + $0x23c] sm:$0xf]
        %v4248 = vld [vmem:[%s9] sm:$0x7]
        %v4250 = vlaneseq
        %v4251 = vshrl.u32 %v4250, 7
        %v4252 = vsub.s32 0, %v4251
        %v4253 = vrot.slane %v4248, %v4252
        %v4254 = vlaneseq
        %v4255 = vshrl.u32 %v4254, 7
        %v4256 = vsub.s32 1, %v4255
        %v4257 = vrot.slane %v4248, %v4256
        %v4258 = vlaneseq
        %v4259 = vshrl.u32 %v4258, 7
        %v4260 = vsub.s32 2, %v4259
        %v4261 = vrot.slane %v4248, %v4260
        %v4289 = vunpack.c.l.b16 %v4128
        %v4290 = vunpack.c.l.b16 %v4129
        %v4291 = vunpack.c.l.b16 %v4130
        %v4292 = vunpack.c.l.b16 %v4131
        %v4293 = vunpack.c.l.b16 %v4132
        %v4294 = vunpack.c.l.b16 %v4133
        %v4295 = vunpack.c.l.b16 %v4134
        %v4296 = vunpack.c.l.b16 %v4135
        %v4297 = vunpack.c.l.b16 %v4136
        %v4298 = vunpack.c.l.b16 %v4137
        %v4299 = vunpack.c.l.b16 %v4138
        %v4300 = vunpack.c.l.b16 %v4139
        %v4301 = vunpack.c.l.b16 %v4140
        %v4302 = vunpack.c.l.b16 %v4141
        %v4303 = vunpack.c.l.b16 %v4142
        %v4304 = vunpack.c.l.b16 %v4143
        %v4305 = vunpack.c.l.b16 %v4144
        %v4306 = vunpack.c.l.b16 %v4145
        %v4307 = vunpack.c.l.b16 %v4146
        %v4308 = vunpack.c.l.b16 %v4147
        %v4309 = vunpack.c.l.b16 %v4148
        %v4310 = vunpack.c.l.b16 %v4149
        %v4311 = vunpack.c.l.b16 %v4150
        %v4312 = vunpack.c.l.b16 %v4151
        %v4313 = vsel %vm1408, %v4292, %v4289
        %v4314 = vsel %vm1410, %v4295, %v4313
        %v4315 = vsel %vm1412, %v4298, %v4314
        %v4316 = vsel %vm1414, %v4301, %v4315
        %v4317 = vsel %vm1416, %v4304, %v4316
        %v4318 = vsel %vm1418, %v4307, %v4317
        %v4319 = vsel %vm1420, %v4310, %v4318
        %v4320 = vsel %vm1408, %v4293, %v4290
        %v4321 = vsel %vm1410, %v4296, %v4320
        %v4322 = vsel %vm1412, %v4299, %v4321
        %v4323 = vsel %vm1414, %v4302, %v4322
        %v4324 = vsel %vm1416, %v4305, %v4323
        %v4325 = vsel %vm1418, %v4308, %v4324
        %v4326 = vsel %vm1420, %v4311, %v4325
        %v4327 = vsel %vm1408, %v4294, %v4291
        %v4328 = vsel %vm1410, %v4297, %v4327
        %v4329 = vsel %vm1412, %v4300, %v4328
        %v4330 = vsel %vm1414, %v4303, %v4329
        %v4331 = vsel %vm1416, %v4306, %v4330
        %v4332 = vsel %vm1418, %v4309, %v4331
        %v4333 = vsel %vm1420, %v4312, %v4332
        %v4334 = vpack.c.b16 %v4319, %v4319
        %v4335 = vpack.c.b16 %v4326, %v4326
        %v4336 = vpack.c.b16 %v4333, %v4333
        %v4436 = vunpack.c.l.b16 %v4152
        %v4437 = vunpack.c.h.b16 %v4152
        %v4438 = vunpack.c.l.b16 %v4153
        %v4439 = vunpack.c.l.b16 %v4154
        %v4440 = vunpack.c.h.b16 %v4154
        %v4441 = vunpack.c.l.b16 %v4155
        %v4442 = vunpack.c.l.b16 %v4156
        %v4443 = vunpack.c.h.b16 %v4156
        %v4444 = vunpack.c.l.b16 %v4157
        %v4445 = vunpack.c.l.b16 %v4158
        %v4446 = vunpack.c.h.b16 %v4158
        %v4447 = vunpack.c.l.b16 %v4159
        %v4448 = vunpack.c.l.b16 %v4160
        %v4449 = vunpack.c.h.b16 %v4160
        %v4450 = vunpack.c.l.b16 %v4161
        %v4451 = vunpack.c.l.b16 %v4162
        %v4452 = vunpack.c.h.b16 %v4162
        %v4453 = vunpack.c.l.b16 %v4163
        %v4454 = vunpack.c.l.b16 %v4164
        %v4455 = vunpack.c.h.b16 %v4164
        %v4456 = vunpack.c.l.b16 %v4165
        %v4457 = vunpack.c.l.b16 %v4166
        %v4458 = vunpack.c.h.b16 %v4166
        %v4459 = vunpack.c.l.b16 %v4167
        %v4460 = vunpack.c.l.b16 %v4168
        %v4461 = vunpack.c.h.b16 %v4168
        %v4462 = vunpack.c.l.b16 %v4169
        %v4463 = vunpack.c.l.b16 %v4170
        %v4464 = vunpack.c.h.b16 %v4170
        %v4465 = vunpack.c.l.b16 %v4171
        %v4466 = vunpack.c.l.b16 %v4172
        %v4467 = vunpack.c.h.b16 %v4172
        %v4468 = vunpack.c.l.b16 %v4173
        %v4469 = vunpack.c.l.b16 %v4174
        %v4470 = vunpack.c.h.b16 %v4174
        %v4471 = vunpack.c.l.b16 %v4175
        %v4472 = vunpack.c.l.b16 %v4176
        %v4473 = vunpack.c.h.b16 %v4176
        %v4474 = vunpack.c.l.b16 %v4177
        %v4475 = vunpack.c.l.b16 %v4178
        %v4476 = vunpack.c.h.b16 %v4178
        %v4477 = vunpack.c.l.b16 %v4179
        %v4478 = vunpack.c.l.b16 %v4180
        %v4479 = vunpack.c.h.b16 %v4180
        %v4480 = vunpack.c.l.b16 %v4181
        %v4481 = vunpack.c.l.b16 %v4182
        %v4482 = vunpack.c.h.b16 %v4182
        %v4483 = vunpack.c.l.b16 %v4183
        %v4484 = vunpack.c.l.b16 %v4184
        %v4485 = vunpack.c.h.b16 %v4184
        %v4486 = vunpack.c.l.b16 %v4185
        %v4487 = vunpack.c.l.b16 %v4186
        %v4488 = vunpack.c.h.b16 %v4186
        %v4489 = vunpack.c.l.b16 %v4187
        %v4490 = vunpack.c.l.b16 %v4188
        %v4491 = vunpack.c.h.b16 %v4188
        %v4492 = vunpack.c.l.b16 %v4189
        %v4493 = vunpack.c.l.b16 %v4190
        %v4494 = vunpack.c.h.b16 %v4190
        %v4495 = vunpack.c.l.b16 %v4191
        %v4496 = vunpack.c.l.b16 %v4192
        %v4497 = vunpack.c.h.b16 %v4192
        %v4498 = vunpack.c.l.b16 %v4193
        %v4499 = vunpack.c.l.b16 %v4194
        %v4500 = vunpack.c.h.b16 %v4194
        %v4501 = vunpack.c.l.b16 %v4195
        %v4502 = vunpack.c.l.b16 %v4196
        %v4503 = vunpack.c.h.b16 %v4196
        %v4504 = vunpack.c.l.b16 %v4197
        %v4505 = vunpack.c.l.b16 %v4198
        %v4506 = vunpack.c.h.b16 %v4198
        %v4507 = vunpack.c.l.b16 %v4199
        %v4508 = vunpack.c.l.b16 %v4200
        %v4509 = vunpack.c.h.b16 %v4200
        %v4510 = vunpack.c.l.b16 %v4201
        %v4511 = vunpack.c.l.b16 %v4202
        %v4512 = vunpack.c.h.b16 %v4202
        %v4513 = vunpack.c.l.b16 %v4203
        %v4514 = vunpack.c.l.b16 %v4204
        %v4515 = vunpack.c.h.b16 %v4204
        %v4516 = vunpack.c.l.b16 %v4205
        %v4517 = vunpack.c.l.b16 %v4206
        %v4518 = vunpack.c.h.b16 %v4206
        %v4519 = vunpack.c.l.b16 %v4207
        %v4520 = vunpack.c.l.b16 %v4208
        %v4521 = vunpack.c.h.b16 %v4208
        %v4522 = vunpack.c.l.b16 %v4209
        %v4523 = vunpack.c.l.b16 %v4210
        %v4524 = vunpack.c.h.b16 %v4210
        %v4525 = vunpack.c.l.b16 %v4211
        %v4526 = vunpack.c.l.b16 %v4212
        %v4527 = vunpack.c.h.b16 %v4212
        %v4528 = vunpack.c.l.b16 %v4213
        %v4529 = vunpack.c.l.b16 %v4214
        %v4530 = vunpack.c.h.b16 %v4214
        %v4531 = vunpack.c.l.b16 %v4215
        %v4532 = vunpack.c.l.b16 %v4216
        %v4533 = vunpack.c.h.b16 %v4216
        %v4534 = vunpack.c.l.b16 %v4217
        %v4535 = vunpack.c.l.b16 %v4218
        %v4536 = vunpack.c.h.b16 %v4218
        %v4537 = vunpack.c.l.b16 %v4219
        %v4538 = vunpack.c.l.b16 %v4220
        %v4539 = vunpack.c.h.b16 %v4220
        %v4540 = vunpack.c.l.b16 %v4221
        %v4541 = vunpack.c.l.b16 %v4222
        %v4542 = vunpack.c.h.b16 %v4222
        %v4543 = vunpack.c.l.b16 %v4223
        %v4544 = vunpack.c.l.b16 %v4224
        %v4545 = vunpack.c.h.b16 %v4224
        %v4546 = vunpack.c.l.b16 %v4225
        %v4547 = vunpack.c.l.b16 %v4226
        %v4548 = vunpack.c.h.b16 %v4226
        %v4549 = vunpack.c.l.b16 %v4227
        %v4550 = vunpack.c.l.b16 %v4228
        %v4551 = vunpack.c.h.b16 %v4228
        %v4552 = vunpack.c.l.b16 %v4229
        %v4553 = vunpack.c.l.b16 %v4230
        %v4554 = vunpack.c.h.b16 %v4230
        %v4555 = vunpack.c.l.b16 %v4231
        %v4556 = vunpack.c.l.b16 %v4232
        %v4557 = vunpack.c.h.b16 %v4232
        %v4558 = vunpack.c.l.b16 %v4233
        %v4559 = vunpack.c.l.b16 %v4234
        %v4560 = vunpack.c.h.b16 %v4234
        %v4561 = vunpack.c.l.b16 %v4235
        %v4562 = vunpack.c.l.b16 %v4236
        %v4563 = vunpack.c.h.b16 %v4236
        %v4564 = vunpack.c.l.b16 %v4237
        %v4565 = vunpack.c.l.b16 %v4238
        %v4566 = vunpack.c.h.b16 %v4238
        %v4567 = vunpack.c.l.b16 %v4239
        %v4568 = vunpack.c.l.b16 %v4240
        %v4569 = vunpack.c.h.b16 %v4240
        %v4570 = vunpack.c.l.b16 %v4241
        %v4571 = vunpack.c.l.b16 %v4242
        %v4572 = vunpack.c.h.b16 %v4242
        %v4573 = vunpack.c.l.b16 %v4243
        %v4574 = vunpack.c.l.b16 %v4244
        %v4575 = vunpack.c.h.b16 %v4244
        %v4576 = vunpack.c.l.b16 %v4245
        %v4577 = vunpack.c.l.b16 %v4246
        %v4578 = vunpack.c.h.b16 %v4246
        %v4579 = vunpack.c.l.b16 %v4247
        %v4580 = vpack.c.b16 %v4439, %v4436
        %v4581 = vpack.c.b16 %v4440, %v4437
        %v4582 = vpack.c.b16 %v4441, %v4438
        %v4583 = vpack.c.b16 %v4445, %v4442
        %v4584 = vpack.c.b16 %v4446, %v4443
        %v4585 = vpack.c.b16 %v4447, %v4444
        %v4586 = vpack.c.b16 %v4451, %v4448
        %v4587 = vpack.c.b16 %v4452, %v4449
        %v4588 = vpack.c.b16 %v4453, %v4450
        %v4589 = vpack.c.b16 %v4457, %v4454
        %v4590 = vpack.c.b16 %v4458, %v4455
        %v4591 = vpack.c.b16 %v4459, %v4456
        %v4592 = vpack.c.b16 %v4463, %v4460
        %v4593 = vpack.c.b16 %v4464, %v4461
        %v4594 = vpack.c.b16 %v4465, %v4462
        %v4595 = vpack.c.b16 %v4469, %v4466
        %v4596 = vpack.c.b16 %v4470, %v4467
        %v4597 = vpack.c.b16 %v4471, %v4468
        %v4598 = vpack.c.b16 %v4475, %v4472
        %v4599 = vpack.c.b16 %v4476, %v4473
        %v4600 = vpack.c.b16 %v4477, %v4474
        %v4601 = vpack.c.b16 %v4481, %v4478
        %v4602 = vpack.c.b16 %v4482, %v4479
        %v4603 = vpack.c.b16 %v4483, %v4480
        %v4604 = vpack.c.b16 %v4487, %v4484
        %v4605 = vpack.c.b16 %v4488, %v4485
        %v4606 = vpack.c.b16 %v4489, %v4486
        %v4607 = vpack.c.b16 %v4493, %v4490
        %v4608 = vpack.c.b16 %v4494, %v4491
        %v4609 = vpack.c.b16 %v4495, %v4492
        %v4610 = vpack.c.b16 %v4499, %v4496
        %v4611 = vpack.c.b16 %v4500, %v4497
        %v4612 = vpack.c.b16 %v4501, %v4498
        %v4613 = vpack.c.b16 %v4505, %v4502
        %v4614 = vpack.c.b16 %v4506, %v4503
        %v4615 = vpack.c.b16 %v4507, %v4504
        %v4616 = vpack.c.b16 %v4511, %v4508
        %v4617 = vpack.c.b16 %v4512, %v4509
        %v4618 = vpack.c.b16 %v4513, %v4510
        %v4619 = vpack.c.b16 %v4517, %v4514
        %v4620 = vpack.c.b16 %v4518, %v4515
        %v4621 = vpack.c.b16 %v4519, %v4516
        %v4622 = vpack.c.b16 %v4523, %v4520
        %v4623 = vpack.c.b16 %v4524, %v4521
        %v4624 = vpack.c.b16 %v4525, %v4522
        %v4625 = vpack.c.b16 %v4529, %v4526
        %v4626 = vpack.c.b16 %v4530, %v4527
        %v4627 = vpack.c.b16 %v4531, %v4528
        %v4628 = vpack.c.b16 %v4535, %v4532
        %v4629 = vpack.c.b16 %v4536, %v4533
        %v4630 = vpack.c.b16 %v4537, %v4534
        %v4631 = vpack.c.b16 %v4541, %v4538
        %v4632 = vpack.c.b16 %v4542, %v4539
        %v4633 = vpack.c.b16 %v4543, %v4540
        %v4634 = vpack.c.b16 %v4547, %v4544
        %v4635 = vpack.c.b16 %v4548, %v4545
        %v4636 = vpack.c.b16 %v4549, %v4546
        %v4637 = vpack.c.b16 %v4553, %v4550
        %v4638 = vpack.c.b16 %v4554, %v4551
        %v4639 = vpack.c.b16 %v4555, %v4552
        %v4640 = vpack.c.b16 %v4559, %v4556
        %v4641 = vpack.c.b16 %v4560, %v4557
        %v4642 = vpack.c.b16 %v4561, %v4558
        %v4643 = vpack.c.b16 %v4565, %v4562
        %v4644 = vpack.c.b16 %v4566, %v4563
        %v4645 = vpack.c.b16 %v4567, %v4564
        %v4646 = vpack.c.b16 %v4571, %v4568
        %v4647 = vpack.c.b16 %v4572, %v4569
        %v4648 = vpack.c.b16 %v4573, %v4570
        %v4649 = vpack.c.b16 %v4577, %v4574
        %v4650 = vpack.c.b16 %v4578, %v4575
        %v4651 = vpack.c.b16 %v4579, %v4576
        %4724 = vmatprep.subr.bf16.mxu0 %v4581
        %4725 = vmatpush1.bf16.msra.mxu0 %v4580
        %4726 = vmatprep.subr.bf16.mxu0 %v4584
        %4727 = vmatpush1.bf16.msra.mxu0 %v4583
        %4728 = vmatprep.subr.bf16.mxu0 %v4587
        %4729 = vmatpush1.bf16.msra.mxu0 %v4586
        %4730 = vmatprep.subr.bf16.mxu0 %v4590
        %4731 = vmatpush1.bf16.msra.mxu0 %v4589
        %4732 = vmatprep.subr.bf16.mxu0 %v4593
        %4733 = vmatpush1.bf16.msra.mxu0 %v4592
        %4734 = vmatprep.subr.bf16.mxu0 %v4596
        %4735 = vmatpush1.bf16.msra.mxu0 %v4595
        %4736 = vmatprep.subr.bf16.mxu0 %v4599
        %4737 = vmatpush1.bf16.msra.mxu0 %v4598
        %4738 = vmatprep.subr.bf16.mxu0 %v4602
        %4739 = vmatpush1.bf16.msra.mxu0 %v4601
        %4740 = vmatprep.subr.bf16.mxu0 %v4605
        %4741 = vmatpush1.bf16.msra.mxu0 %v4604
        %4742 = vmatprep.subr.bf16.mxu0 %v4608
        %4743 = vmatpush1.bf16.msra.mxu0 %v4607
        %4744 = vmatprep.subr.bf16.mxu0 %v4611
        %4745 = vmatpush1.bf16.msra.mxu0 %v4610
        %4746 = vmatprep.subr.bf16.mxu0 %v4614
        %4747 = vmatpush1.bf16.msra.mxu0 %v4613
        %4748 = vmatprep.subr.bf16.mxu0 %v4617
        %4749 = vmatpush1.bf16.msra.mxu0 %v4616
        %4750 = vmatprep.subr.bf16.mxu0 %v4620
        %4751 = vmatpush1.bf16.msra.mxu0 %v4619
        %4752 = vmatprep.subr.bf16.mxu0 %v4623
        %4753 = vmatpush1.bf16.msra.mxu0 %v4622
        %4754 = vmatprep.subr.bf16.mxu0 %v4626
        %4755 = vmatpush1.bf16.msra.mxu0 %v4625
        %4756 = vmatprep.mubr.bf16.mxu0 %v4335
        %4757 = vmatmul.mubr.bf16.gmra.mrb[0].mxu0 %v4334
        %v4758 = vpop.f32.mrb[0].mxu0
        %v4759 = vadd.f32 %v4253, %v4758
        %v4760 = vpop.f32.mrb[0].mxu0
        %v4761 = vadd.f32 %v4257, %v4760
        %v4762 = vpop.f32.mrb[0].mxu0
        %v4763 = vpop.f32.mrb[0].mxu0
        %4764 = vdwg.mxu0
        %4765 = vmatprep.subr.bf16.mxu0 %v4629
        %4766 = vmatpush1.bf16.msra.mxu0 %v4628
        %4767 = vmatprep.subr.bf16.mxu0 %v4632
        %4768 = vmatpush1.bf16.msra.mxu0 %v4631
        %4769 = vmatprep.subr.bf16.mxu0 %v4635
        %4770 = vmatpush1.bf16.msra.mxu0 %v4634
        %4771 = vmatprep.subr.bf16.mxu0 %v4638
        %4772 = vmatpush1.bf16.msra.mxu0 %v4637
        %4773 = vmatprep.subr.bf16.mxu0 %v4641
        %4774 = vmatpush1.bf16.msra.mxu0 %v4640
        %4775 = vmatprep.subr.bf16.mxu0 %v4644
        %4776 = vmatpush1.bf16.msra.mxu0 %v4643
        %4777 = vmatprep.subr.bf16.mxu0 %v4647
        %4778 = vmatpush1.bf16.msra.mxu0 %v4646
        %4779 = vmatprep.subr.bf16.mxu0 %v4650
        %4780 = vmatpush1.bf16.msra.mxu0 %v4649
        %4781 = vmatprep.subr.bf16.mxu0 0
        %4782 = vmatpush1.bf16.msra.mxu0 0
        %4783 = vmatprep.subr.bf16.mxu0 0
        %4784 = vmatpush1.bf16.msra.mxu0 0
        %4785 = vmatprep.subr.bf16.mxu0 0
        %4786 = vmatpush1.bf16.msra.mxu0 0
        %4787 = vmatprep.subr.bf16.mxu0 0
        %4788 = vmatpush1.bf16.msra.mxu0 0
        %4789 = vmatprep.subr.bf16.mxu0 0
        %4790 = vmatpush1.bf16.msra.mxu0 0
        %4791 = vmatprep.subr.bf16.mxu0 0
        %4792 = vmatpush1.bf16.msra.mxu0 0
        %4793 = vmatprep.subr.bf16.mxu0 0
        %4794 = vmatpush1.bf16.msra.mxu0 0
        %4795 = vmatprep.subr.bf16.mxu0 0
        %4796 = vmatpush1.bf16.msra.mxu0 0
        %4797 = vmatprep.mubr.bf16.mxu0 0
        %4798 = vmatmul.mubr.bf16.gmra.mrb[0].mxu0 %v4336
        %v4799 = vpop.f32.mrb[0].mxu0
        %v4800 = vadd.f32 %v4759, %v4799
        %v4801 = vpop.f32.mrb[0].mxu0
        %v4802 = vadd.f32 %v4761, %v4801
        %v4803 = vpop.f32.mrb[0].mxu0
        %v4804 = vpop.f32.mrb[0].mxu0
        %4805 = vdwg.mxu0
        %4806 = vmatprep.subr.bf16.mxu0 0
        %4807 = vmatpush1.bf16.msra.mxu0 %v4582
        %4808 = vmatprep.subr.bf16.mxu0 0
        %4809 = vmatpush1.bf16.msra.mxu0 %v4585
        %4810 = vmatprep.subr.bf16.mxu0 0
        %4811 = vmatpush1.bf16.msra.mxu0 %v4588
        %4812 = vmatprep.subr.bf16.mxu0 0
        %4813 = vmatpush1.bf16.msra.mxu0 %v4591
        %4814 = vmatprep.subr.bf16.mxu0 0
        %4815 = vmatpush1.bf16.msra.mxu0 %v4594
        %4816 = vmatprep.subr.bf16.mxu0 0
        %4817 = vmatpush1.bf16.msra.mxu0 %v4597
        %4818 = vmatprep.subr.bf16.mxu0 0
        %4819 = vmatpush1.bf16.msra.mxu0 %v4600
        %4820 = vmatprep.subr.bf16.mxu0 0
        %4821 = vmatpush1.bf16.msra.mxu0 %v4603
        %4822 = vmatprep.subr.bf16.mxu0 0
        %4823 = vmatpush1.bf16.msra.mxu0 %v4606
        %4824 = vmatprep.subr.bf16.mxu0 0
        %4825 = vmatpush1.bf16.msra.mxu0 %v4609
        %4826 = vmatprep.subr.bf16.mxu0 0
        %4827 = vmatpush1.bf16.msra.mxu0 %v4612
        %4828 = vmatprep.subr.bf16.mxu0 0
        %4829 = vmatpush1.bf16.msra.mxu0 %v4615
        %4830 = vmatprep.subr.bf16.mxu0 0
        %4831 = vmatpush1.bf16.msra.mxu0 %v4618
        %4832 = vmatprep.subr.bf16.mxu0 0
        %4833 = vmatpush1.bf16.msra.mxu0 %v4621
        %4834 = vmatprep.subr.bf16.mxu0 0
        %4835 = vmatpush1.bf16.msra.mxu0 %v4624
        %4836 = vmatprep.subr.bf16.mxu0 0
        %4837 = vmatpush1.bf16.msra.mxu0 %v4627
        %4838 = vmatprep.mubr.bf16.mxu0 %v4335
        %4839 = vmatmul.mubr.bf16.gmra.mrb[0].mxu0 %v4334
        %v4840 = vpop.f32.mrb[0].mxu0
        %v4841 = vadd.f32 %v4261, %v4840
        %v4842 = vpop.f32.mrb[0].mxu0
        %v4843 = vpop.f32.mrb[0].mxu0
        %v4844 = vpop.f32.mrb[0].mxu0
        %4845 = vdwg.mxu0
        %4846 = vmatprep.subr.bf16.mxu0 0
        %4847 = vmatpush1.bf16.msra.mxu0 %v4630
        %4848 = vmatprep.subr.bf16.mxu0 0
        %4849 = vmatpush1.bf16.msra.mxu0 %v4633
        %4850 = vmatprep.subr.bf16.mxu0 0
        %4851 = vmatpush1.bf16.msra.mxu0 %v4636
        %4852 = vmatprep.subr.bf16.mxu0 0
        %4853 = vmatpush1.bf16.msra.mxu0 %v4639
        %4854 = vmatprep.subr.bf16.mxu0 0
        %4855 = vmatpush1.bf16.msra.mxu0 %v4642
        %4856 = vmatprep.subr.bf16.mxu0 0
        %4857 = vmatpush1.bf16.msra.mxu0 %v4645
        %4858 = vmatprep.subr.bf16.mxu0 0
        %4859 = vmatpush1.bf16.msra.mxu0 %v4648
        %4860 = vmatprep.subr.bf16.mxu0 0
        %4861 = vmatpush1.bf16.msra.mxu0 %v4651
        %4862 = vmatprep.subr.bf16.mxu0 0
        %4863 = vmatpush1.bf16.msra.mxu0 0
        %4864 = vmatprep.subr.bf16.mxu0 0
        %4865 = vmatpush1.bf16.msra.mxu0 0
        %4866 = vmatprep.subr.bf16.mxu0 0
        %4867 = vmatpush1.bf16.msra.mxu0 0
        %4868 = vmatprep.subr.bf16.mxu0 0
        %4869 = vmatpush1.bf16.msra.mxu0 0
        %4870 = vmatprep.subr.bf16.mxu0 0
        %4871 = vmatpush1.bf16.msra.mxu0 0
        %4872 = vmatprep.subr.bf16.mxu0 0
        %4873 = vmatpush1.bf16.msra.mxu0 0
        %4874 = vmatprep.subr.bf16.mxu0 0
        %4875 = vmatpush1.bf16.msra.mxu0 0
        %4876 = vmatprep.subr.bf16.mxu0 0
        %4877 = vmatpush1.bf16.msra.mxu0 0
        %4878 = vmatprep.mubr.bf16.mxu0 0
        %4879 = vmatmul.mubr.bf16.gmra.mrb[0].mxu0 %v4336
        %v4880 = vpop.f32.mrb[0].mxu0
        %v4881 = vadd.f32 %v4841, %v4880
        %v4882 = vpop.f32.mrb[0].mxu0
        %v4883 = vpop.f32.mrb[0].mxu0
        %v4884 = vpop.f32.mrb[0].mxu0
        %4885 = vdwg.mxu0
        %v4910 = vsel %vm1408, %v1090, %v1072
        %v4911 = vsel %vm1410, %v1108, %v4910
        %v4912 = vsel %vm1412, %v1126, %v4911
        %v4913 = vsel %vm1414, %v1144, %v4912
        %v4914 = vsel %vm1416, %v1162, %v4913
        %v4915 = vsel %vm1418, %v1180, %v4914
        %v4916 = vsel %vm1420, %v1198, %v4915
        %v4917 = vsel %vm1408, %v1096, %v1078
        %v4918 = vsel %vm1410, %v1114, %v4917
        %v4919 = vsel %vm1412, %v1132, %v4918
        %v4920 = vsel %vm1414, %v1150, %v4919
        %v4921 = vsel %vm1416, %v1168, %v4920
        %v4922 = vsel %vm1418, %v1186, %v4921
        %v4923 = vsel %vm1420, %v1204, %v4922
        %v4924 = vsel %vm1408, %v1102, %v1084
        %v4925 = vsel %vm1410, %v1120, %v4924
        %v4926 = vsel %vm1412, %v1138, %v4925
        %v4927 = vsel %vm1414, %v1156, %v4926
        %v4928 = vsel %vm1416, %v1174, %v4927
        %v4929 = vsel %vm1418, %v1192, %v4928
        %v4930 = vsel %vm1420, %v1210, %v4929
        %v4934 = vpack.c.bf16 %v4800, %v4800
        %v4935 = vpack.c.bf16 %v4802, %v4802
        %v4936 = vpack.c.bf16 %v4881, %v4881
        %v4937 = vpack.c.bf16 %v4916, %v4916
        %v4938 = vpack.c.bf16 %v4923, %v4923
        %v4939 = vpack.c.bf16 %v4930, %v4930
        %v4940 = vld [vmem:[#allocation11] sm:$0xff]
        %v4941 = vld [vmem:[#allocation11 + $0x8] sm:$0xf]
        %v4942 = vld [vmem:[#allocation11 + $0xc] sm:$0xff]
        %v4943 = vld [vmem:[#allocation11 + $0x14] sm:$0xf]
        %v4944 = vld [vmem:[#allocation11 + $0x18] sm:$0xff]
        %v4945 = vld [vmem:[#allocation11 + $0x20] sm:$0xf]
        %v4946 = vld [vmem:[#allocation11 + $0x24] sm:$0xff]
        %v4947 = vld [vmem:[#allocation11 + $0x2c] sm:$0xf]
        %v4948 = vld [vmem:[#allocation11 + $0x30] sm:$0xff]
        %v4949 = vld [vmem:[#allocation11 + $0x38] sm:$0xf]
        %v4950 = vld [vmem:[#allocation11 + $0x3c] sm:$0xff]
        %v4951 = vld [vmem:[#allocation11 + $0x44] sm:$0xf]
        %v4952 = vld [vmem:[#allocation11 + $0x48] sm:$0xff]
        %v4953 = vld [vmem:[#allocation11 + $0x50] sm:$0xf]
        %v4954 = vld [vmem:[#allocation11 + $0x54] sm:$0xff]
        %v4955 = vld [vmem:[#allocation11 + $0x5c] sm:$0xf]
        %v4956 = vld [vmem:[#allocation11 + $0x60] sm:$0xff]
        %v4957 = vld [vmem:[#allocation11 + $0x68] sm:$0xf]
        %v4958 = vld [vmem:[#allocation11 + $0x6c] sm:$0xff]
        %v4959 = vld [vmem:[#allocation11 + $0x74] sm:$0xf]
        %v4960 = vld [vmem:[#allocation11 + $0x78] sm:$0xff]
        %v4961 = vld [vmem:[#allocation11 + $0x80] sm:$0xf]
        %v4962 = vld [vmem:[#allocation11 + $0x84] sm:$0xff]
        %v4963 = vld [vmem:[#allocation11 + $0x8c] sm:$0xf]
        %v4964 = vld [vmem:[#allocation11 + $0x90] sm:$0xff]
        %v4965 = vld [vmem:[#allocation11 + $0x98] sm:$0xf]
        %v4966 = vld [vmem:[#allocation11 + $0x9c] sm:$0xff]
        %v4967 = vld [vmem:[#allocation11 + $0xa4] sm:$0xf]
        %v4968 = vld [vmem:[#allocation11 + $0xa8] sm:$0xff]
        %v4969 = vld [vmem:[#allocation11 + $0xb0] sm:$0xf]
        %v4970 = vld [vmem:[#allocation11 + $0xb4] sm:$0xff]
        %v4971 = vld [vmem:[#allocation11 + $0xbc] sm:$0xf]
        %v4972 = vld [vmem:[#allocation11 + $0xc0] sm:$0xff]
        %v4973 = vld [vmem:[#allocation11 + $0xc8] sm:$0xf]
        %v4974 = vld [vmem:[#allocation11 + $0xcc] sm:$0xff]
        %v4975 = vld [vmem:[#allocation11 + $0xd4] sm:$0xf]
        %v4976 = vld [vmem:[#allocation11 + $0xd8] sm:$0xff]
        %v4977 = vld [vmem:[#allocation11 + $0xe0] sm:$0xf]
        %v4978 = vld [vmem:[#allocation11 + $0xe4] sm:$0xff]
        %v4979 = vld [vmem:[#allocation11 + $0xec] sm:$0xf]
        %v4980 = vld [vmem:[#allocation11 + $0xf0] sm:$0xff]
        %v4981 = vld [vmem:[#allocation11 + $0xf8] sm:$0xf]
        %v4982 = vld [vmem:[#allocation11 + $0xfc] sm:$0xff]
        %v4983 = vld [vmem:[#allocation11 + $0x104] sm:$0xf]
        %v4984 = vld [vmem:[#allocation11 + $0x108] sm:$0xff]
        %v4985 = vld [vmem:[#allocation11 + $0x110] sm:$0xf]
        %v4986 = vld [vmem:[#allocation11 + $0x114] sm:$0xff]
        %v4987 = vld [vmem:[#allocation11 + $0x11c] sm:$0xf]
        %v4988 = vld [vmem:[#allocation11 + $0x120] sm:$0xff]
        %v4989 = vld [vmem:[#allocation11 + $0x128] sm:$0xf]
        %v4990 = vld [vmem:[#allocation11 + $0x12c] sm:$0xff]
        %v4991 = vld [vmem:[#allocation11 + $0x134] sm:$0xf]
        %v4992 = vld [vmem:[#allocation11 + $0x138] sm:$0xff]
        %v4993 = vld [vmem:[#allocation11 + $0x140] sm:$0xf]
        %v4994 = vld [vmem:[#allocation11 + $0x144] sm:$0xff]
        %v4995 = vld [vmem:[#allocation11 + $0x14c] sm:$0xf]
        %v4996 = vld [vmem:[#allocation11 + $0x150] sm:$0xff]
        %v4997 = vld [vmem:[#allocation11 + $0x158] sm:$0xf]
        %v4998 = vld [vmem:[#allocation11 + $0x15c] sm:$0xff]
        %v4999 = vld [vmem:[#allocation11 + $0x164] sm:$0xf]
        %v5000 = vld [vmem:[#allocation11 + $0x168] sm:$0xff]
        %v5001 = vld [vmem:[#allocation11 + $0x170] sm:$0xf]
        %v5002 = vld [vmem:[#allocation11 + $0x174] sm:$0xff]
        %v5003 = vld [vmem:[#allocation11 + $0x17c] sm:$0xf]
        %v5004 = vld [vmem:[#allocation11 + $0x180] sm:$0xff]
        %v5005 = vld [vmem:[#allocation11 + $0x188] sm:$0xf]
        %v5006 = vld [vmem:[#allocation11 + $0x18c] sm:$0xff]
        %v5007 = vld [vmem:[#allocation11 + $0x194] sm:$0xf]
        %v5008 = vld [vmem:[#allocation11 + $0x198] sm:$0xff]
        %v5009 = vld [vmem:[#allocation11 + $0x1a0] sm:$0xf]
        %v5010 = vld [vmem:[#allocation11 + $0x1a4] sm:$0xff]
        %v5011 = vld [vmem:[#allocation11 + $0x1ac] sm:$0xf]
        %v5012 = vld [vmem:[#allocation11 + $0x1b0] sm:$0xff]
        %v5013 = vld [vmem:[#allocation11 + $0x1b8] sm:$0xf]
        %v5014 = vld [vmem:[#allocation11 + $0x1bc] sm:$0xff]
        %v5015 = vld [vmem:[#allocation11 + $0x1c4] sm:$0xf]
        %v5016 = vld [vmem:[#allocation11 + $0x1c8] sm:$0xff]
        %v5017 = vld [vmem:[#allocation11 + $0x1d0] sm:$0xf]
        %v5018 = vld [vmem:[#allocation11 + $0x1d4] sm:$0xff]
        %v5019 = vld [vmem:[#allocation11 + $0x1dc] sm:$0xf]
        %v5020 = vld [vmem:[#allocation11 + $0x1e0] sm:$0xff]
        %v5021 = vld [vmem:[#allocation11 + $0x1e8] sm:$0xf]
        %v5022 = vld [vmem:[#allocation11 + $0x1ec] sm:$0xff]
        %v5023 = vld [vmem:[#allocation11 + $0x1f4] sm:$0xf]
        %v5024 = vld [vmem:[#allocation11 + $0x1f8] sm:$0xff]
        %v5025 = vld [vmem:[#allocation11 + $0x200] sm:$0xf]
        %v5026 = vld [vmem:[#allocation11 + $0x204] sm:$0xff]
        %v5027 = vld [vmem:[#allocation11 + $0x20c] sm:$0xf]
        %v5028 = vld [vmem:[#allocation11 + $0x210] sm:$0xff]
        %v5029 = vld [vmem:[#allocation11 + $0x218] sm:$0xf]
        %v5030 = vld [vmem:[#allocation11 + $0x21c] sm:$0xff]
        %v5031 = vld [vmem:[#allocation11 + $0x224] sm:$0xf]
        %v5032 = vld [vmem:[#allocation11 + $0x228] sm:$0xff]
        %v5033 = vld [vmem:[#allocation11 + $0x230] sm:$0xf]
        %v5034 = vld [vmem:[#allocation11 + $0x234] sm:$0xff]
        %v5035 = vld [vmem:[#allocation11 + $0x23c] sm:$0xf]
        %v5036 = vld [vmem:[#allocation11 + $0x240] sm:$0xff]
        %v5037 = vld [vmem:[#allocation11 + $0x248] sm:$0xf]
        %v5038 = vld [vmem:[#allocation11 + $0x24c] sm:$0xff]
        %v5039 = vld [vmem:[#allocation11 + $0x254] sm:$0xf]
        %v5040 = vld [vmem:[#allocation11 + $0x258] sm:$0xff]
        %v5041 = vld [vmem:[#allocation11 + $0x260] sm:$0xf]
        %v5042 = vld [vmem:[#allocation11 + $0x264] sm:$0xff]
        %v5043 = vld [vmem:[#allocation11 + $0x26c] sm:$0xf]
        %v5044 = vld [vmem:[#allocation11 + $0x270] sm:$0xff]
        %v5045 = vld [vmem:[#allocation11 + $0x278] sm:$0xf]
        %v5046 = vld [vmem:[#allocation11 + $0x27c] sm:$0xff]
        %v5047 = vld [vmem:[#allocation11 + $0x284] sm:$0xf]
        %v5048 = vld [vmem:[#allocation11 + $0x288] sm:$0xff]
        %v5049 = vld [vmem:[#allocation11 + $0x290] sm:$0xf]
        %v5050 = vld [vmem:[#allocation11 + $0x294] sm:$0xff]
        %v5051 = vld [vmem:[#allocation11 + $0x29c] sm:$0xf]
        %v5052 = vld [vmem:[#allocation11 + $0x2a0] sm:$0xff]
        %v5053 = vld [vmem:[#allocation11 + $0x2a8] sm:$0xf]
        %v5054 = vld [vmem:[#allocation11 + $0x2ac] sm:$0xff]
        %v5055 = vld [vmem:[#allocation11 + $0x2b4] sm:$0xf]
        %v5056 = vld [vmem:[#allocation11 + $0x2b8] sm:$0xff]
        %v5057 = vld [vmem:[#allocation11 + $0x2c0] sm:$0xf]
        %v5058 = vld [vmem:[#allocation11 + $0x2c4] sm:$0xff]
        %v5059 = vld [vmem:[#allocation11 + $0x2cc] sm:$0xf]
        %v5060 = vld [vmem:[#allocation11 + $0x2d0] sm:$0xff]
        %v5061 = vld [vmem:[#allocation11 + $0x2d8] sm:$0xf]
        %v5062 = vld [vmem:[#allocation11 + $0x2dc] sm:$0xff]
        %v5063 = vld [vmem:[#allocation11 + $0x2e4] sm:$0xf]
        %v5064 = vld [vmem:[#allocation11 + $0x2e8] sm:$0xff]
        %v5065 = vld [vmem:[#allocation11 + $0x2f0] sm:$0xf]
        %v5066 = vld [vmem:[#allocation11 + $0x2f4] sm:$0xff]
        %v5067 = vld [vmem:[#allocation11 + $0x2fc] sm:$0xf]
        %v5068 = vld [vmem:[#allocation11 + $0x300] sm:$0xff]
        %v5069 = vld [vmem:[#allocation11 + $0x308] sm:$0xf]
        %v5070 = vld [vmem:[#allocation11 + $0x30c] sm:$0xff]
        %v5071 = vld [vmem:[#allocation11 + $0x314] sm:$0xf]
        %v5072 = vld [vmem:[#allocation11 + $0x318] sm:$0xff]
        %v5073 = vld [vmem:[#allocation11 + $0x320] sm:$0xf]
        %v5074 = vld [vmem:[#allocation11 + $0x324] sm:$0xff]
        %v5075 = vld [vmem:[#allocation11 + $0x32c] sm:$0xf]
        %v5076 = vld [vmem:[#allocation11 + $0x330] sm:$0xff]
        %v5077 = vld [vmem:[#allocation11 + $0x338] sm:$0xf]
        %v5078 = vld [vmem:[#allocation11 + $0x33c] sm:$0xff]
        %v5079 = vld [vmem:[#allocation11 + $0x344] sm:$0xf]
        %v5080 = vld [vmem:[#allocation11 + $0x348] sm:$0xff]
        %v5081 = vld [vmem:[#allocation11 + $0x350] sm:$0xf]
        %v5082 = vld [vmem:[#allocation11 + $0x354] sm:$0xff]
        %v5083 = vld [vmem:[#allocation11 + $0x35c] sm:$0xf]
        %v5084 = vld [vmem:[#allocation11 + $0x360] sm:$0xff]
        %v5085 = vld [vmem:[#allocation11 + $0x368] sm:$0xf]
        %v5086 = vld [vmem:[#allocation11 + $0x36c] sm:$0xff]
        %v5087 = vld [vmem:[#allocation11 + $0x374] sm:$0xf]
        %v5088 = vld [vmem:[#allocation11 + $0x378] sm:$0xff]
        %v5089 = vld [vmem:[#allocation11 + $0x380] sm:$0xf]
        %v5090 = vld [vmem:[#allocation11 + $0x384] sm:$0xff]
        %v5091 = vld [vmem:[#allocation11 + $0x38c] sm:$0xf]
        %v5092 = vld [vmem:[#allocation11 + $0x390] sm:$0xff]
        %v5093 = vld [vmem:[#allocation11 + $0x398] sm:$0xf]
        %v5094 = vld [vmem:[#allocation11 + $0x39c] sm:$0xff]
        %v5095 = vld [vmem:[#allocation11 + $0x3a4] sm:$0xf]
        %v5096 = vld [vmem:[#allocation11 + $0x3a8] sm:$0xff]
        %v5097 = vld [vmem:[#allocation11 + $0x3b0] sm:$0xf]
        %v5098 = vld [vmem:[#allocation11 + $0x3b4] sm:$0xff]
        %v5099 = vld [vmem:[#allocation11 + $0x3bc] sm:$0xf]
        %v5100 = vld [vmem:[#allocation11 + $0x3c0] sm:$0xff]
        %v5101 = vld [vmem:[#allocation11 + $0x3c8] sm:$0xf]
        %v5102 = vld [vmem:[#allocation11 + $0x3cc] sm:$0xff]
        %v5103 = vld [vmem:[#allocation11 + $0x3d4] sm:$0xf]
        %v5104 = vld [vmem:[#allocation11 + $0x3d8] sm:$0xff]
        %v5105 = vld [vmem:[#allocation11 + $0x3e0] sm:$0xf]
        %v5106 = vld [vmem:[#allocation11 + $0x3e4] sm:$0xff]
        %v5107 = vld [vmem:[#allocation11 + $0x3ec] sm:$0xf]
        %v5108 = vld [vmem:[#allocation11 + $0x3f0] sm:$0xff]
        %v5109 = vld [vmem:[#allocation11 + $0x3f8] sm:$0xf]
        %v5110 = vld [vmem:[#allocation11 + $0x3fc] sm:$0xff]
        %v5111 = vld [vmem:[#allocation11 + $0x404] sm:$0xf]
        %v5112 = vld [vmem:[#allocation11 + $0x408] sm:$0xff]
        %v5113 = vld [vmem:[#allocation11 + $0x410] sm:$0xf]
        %v5114 = vld [vmem:[#allocation11 + $0x414] sm:$0xff]
        %v5115 = vld [vmem:[#allocation11 + $0x41c] sm:$0xf]
        %v5116 = vld [vmem:[#allocation11 + $0x420] sm:$0xff]
        %v5117 = vld [vmem:[#allocation11 + $0x428] sm:$0xf]
        %v5118 = vld [vmem:[#allocation11 + $0x42c] sm:$0xff]
        %v5119 = vld [vmem:[#allocation11 + $0x434] sm:$0xf]
        %v5120 = vld [vmem:[#allocation11 + $0x438] sm:$0xff]
        %v5121 = vld [vmem:[#allocation11 + $0x440] sm:$0xf]
        %v5122 = vld [vmem:[#allocation11 + $0x444] sm:$0xff]
        %v5123 = vld [vmem:[#allocation11 + $0x44c] sm:$0xf]
        %v5124 = vld [vmem:[#allocation11 + $0x450] sm:$0xff]
        %v5125 = vld [vmem:[#allocation11 + $0x458] sm:$0xf]
        %v5126 = vld [vmem:[#allocation11 + $0x45c] sm:$0xff]
        %v5127 = vld [vmem:[#allocation11 + $0x464] sm:$0xf]
        %v5128 = vld [vmem:[#allocation11 + $0x468] sm:$0xff]
        %v5129 = vld [vmem:[#allocation11 + $0x470] sm:$0xf]
        %v5130 = vld [vmem:[#allocation11 + $0x474] sm:$0xff]
        %v5131 = vld [vmem:[#allocation11 + $0x47c] sm:$0xf]
        %v5132 = vld [vmem:[%s11] sm:$0x7]
        %v5134 = vlaneseq
        %v5135 = vshrl.u32 %v5134, 7
        %v5136 = vsub.s32 0, %v5135
        %v5137 = vrot.slane %v5132, %v5136
        %v5138 = vlaneseq
        %v5139 = vshrl.u32 %v5138, 7
        %v5140 = vsub.s32 1, %v5139
        %v5141 = vrot.slane %v5132, %v5140
        %v5142 = vlaneseq
        %v5143 = vshrl.u32 %v5142, 7
        %v5144 = vsub.s32 2, %v5143
        %v5145 = vrot.slane %v5132, %v5144
        %v5341 = vunpack.c.l.b16 %v4940
        %v5342 = vunpack.c.h.b16 %v4940
        %v5343 = vunpack.c.l.b16 %v4941
        %v5344 = vunpack.c.l.b16 %v4942
        %v5345 = vunpack.c.h.b16 %v4942
        %v5346 = vunpack.c.l.b16 %v4943
        %v5347 = vunpack.c.l.b16 %v4944
        %v5348 = vunpack.c.h.b16 %v4944
        %v5349 = vunpack.c.l.b16 %v4945
        %v5350 = vunpack.c.l.b16 %v4946
        %v5351 = vunpack.c.h.b16 %v4946
        %v5352 = vunpack.c.l.b16 %v4947
        %v5353 = vunpack.c.l.b16 %v4948
        %v5354 = vunpack.c.h.b16 %v4948
        %v5355 = vunpack.c.l.b16 %v4949
        %v5356 = vunpack.c.l.b16 %v4950
        %v5357 = vunpack.c.h.b16 %v4950
        %v5358 = vunpack.c.l.b16 %v4951
        %v5359 = vunpack.c.l.b16 %v4952
        %v5360 = vunpack.c.h.b16 %v4952
        %v5361 = vunpack.c.l.b16 %v4953
        %v5362 = vunpack.c.l.b16 %v4954
        %v5363 = vunpack.c.h.b16 %v4954
        %v5364 = vunpack.c.l.b16 %v4955
        %v5365 = vunpack.c.l.b16 %v4956
        %v5366 = vunpack.c.h.b16 %v4956
        %v5367 = vunpack.c.l.b16 %v4957
        %v5368 = vunpack.c.l.b16 %v4958
        %v5369 = vunpack.c.h.b16 %v4958
        %v5370 = vunpack.c.l.b16 %v4959
        %v5371 = vunpack.c.l.b16 %v4960
        %v5372 = vunpack.c.h.b16 %v4960
        %v5373 = vunpack.c.l.b16 %v4961
        %v5374 = vunpack.c.l.b16 %v4962
        %v5375 = vunpack.c.h.b16 %v4962
        %v5376 = vunpack.c.l.b16 %v4963
        %v5377 = vunpack.c.l.b16 %v4964
        %v5378 = vunpack.c.h.b16 %v4964
        %v5379 = vunpack.c.l.b16 %v4965
        %v5380 = vunpack.c.l.b16 %v4966
        %v5381 = vunpack.c.h.b16 %v4966
        %v5382 = vunpack.c.l.b16 %v4967
        %v5383 = vunpack.c.l.b16 %v4968
        %v5384 = vunpack.c.h.b16 %v4968
        %v5385 = vunpack.c.l.b16 %v4969
        %v5386 = vunpack.c.l.b16 %v4970
        %v5387 = vunpack.c.h.b16 %v4970
        %v5388 = vunpack.c.l.b16 %v4971
        %v5389 = vunpack.c.l.b16 %v4972
        %v5390 = vunpack.c.h.b16 %v4972
        %v5391 = vunpack.c.l.b16 %v4973
        %v5392 = vunpack.c.l.b16 %v4974
        %v5393 = vunpack.c.h.b16 %v4974
        %v5394 = vunpack.c.l.b16 %v4975
        %v5395 = vunpack.c.l.b16 %v4976
        %v5396 = vunpack.c.h.b16 %v4976
        %v5397 = vunpack.c.l.b16 %v4977
        %v5398 = vunpack.c.l.b16 %v4978
        %v5399 = vunpack.c.h.b16 %v4978
        %v5400 = vunpack.c.l.b16 %v4979
        %v5401 = vunpack.c.l.b16 %v4980
        %v5402 = vunpack.c.h.b16 %v4980
        %v5403 = vunpack.c.l.b16 %v4981
        %v5404 = vunpack.c.l.b16 %v4982
        %v5405 = vunpack.c.h.b16 %v4982
        %v5406 = vunpack.c.l.b16 %v4983
        %v5407 = vunpack.c.l.b16 %v4984
        %v5408 = vunpack.c.h.b16 %v4984
        %v5409 = vunpack.c.l.b16 %v4985
        %v5410 = vunpack.c.l.b16 %v4986
        %v5411 = vunpack.c.h.b16 %v4986
        %v5412 = vunpack.c.l.b16 %v4987
        %v5413 = vunpack.c.l.b16 %v4988
        %v5414 = vunpack.c.h.b16 %v4988
        %v5415 = vunpack.c.l.b16 %v4989
        %v5416 = vunpack.c.l.b16 %v4990
        %v5417 = vunpack.c.h.b16 %v4990
        %v5418 = vunpack.c.l.b16 %v4991
        %v5419 = vunpack.c.l.b16 %v4992
        %v5420 = vunpack.c.h.b16 %v4992
        %v5421 = vunpack.c.l.b16 %v4993
        %v5422 = vunpack.c.l.b16 %v4994
        %v5423 = vunpack.c.h.b16 %v4994
        %v5424 = vunpack.c.l.b16 %v4995
        %v5425 = vunpack.c.l.b16 %v4996
        %v5426 = vunpack.c.h.b16 %v4996
        %v5427 = vunpack.c.l.b16 %v4997
        %v5428 = vunpack.c.l.b16 %v4998
        %v5429 = vunpack.c.h.b16 %v4998
        %v5430 = vunpack.c.l.b16 %v4999
        %v5431 = vunpack.c.l.b16 %v5000
        %v5432 = vunpack.c.h.b16 %v5000
        %v5433 = vunpack.c.l.b16 %v5001
        %v5434 = vunpack.c.l.b16 %v5002
        %v5435 = vunpack.c.h.b16 %v5002
        %v5436 = vunpack.c.l.b16 %v5003
        %v5437 = vunpack.c.l.b16 %v5004
        %v5438 = vunpack.c.h.b16 %v5004
        %v5439 = vunpack.c.l.b16 %v5005
        %v5440 = vunpack.c.l.b16 %v5006
        %v5441 = vunpack.c.h.b16 %v5006
        %v5442 = vunpack.c.l.b16 %v5007
        %v5443 = vunpack.c.l.b16 %v5008
        %v5444 = vunpack.c.h.b16 %v5008
        %v5445 = vunpack.c.l.b16 %v5009
        %v5446 = vunpack.c.l.b16 %v5010
        %v5447 = vunpack.c.h.b16 %v5010
        %v5448 = vunpack.c.l.b16 %v5011
        %v5449 = vunpack.c.l.b16 %v5012
        %v5450 = vunpack.c.h.b16 %v5012
        %v5451 = vunpack.c.l.b16 %v5013
        %v5452 = vunpack.c.l.b16 %v5014
        %v5453 = vunpack.c.h.b16 %v5014
        %v5454 = vunpack.c.l.b16 %v5015
        %v5455 = vunpack.c.l.b16 %v5016
        %v5456 = vunpack.c.h.b16 %v5016
        %v5457 = vunpack.c.l.b16 %v5017
        %v5458 = vunpack.c.l.b16 %v5018
        %v5459 = vunpack.c.h.b16 %v5018
        %v5460 = vunpack.c.l.b16 %v5019
        %v5461 = vunpack.c.l.b16 %v5020
        %v5462 = vunpack.c.h.b16 %v5020
        %v5463 = vunpack.c.l.b16 %v5021
        %v5464 = vunpack.c.l.b16 %v5022
        %v5465 = vunpack.c.h.b16 %v5022
        %v5466 = vunpack.c.l.b16 %v5023
        %v5467 = vunpack.c.l.b16 %v5024
        %v5468 = vunpack.c.h.b16 %v5024
        %v5469 = vunpack.c.l.b16 %v5025
        %v5470 = vunpack.c.l.b16 %v5026
        %v5471 = vunpack.c.h.b16 %v5026
        %v5472 = vunpack.c.l.b16 %v5027
        %v5473 = vunpack.c.l.b16 %v5028
        %v5474 = vunpack.c.h.b16 %v5028
        %v5475 = vunpack.c.l.b16 %v5029
        %v5476 = vunpack.c.l.b16 %v5030
        %v5477 = vunpack.c.h.b16 %v5030
        %v5478 = vunpack.c.l.b16 %v5031
        %v5479 = vunpack.c.l.b16 %v5032
        %v5480 = vunpack.c.h.b16 %v5032
        %v5481 = vunpack.c.l.b16 %v5033
        %v5482 = vunpack.c.l.b16 %v5034
        %v5483 = vunpack.c.h.b16 %v5034
        %v5484 = vunpack.c.l.b16 %v5035
        %v5485 = vunpack.c.l.b16 %v5036
        %v5486 = vunpack.c.h.b16 %v5036
        %v5487 = vunpack.c.l.b16 %v5037
        %v5488 = vunpack.c.l.b16 %v5038
        %v5489 = vunpack.c.h.b16 %v5038
        %v5490 = vunpack.c.l.b16 %v5039
        %v5491 = vunpack.c.l.b16 %v5040
        %v5492 = vunpack.c.h.b16 %v5040
        %v5493 = vunpack.c.l.b16 %v5041
        %v5494 = vunpack.c.l.b16 %v5042
        %v5495 = vunpack.c.h.b16 %v5042
        %v5496 = vunpack.c.l.b16 %v5043
        %v5497 = vunpack.c.l.b16 %v5044
        %v5498 = vunpack.c.h.b16 %v5044
        %v5499 = vunpack.c.l.b16 %v5045
        %v5500 = vunpack.c.l.b16 %v5046
        %v5501 = vunpack.c.h.b16 %v5046
        %v5502 = vunpack.c.l.b16 %v5047
        %v5503 = vunpack.c.l.b16 %v5048
        %v5504 = vunpack.c.h.b16 %v5048
        %v5505 = vunpack.c.l.b16 %v5049
        %v5506 = vunpack.c.l.b16 %v5050
        %v5507 = vunpack.c.h.b16 %v5050
        %v5508 = vunpack.c.l.b16 %v5051
        %v5509 = vunpack.c.l.b16 %v5052
        %v5510 = vunpack.c.h.b16 %v5052
        %v5511 = vunpack.c.l.b16 %v5053
        %v5512 = vunpack.c.l.b16 %v5054
        %v5513 = vunpack.c.h.b16 %v5054
        %v5514 = vunpack.c.l.b16 %v5055
        %v5515 = vunpack.c.l.b16 %v5056
        %v5516 = vunpack.c.h.b16 %v5056
        %v5517 = vunpack.c.l.b16 %v5057
        %v5518 = vunpack.c.l.b16 %v5058
        %v5519 = vunpack.c.h.b16 %v5058
        %v5520 = vunpack.c.l.b16 %v5059
        %v5521 = vunpack.c.l.b16 %v5060
        %v5522 = vunpack.c.h.b16 %v5060
        %v5523 = vunpack.c.l.b16 %v5061
        %v5524 = vunpack.c.l.b16 %v5062
        %v5525 = vunpack.c.h.b16 %v5062
        %v5526 = vunpack.c.l.b16 %v5063
        %v5527 = vunpack.c.l.b16 %v5064
        %v5528 = vunpack.c.h.b16 %v5064
        %v5529 = vunpack.c.l.b16 %v5065
        %v5530 = vunpack.c.l.b16 %v5066
        %v5531 = vunpack.c.h.b16 %v5066
        %v5532 = vunpack.c.l.b16 %v5067
        %v5533 = vunpack.c.l.b16 %v5068
        %v5534 = vunpack.c.h.b16 %v5068
        %v5535 = vunpack.c.l.b16 %v5069
        %v5536 = vunpack.c.l.b16 %v5070
        %v5537 = vunpack.c.h.b16 %v5070
        %v5538 = vunpack.c.l.b16 %v5071
        %v5539 = vunpack.c.l.b16 %v5072
        %v5540 = vunpack.c.h.b16 %v5072
        %v5541 = vunpack.c.l.b16 %v5073
        %v5542 = vunpack.c.l.b16 %v5074
        %v5543 = vunpack.c.h.b16 %v5074
        %v5544 = vunpack.c.l.b16 %v5075
        %v5545 = vunpack.c.l.b16 %v5076
        %v5546 = vunpack.c.h.b16 %v5076
        %v5547 = vunpack.c.l.b16 %v5077
        %v5548 = vunpack.c.l.b16 %v5078
        %v5549 = vunpack.c.h.b16 %v5078
        %v5550 = vunpack.c.l.b16 %v5079
        %v5551 = vunpack.c.l.b16 %v5080
        %v5552 = vunpack.c.h.b16 %v5080
        %v5553 = vunpack.c.l.b16 %v5081
        %v5554 = vunpack.c.l.b16 %v5082
        %v5555 = vunpack.c.h.b16 %v5082
        %v5556 = vunpack.c.l.b16 %v5083
        %v5557 = vunpack.c.l.b16 %v5084
        %v5558 = vunpack.c.h.b16 %v5084
        %v5559 = vunpack.c.l.b16 %v5085
        %v5560 = vunpack.c.l.b16 %v5086
        %v5561 = vunpack.c.h.b16 %v5086
        %v5562 = vunpack.c.l.b16 %v5087
        %v5563 = vunpack.c.l.b16 %v5088
        %v5564 = vunpack.c.h.b16 %v5088
        %v5565 = vunpack.c.l.b16 %v5089
        %v5566 = vunpack.c.l.b16 %v5090
        %v5567 = vunpack.c.h.b16 %v5090
        %v5568 = vunpack.c.l.b16 %v5091
        %v5569 = vunpack.c.l.b16 %v5092
        %v5570 = vunpack.c.h.b16 %v5092
        %v5571 = vunpack.c.l.b16 %v5093
        %v5572 = vunpack.c.l.b16 %v5094
        %v5573 = vunpack.c.h.b16 %v5094
        %v5574 = vunpack.c.l.b16 %v5095
        %v5575 = vunpack.c.l.b16 %v5096
        %v5576 = vunpack.c.h.b16 %v5096
        %v5577 = vunpack.c.l.b16 %v5097
        %v5578 = vunpack.c.l.b16 %v5098
        %v5579 = vunpack.c.h.b16 %v5098
        %v5580 = vunpack.c.l.b16 %v5099
        %v5581 = vunpack.c.l.b16 %v5100
        %v5582 = vunpack.c.h.b16 %v5100
        %v5583 = vunpack.c.l.b16 %v5101
        %v5584 = vunpack.c.l.b16 %v5102
        %v5585 = vunpack.c.h.b16 %v5102
        %v5586 = vunpack.c.l.b16 %v5103
        %v5587 = vunpack.c.l.b16 %v5104
        %v5588 = vunpack.c.h.b16 %v5104
        %v5589 = vunpack.c.l.b16 %v5105
        %v5590 = vunpack.c.l.b16 %v5106
        %v5591 = vunpack.c.h.b16 %v5106
        %v5592 = vunpack.c.l.b16 %v5107
        %v5593 = vunpack.c.l.b16 %v5108
        %v5594 = vunpack.c.h.b16 %v5108
        %v5595 = vunpack.c.l.b16 %v5109
        %v5596 = vunpack.c.l.b16 %v5110
        %v5597 = vunpack.c.h.b16 %v5110
        %v5598 = vunpack.c.l.b16 %v5111
        %v5599 = vunpack.c.l.b16 %v5112
        %v5600 = vunpack.c.h.b16 %v5112
        %v5601 = vunpack.c.l.b16 %v5113
        %v5602 = vunpack.c.l.b16 %v5114
        %v5603 = vunpack.c.h.b16 %v5114
        %v5604 = vunpack.c.l.b16 %v5115
        %v5605 = vunpack.c.l.b16 %v5116
        %v5606 = vunpack.c.h.b16 %v5116
        %v5607 = vunpack.c.l.b16 %v5117
        %v5608 = vunpack.c.l.b16 %v5118
        %v5609 = vunpack.c.h.b16 %v5118
        %v5610 = vunpack.c.l.b16 %v5119
        %v5611 = vunpack.c.l.b16 %v5120
        %v5612 = vunpack.c.h.b16 %v5120
        %v5613 = vunpack.c.l.b16 %v5121
        %v5614 = vunpack.c.l.b16 %v5122
        %v5615 = vunpack.c.h.b16 %v5122
        %v5616 = vunpack.c.l.b16 %v5123
        %v5617 = vunpack.c.l.b16 %v5124
        %v5618 = vunpack.c.h.b16 %v5124
        %v5619 = vunpack.c.l.b16 %v5125
        %v5620 = vunpack.c.l.b16 %v5126
        %v5621 = vunpack.c.h.b16 %v5126
        %v5622 = vunpack.c.l.b16 %v5127
        %v5623 = vunpack.c.l.b16 %v5128
        %v5624 = vunpack.c.h.b16 %v5128
        %v5625 = vunpack.c.l.b16 %v5129
        %v5626 = vunpack.c.l.b16 %v5130
        %v5627 = vunpack.c.h.b16 %v5130
        %v5628 = vunpack.c.l.b16 %v5131
        %v5629 = vpack.c.b16 %v5344, %v5341
        %v5630 = vpack.c.b16 %v5345, %v5342
        %v5631 = vpack.c.b16 %v5346, %v5343
        %v5632 = vpack.c.b16 %v5350, %v5347
        %v5633 = vpack.c.b16 %v5351, %v5348
        %v5634 = vpack.c.b16 %v5352, %v5349
        %v5635 = vpack.c.b16 %v5356, %v5353
        %v5636 = vpack.c.b16 %v5357, %v5354
        %v5637 = vpack.c.b16 %v5358, %v5355
        %v5638 = vpack.c.b16 %v5362, %v5359
        %v5639 = vpack.c.b16 %v5363, %v5360
        %v5640 = vpack.c.b16 %v5364, %v5361
        %v5641 = vpack.c.b16 %v5368, %v5365
        %v5642 = vpack.c.b16 %v5369, %v5366
        %v5643 = vpack.c.b16 %v5370, %v5367
        %v5644 = vpack.c.b16 %v5374, %v5371
        %v5645 = vpack.c.b16 %v5375, %v5372
        %v5646 = vpack.c.b16 %v5376, %v5373
        %v5647 = vpack.c.b16 %v5380, %v5377
        %v5648 = vpack.c.b16 %v5381, %v5378
        %v5649 = vpack.c.b16 %v5382, %v5379
        %v5650 = vpack.c.b16 %v5386, %v5383
        %v5651 = vpack.c.b16 %v5387, %v5384
        %v5652 = vpack.c.b16 %v5388, %v5385
        %v5653 = vpack.c.b16 %v5392, %v5389
        %v5654 = vpack.c.b16 %v5393, %v5390
        %v5655 = vpack.c.b16 %v5394, %v5391
        %v5656 = vpack.c.b16 %v5398, %v5395
        %v5657 = vpack.c.b16 %v5399, %v5396
        %v5658 = vpack.c.b16 %v5400, %v5397
        %v5659 = vpack.c.b16 %v5404, %v5401
        %v5660 = vpack.c.b16 %v5405, %v5402
        %v5661 = vpack.c.b16 %v5406, %v5403
        %v5662 = vpack.c.b16 %v5410, %v5407
        %v5663 = vpack.c.b16 %v5411, %v5408
        %v5664 = vpack.c.b16 %v5412, %v5409
        %v5665 = vpack.c.b16 %v5416, %v5413
        %v5666 = vpack.c.b16 %v5417, %v5414
        %v5667 = vpack.c.b16 %v5418, %v5415
        %v5668 = vpack.c.b16 %v5422, %v5419
        %v5669 = vpack.c.b16 %v5423, %v5420
        %v5670 = vpack.c.b16 %v5424, %v5421
        %v5671 = vpack.c.b16 %v5428, %v5425
        %v5672 = vpack.c.b16 %v5429, %v5426
        %v5673 = vpack.c.b16 %v5430, %v5427
        %v5674 = vpack.c.b16 %v5434, %v5431
        %v5675 = vpack.c.b16 %v5435, %v5432
        %v5676 = vpack.c.b16 %v5436, %v5433
        %v5677 = vpack.c.b16 %v5440, %v5437
        %v5678 = vpack.c.b16 %v5441, %v5438
        %v5679 = vpack.c.b16 %v5442, %v5439
        %v5680 = vpack.c.b16 %v5446, %v5443
        %v5681 = vpack.c.b16 %v5447, %v5444
        %v5682 = vpack.c.b16 %v5448, %v5445
        %v5683 = vpack.c.b16 %v5452, %v5449
        %v5684 = vpack.c.b16 %v5453, %v5450
        %v5685 = vpack.c.b16 %v5454, %v5451
        %v5686 = vpack.c.b16 %v5458, %v5455
        %v5687 = vpack.c.b16 %v5459, %v5456
        %v5688 = vpack.c.b16 %v5460, %v5457
        %v5689 = vpack.c.b16 %v5464, %v5461
        %v5690 = vpack.c.b16 %v5465, %v5462
        %v5691 = vpack.c.b16 %v5466, %v5463
        %v5692 = vpack.c.b16 %v5470, %v5467
        %v5693 = vpack.c.b16 %v5471, %v5468
        %v5694 = vpack.c.b16 %v5472, %v5469
        %v5695 = vpack.c.b16 %v5476, %v5473
        %v5696 = vpack.c.b16 %v5477, %v5474
        %v5697 = vpack.c.b16 %v5478, %v5475
        %v5698 = vpack.c.b16 %v5482, %v5479
        %v5699 = vpack.c.b16 %v5483, %v5480
        %v5700 = vpack.c.b16 %v5484, %v5481
        %v5701 = vpack.c.b16 %v5488, %v5485
        %v5702 = vpack.c.b16 %v5489, %v5486
        %v5703 = vpack.c.b16 %v5490, %v5487
        %v5704 = vpack.c.b16 %v5494, %v5491
        %v5705 = vpack.c.b16 %v5495, %v5492
        %v5706 = vpack.c.b16 %v5496, %v5493
        %v5707 = vpack.c.b16 %v5500, %v5497
        %v5708 = vpack.c.b16 %v5501, %v5498
        %v5709 = vpack.c.b16 %v5502, %v5499
        %v5710 = vpack.c.b16 %v5506, %v5503
        %v5711 = vpack.c.b16 %v5507, %v5504
        %v5712 = vpack.c.b16 %v5508, %v5505
        %v5713 = vpack.c.b16 %v5512, %v5509
        %v5714 = vpack.c.b16 %v5513, %v5510
        %v5715 = vpack.c.b16 %v5514, %v5511
        %v5716 = vpack.c.b16 %v5518, %v5515
        %v5717 = vpack.c.b16 %v5519, %v5516
        %v5718 = vpack.c.b16 %v5520, %v5517
        %v5719 = vpack.c.b16 %v5524, %v5521
        %v5720 = vpack.c.b16 %v5525, %v5522
        %v5721 = vpack.c.b16 %v5526, %v5523
        %v5722 = vpack.c.b16 %v5530, %v5527
        %v5723 = vpack.c.b16 %v5531, %v5528
        %v5724 = vpack.c.b16 %v5532, %v5529
        %v5725 = vpack.c.b16 %v5536, %v5533
        %v5726 = vpack.c.b16 %v5537, %v5534
        %v5727 = vpack.c.b16 %v5538, %v5535
        %v5728 = vpack.c.b16 %v5542, %v5539
        %v5729 = vpack.c.b16 %v5543, %v5540
        %v5730 = vpack.c.b16 %v5544, %v5541
        %v5731 = vpack.c.b16 %v5548, %v5545
        %v5732 = vpack.c.b16 %v5549, %v5546
        %v5733 = vpack.c.b16 %v5550, %v5547
        %v5734 = vpack.c.b16 %v5554, %v5551
        %v5735 = vpack.c.b16 %v5555, %v5552
        %v5736 = vpack.c.b16 %v5556, %v5553
        %v5737 = vpack.c.b16 %v5560, %v5557
        %v5738 = vpack.c.b16 %v5561, %v5558
        %v5739 = vpack.c.b16 %v5562, %v5559
        %v5740 = vpack.c.b16 %v5566, %v5563
        %v5741 = vpack.c.b16 %v5567, %v5564
        %v5742 = vpack.c.b16 %v5568, %v5565
        %v5743 = vpack.c.b16 %v5572, %v5569
        %v5744 = vpack.c.b16 %v5573, %v5570
        %v5745 = vpack.c.b16 %v5574, %v5571
        %v5746 = vpack.c.b16 %v5578, %v5575
        %v5747 = vpack.c.b16 %v5579, %v5576
        %v5748 = vpack.c.b16 %v5580, %v5577
        %v5749 = vpack.c.b16 %v5584, %v5581
        %v5750 = vpack.c.b16 %v5585, %v5582
        %v5751 = vpack.c.b16 %v5586, %v5583
        %v5752 = vpack.c.b16 %v5590, %v5587
        %v5753 = vpack.c.b16 %v5591, %v5588
        %v5754 = vpack.c.b16 %v5592, %v5589
        %v5755 = vpack.c.b16 %v5596, %v5593
        %v5756 = vpack.c.b16 %v5597, %v5594
        %v5757 = vpack.c.b16 %v5598, %v5595
        %v5758 = vpack.c.b16 %v5602, %v5599
        %v5759 = vpack.c.b16 %v5603, %v5600
        %v5760 = vpack.c.b16 %v5604, %v5601
        %v5761 = vpack.c.b16 %v5608, %v5605
        %v5762 = vpack.c.b16 %v5609, %v5606
        %v5763 = vpack.c.b16 %v5610, %v5607
        %v5764 = vpack.c.b16 %v5614, %v5611
        %v5765 = vpack.c.b16 %v5615, %v5612
        %v5766 = vpack.c.b16 %v5616, %v5613
        %v5767 = vpack.c.b16 %v5620, %v5617
        %v5768 = vpack.c.b16 %v5621, %v5618
        %v5769 = vpack.c.b16 %v5622, %v5619
        %v5770 = vpack.c.b16 %v5626, %v5623
        %v5771 = vpack.c.b16 %v5627, %v5624
        %v5772 = vpack.c.b16 %v5628, %v5625
        %5917 = vmatprep.subr.bf16.mxu0 %v5630
        %5918 = vmatpush1.bf16.msra.mxu0 %v5629
        %5919 = vmatprep.subr.bf16.mxu0 %v5633
        %5920 = vmatpush1.bf16.msra.mxu0 %v5632
        %5921 = vmatprep.subr.bf16.mxu0 %v5636
        %5922 = vmatpush1.bf16.msra.mxu0 %v5635
        %5923 = vmatprep.subr.bf16.mxu0 %v5639
        %5924 = vmatpush1.bf16.msra.mxu0 %v5638
        %5925 = vmatprep.subr.bf16.mxu0 %v5642
        %5926 = vmatpush1.bf16.msra.mxu0 %v5641
        %5927 = vmatprep.subr.bf16.mxu0 %v5645
        %5928 = vmatpush1.bf16.msra.mxu0 %v5644
        %5929 = vmatprep.subr.bf16.mxu0 %v5648
        %5930 = vmatpush1.bf16.msra.mxu0 %v5647
        %5931 = vmatprep.subr.bf16.mxu0 %v5651
        %5932 = vmatpush1.bf16.msra.mxu0 %v5650
        %5933 = vmatprep.subr.bf16.mxu0 %v5654
        %5934 = vmatpush1.bf16.msra.mxu0 %v5653
        %5935 = vmatprep.subr.bf16.mxu0 %v5657
        %5936 = vmatpush1.bf16.msra.mxu0 %v5656
        %5937 = vmatprep.subr.bf16.mxu0 %v5660
        %5938 = vmatpush1.bf16.msra.mxu0 %v5659
        %5939 = vmatprep.subr.bf16.mxu0 %v5663
        %5940 = vmatpush1.bf16.msra.mxu0 %v5662
        %5941 = vmatprep.subr.bf16.mxu0 %v5666
        %5942 = vmatpush1.bf16.msra.mxu0 %v5665
        %5943 = vmatprep.subr.bf16.mxu0 %v5669
        %5944 = vmatpush1.bf16.msra.mxu0 %v5668
        %5945 = vmatprep.subr.bf16.mxu0 %v5672
        %5946 = vmatpush1.bf16.msra.mxu0 %v5671
        %5947 = vmatprep.subr.bf16.mxu0 %v5675
        %5948 = vmatpush1.bf16.msra.mxu0 %v5674
        %5949 = vmatprep.mubr.bf16.mxu0 %v4935
        %5950 = vmatmul.mubr.bf16.gmra.mrb[0].mxu0 %v4934
        %v5951 = vpop.f32.mrb[0].mxu0
        %v5952 = vadd.f32 %v5137, %v5951
        %v5953 = vpop.f32.mrb[0].mxu0
        %v5954 = vadd.f32 %v5141, %v5953
        %v5955 = vpop.f32.mrb[0].mxu0
        %v5956 = vpop.f32.mrb[0].mxu0
        %5957 = vdwg.mxu0
        %5958 = vmatprep.subr.bf16.mxu0 %v5678
        %5959 = vmatpush1.bf16.msra.mxu0 %v5677
        %5960 = vmatprep.subr.bf16.mxu0 %v5681
        %5961 = vmatpush1.bf16.msra.mxu0 %v5680
        %5962 = vmatprep.subr.bf16.mxu0 %v5684
        %5963 = vmatpush1.bf16.msra.mxu0 %v5683
        %5964 = vmatprep.subr.bf16.mxu0 %v5687
        %5965 = vmatpush1.bf16.msra.mxu0 %v5686
        %5966 = vmatprep.subr.bf16.mxu0 %v5690
        %5967 = vmatpush1.bf16.msra.mxu0 %v5689
        %5968 = vmatprep.subr.bf16.mxu0 %v5693
        %5969 = vmatpush1.bf16.msra.mxu0 %v5692
        %5970 = vmatprep.subr.bf16.mxu0 %v5696
        %5971 = vmatpush1.bf16.msra.mxu0 %v5695
        %5972 = vmatprep.subr.bf16.mxu0 %v5699
        %5973 = vmatpush1.bf16.msra.mxu0 %v5698
        %5974 = vmatprep.subr.bf16.mxu0 %v5702
        %5975 = vmatpush1.bf16.msra.mxu0 %v5701
        %5976 = vmatprep.subr.bf16.mxu0 %v5705
        %5977 = vmatpush1.bf16.msra.mxu0 %v5704
        %5978 = vmatprep.subr.bf16.mxu0 %v5708
        %5979 = vmatpush1.bf16.msra.mxu0 %v5707
        %5980 = vmatprep.subr.bf16.mxu0 %v5711
        %5981 = vmatpush1.bf16.msra.mxu0 %v5710
        %5982 = vmatprep.subr.bf16.mxu0 %v5714
        %5983 = vmatpush1.bf16.msra.mxu0 %v5713
        %5984 = vmatprep.subr.bf16.mxu0 %v5717
        %5985 = vmatpush1.bf16.msra.mxu0 %v5716
        %5986 = vmatprep.subr.bf16.mxu0 %v5720
        %5987 = vmatpush1.bf16.msra.mxu0 %v5719
        %5988 = vmatprep.subr.bf16.mxu0 %v5723
        %5989 = vmatpush1.bf16.msra.mxu0 %v5722
        %5990 = vmatprep.mubr.bf16.mxu0 %v4937
        %5991 = vmatmul.mubr.bf16.gmra.mrb[0].mxu0 %v4936
        %v5992 = vpop.f32.mrb[0].mxu0
        %v5993 = vadd.f32 %v5952, %v5992
        %v5994 = vpop.f32.mrb[0].mxu0
        %v5995 = vadd.f32 %v5954, %v5994
        %v5996 = vpop.f32.mrb[0].mxu0
        %v5997 = vpop.f32.mrb[0].mxu0
        %5998 = vdwg.mxu0
        %5999 = vmatprep.subr.bf16.mxu0 %v5726
        %6000 = vmatpush1.bf16.msra.mxu0 %v5725
        %6001 = vmatprep.subr.bf16.mxu0 %v5729
        %6002 = vmatpush1.bf16.msra.mxu0 %v5728
        %6003 = vmatprep.subr.bf16.mxu0 %v5732
        %6004 = vmatpush1.bf16.msra.mxu0 %v5731
        %6005 = vmatprep.subr.bf16.mxu0 %v5735
        %6006 = vmatpush1.bf16.msra.mxu0 %v5734
        %6007 = vmatprep.subr.bf16.mxu0 %v5738
        %6008 = vmatpush1.bf16.msra.mxu0 %v5737
        %6009 = vmatprep.subr.bf16.mxu0 %v5741
        %6010 = vmatpush1.bf16.msra.mxu0 %v5740
        %6011 = vmatprep.subr.bf16.mxu0 %v5744
        %6012 = vmatpush1.bf16.msra.mxu0 %v5743
        %6013 = vmatprep.subr.bf16.mxu0 %v5747
        %6014 = vmatpush1.bf16.msra.mxu0 %v5746
        %6015 = vmatprep.subr.bf16.mxu0 %v5750
        %6016 = vmatpush1.bf16.msra.mxu0 %v5749
        %6017 = vmatprep.subr.bf16.mxu0 %v5753
        %6018 = vmatpush1.bf16.msra.mxu0 %v5752
        %6019 = vmatprep.subr.bf16.mxu0 %v5756
        %6020 = vmatpush1.bf16.msra.mxu0 %v5755
        %6021 = vmatprep.subr.bf16.mxu0 %v5759
        %6022 = vmatpush1.bf16.msra.mxu0 %v5758
        %6023 = vmatprep.subr.bf16.mxu0 %v5762
        %6024 = vmatpush1.bf16.msra.mxu0 %v5761
        %6025 = vmatprep.subr.bf16.mxu0 %v5765
        %6026 = vmatpush1.bf16.msra.mxu0 %v5764
        %6027 = vmatprep.subr.bf16.mxu0 %v5768
        %6028 = vmatpush1.bf16.msra.mxu0 %v5767
        %6029 = vmatprep.subr.bf16.mxu0 %v5771
        %6030 = vmatpush1.bf16.msra.mxu0 %v5770
        %6031 = vmatprep.mubr.bf16.mxu0 %v4939
        %6032 = vmatmul.mubr.bf16.gmra.mrb[0].mxu0 %v4938
        %v6033 = vpop.f32.mrb[0].mxu0
        %v6034 = vadd.f32 %v5993, %v6033
        %v6035 = vpop.f32.mrb[0].mxu0
        %v6036 = vadd.f32 %v5995, %v6035
        %v6037 = vpop.f32.mrb[0].mxu0
        %v6038 = vpop.f32.mrb[0].mxu0
        %6039 = vdwg.mxu0
        %6040 = vmatprep.subr.bf16.mxu0 0
        %6041 = vmatpush1.bf16.msra.mxu0 %v5631
        %6042 = vmatprep.subr.bf16.mxu0 0
        %6043 = vmatpush1.bf16.msra.mxu0 %v5634
        %6044 = vmatprep.subr.bf16.mxu0 0
        %6045 = vmatpush1.bf16.msra.mxu0 %v5637
        %6046 = vmatprep.subr.bf16.mxu0 0
        %6047 = vmatpush1.bf16.msra.mxu0 %v5640
        %6048 = vmatprep.subr.bf16.mxu0 0
        %6049 = vmatpush1.bf16.msra.mxu0 %v5643
        %6050 = vmatprep.subr.bf16.mxu0 0
        %6051 = vmatpush1.bf16.msra.mxu0 %v5646
        %6052 = vmatprep.subr.bf16.mxu0 0
        %6053 = vmatpush1.bf16.msra.mxu0 %v5649
        %6054 = vmatprep.subr.bf16.mxu0 0
        %6055 = vmatpush1.bf16.msra.mxu0 %v5652
        %6056 = vmatprep.subr.bf16.mxu0 0
        %6057 = vmatpush1.bf16.msra.mxu0 %v5655
        %6058 = vmatprep.subr.bf16.mxu0 0
        %6059 = vmatpush1.bf16.msra.mxu0 %v5658
        %6060 = vmatprep.subr.bf16.mxu0 0
        %6061 = vmatpush1.bf16.msra.mxu0 %v5661
        %6062 = vmatprep.subr.bf16.mxu0 0
        %6063 = vmatpush1.bf16.msra.mxu0 %v5664
        %6064 = vmatprep.subr.bf16.mxu0 0
        %6065 = vmatpush1.bf16.msra.mxu0 %v5667
        %6066 = vmatprep.subr.bf16.mxu0 0
        %6067 = vmatpush1.bf16.msra.mxu0 %v5670
        %6068 = vmatprep.subr.bf16.mxu0 0
        %6069 = vmatpush1.bf16.msra.mxu0 %v5673
        %6070 = vmatprep.subr.bf16.mxu0 0
        %6071 = vmatpush1.bf16.msra.mxu0 %v5676
        %6072 = vmatprep.mubr.bf16.mxu0 %v4935
        %6073 = vmatmul.mubr.bf16.gmra.mrb[0].mxu0 %v4934
        %v6074 = vpop.f32.mrb[0].mxu0
        %v6075 = vadd.f32 %v5145, %v6074
        %v6076 = vpop.f32.mrb[0].mxu0
        %v6077 = vpop.f32.mrb[0].mxu0
        %v6078 = vpop.f32.mrb[0].mxu0
        %6079 = vdwg.mxu0
        %6080 = vmatprep.subr.bf16.mxu0 0
        %6081 = vmatpush1.bf16.msra.mxu0 %v5679
        %6082 = vmatprep.subr.bf16.mxu0 0
        %6083 = vmatpush1.bf16.msra.mxu0 %v5682
        %6084 = vmatprep.subr.bf16.mxu0 0
        %6085 = vmatpush1.bf16.msra.mxu0 %v5685
        %6086 = vmatprep.subr.bf16.mxu0 0
        %6087 = vmatpush1.bf16.msra.mxu0 %v5688
        %6088 = vmatprep.subr.bf16.mxu0 0
        %6089 = vmatpush1.bf16.msra.mxu0 %v5691
        %6090 = vmatprep.subr.bf16.mxu0 0
        %6091 = vmatpush1.bf16.msra.mxu0 %v5694
        %6092 = vmatprep.subr.bf16.mxu0 0
        %6093 = vmatpush1.bf16.msra.mxu0 %v5697
        %6094 = vmatprep.subr.bf16.mxu0 0
        %6095 = vmatpush1.bf16.msra.mxu0 %v5700
        %6096 = vmatprep.subr.bf16.mxu0 0
        %6097 = vmatpush1.bf16.msra.mxu0 %v5703
        %6098 = vmatprep.subr.bf16.mxu0 0
        %6099 = vmatpush1.bf16.msra.mxu0 %v5706
        %6100 = vmatprep.subr.bf16.mxu0 0
        %6101 = vmatpush1.bf16.msra.mxu0 %v5709
        %6102 = vmatprep.subr.bf16.mxu0 0
        %6103 = vmatpush1.bf16.msra.mxu0 %v5712
        %6104 = vmatprep.subr.bf16.mxu0 0
        %6105 = vmatpush1.bf16.msra.mxu0 %v5715
        %6106 = vmatprep.subr.bf16.mxu0 0
        %6107 = vmatpush1.bf16.msra.mxu0 %v5718
        %6108 = vmatprep.subr.bf16.mxu0 0
        %6109 = vmatpush1.bf16.msra.mxu0 %v5721
        %6110 = vmatprep.subr.bf16.mxu0 0
        %6111 = vmatpush1.bf16.msra.mxu0 %v5724
        %6112 = vmatprep.mubr.bf16.mxu0 %v4937
        %6113 = vmatmul.mubr.bf16.gmra.mrb[0].mxu0 %v4936
        %v6114 = vpop.f32.mrb[0].mxu0
        %v6115 = vadd.f32 %v6075, %v6114
        %v6116 = vpop.f32.mrb[0].mxu0
        %v6117 = vpop.f32.mrb[0].mxu0
        %v6118 = vpop.f32.mrb[0].mxu0
        %6119 = vdwg.mxu0
        %6120 = vmatprep.subr.bf16.mxu0 0
        %6121 = vmatpush1.bf16.msra.mxu0 %v5727
        %6122 = vmatprep.subr.bf16.mxu0 0
        %6123 = vmatpush1.bf16.msra.mxu0 %v5730
        %6124 = vmatprep.subr.bf16.mxu0 0
        %6125 = vmatpush1.bf16.msra.mxu0 %v5733
        %6126 = vmatprep.subr.bf16.mxu0 0
        %6127 = vmatpush1.bf16.msra.mxu0 %v5736
        %6128 = vmatprep.subr.bf16.mxu0 0
        %6129 = vmatpush1.bf16.msra.mxu0 %v5739
        %6130 = vmatprep.subr.bf16.mxu0 0
        %6131 = vmatpush1.bf16.msra.mxu0 %v5742
        %6132 = vmatprep.subr.bf16.mxu0 0
        %6133 = vmatpush1.bf16.msra.mxu0 %v5745
        %6134 = vmatprep.subr.bf16.mxu0 0
        %6135 = vmatpush1.bf16.msra.mxu0 %v5748
        %6136 = vmatprep.subr.bf16.mxu0 0
        %6137 = vmatpush1.bf16.msra.mxu0 %v5751
        %6138 = vmatprep.subr.bf16.mxu0 0
        %6139 = vmatpush1.bf16.msra.mxu0 %v5754
        %6140 = vmatprep.subr.bf16.mxu0 0
        %6141 = vmatpush1.bf16.msra.mxu0 %v5757
        %6142 = vmatprep.subr.bf16.mxu0 0
        %6143 = vmatpush1.bf16.msra.mxu0 %v5760
        %6144 = vmatprep.subr.bf16.mxu0 0
        %6145 = vmatpush1.bf16.msra.mxu0 %v5763
        %6146 = vmatprep.subr.bf16.mxu0 0
        %6147 = vmatpush1.bf16.msra.mxu0 %v5766
        %6148 = vmatprep.subr.bf16.mxu0 0
        %6149 = vmatpush1.bf16.msra.mxu0 %v5769
        %6150 = vmatprep.subr.bf16.mxu0 0
        %6151 = vmatpush1.bf16.msra.mxu0 %v5772
        %6152 = vmatprep.mubr.bf16.mxu0 %v4939
        %6153 = vmatmul.mubr.bf16.gmra.mrb[0].mxu0 %v4938
        %v6154 = vpop.f32.mrb[0].mxu0
        %v6155 = vadd.f32 %v6115, %v6154
        %v6156 = vpop.f32.mrb[0].mxu0
        %v6157 = vpop.f32.mrb[0].mxu0
        %v6158 = vpop.f32.mrb[0].mxu0
        %6159 = vdwg.mxu0
        %v6160 = vmax.f32 %v6034, 0.0
        %v6161 = vmax.f32 %v6036, 0.0
        %v6162 = vmax.f32 %v6155, 0.0
        %v6163 = vpack.c.bf16 %v6160, %v6160
        %v6164 = vpack.c.bf16 %v6161, %v6161
        %v6165 = vpack.c.bf16 %v6162, %v6162
        %v6166 = vld [vmem:[#allocation13] sm:$0xf]
        %v6167 = vld [vmem:[#allocation13 + $0x4] sm:$0xf]
        %v6168 = vld [vmem:[#allocation13 + $0x8] sm:$0xf]
        %v6169 = vld [vmem:[#allocation13 + $0xc] sm:$0xf]
        %v6170 = vld [vmem:[#allocation13 + $0x10] sm:$0xf]
        %v6171 = vld [vmem:[#allocation13 + $0x14] sm:$0xf]
        %v6172 = vld [vmem:[#allocation13 + $0x18] sm:$0xf]
        %v6173 = vld [vmem:[#allocation13 + $0x1c] sm:$0xf]
        %v6174 = vld [vmem:[#allocation13 + $0x20] sm:$0xf]
        %v6175 = vld [vmem:[#allocation13 + $0x24] sm:$0xf]
        %v6176 = vld [vmem:[#allocation13 + $0x28] sm:$0xf]
        %v6177 = vld [vmem:[#allocation13 + $0x2c] sm:$0xf]
        %v6178 = vld [vmem:[#allocation13 + $0x30] sm:$0xf]
        %v6179 = vld [vmem:[#allocation13 + $0x34] sm:$0xf]
        %v6180 = vld [vmem:[#allocation13 + $0x38] sm:$0xf]
        %v6181 = vld [vmem:[#allocation13 + $0x3c] sm:$0xf]
        %v6182 = vld [vmem:[#allocation13 + $0x40] sm:$0xf]
        %v6183 = vld [vmem:[#allocation13 + $0x44] sm:$0xf]
        %v6184 = vld [vmem:[#allocation13 + $0x48] sm:$0xf]
        %v6185 = vld [vmem:[#allocation13 + $0x4c] sm:$0xf]
        %v6186 = vld [vmem:[#allocation13 + $0x50] sm:$0xf]
        %v6187 = vld [vmem:[#allocation13 + $0x54] sm:$0xf]
        %v6188 = vld [vmem:[#allocation13 + $0x58] sm:$0xf]
        %v6189 = vld [vmem:[#allocation13 + $0x5c] sm:$0xf]
        %v6190 = vld [vmem:[#allocation13 + $0x60] sm:$0xf]
        %v6191 = vld [vmem:[#allocation13 + $0x64] sm:$0xf]
        %v6192 = vld [vmem:[#allocation13 + $0x68] sm:$0xf]
        %v6193 = vld [vmem:[#allocation13 + $0x6c] sm:$0xf]
        %v6194 = vld [vmem:[#allocation13 + $0x70] sm:$0xf]
        %v6195 = vld [vmem:[#allocation13 + $0x74] sm:$0xf]
        %v6196 = vld [vmem:[#allocation13 + $0x78] sm:$0xf]
        %v6197 = vld [vmem:[#allocation13 + $0x7c] sm:$0xf]
        %v6198 = vld [vmem:[#allocation13 + $0x80] sm:$0xf]
        %v6199 = vld [vmem:[#allocation13 + $0x84] sm:$0xf]
        %v6200 = vld [vmem:[#allocation13 + $0x88] sm:$0xf]
        %v6201 = vld [vmem:[#allocation13 + $0x8c] sm:$0xf]
        %v6202 = vld [vmem:[#allocation13 + $0x90] sm:$0xf]
        %v6203 = vld [vmem:[#allocation13 + $0x94] sm:$0xf]
        %v6204 = vld [vmem:[#allocation13 + $0x98] sm:$0xf]
        %v6205 = vld [vmem:[#allocation13 + $0x9c] sm:$0xf]
        %v6206 = vld [vmem:[#allocation13 + $0xa0] sm:$0xf]
        %v6207 = vld [vmem:[#allocation13 + $0xa4] sm:$0xf]
        %v6208 = vld [vmem:[#allocation13 + $0xa8] sm:$0xf]
        %v6209 = vld [vmem:[#allocation13 + $0xac] sm:$0xf]
        %v6210 = vld [vmem:[#allocation13 + $0xb0] sm:$0xf]
        %v6211 = vld [vmem:[#allocation13 + $0xb4] sm:$0xf]
        %v6212 = vld [vmem:[#allocation13 + $0xb8] sm:$0xf]
        %v6213 = vld [vmem:[#allocation13 + $0xbc] sm:$0xf]
        %v6214 = vld [vmem:[%s13] sm:$0x1]
        %v6216 = vlaneseq
        %v6217 = vshrl.u32 %v6216, 7
        %v6218 = vsub.s32 0, %v6217
        %v6219 = vrot.slane %v6214, %v6218
        %v6269 = vunpack.c.l.b16 %v6166
        %v6270 = vunpack.c.l.b16 %v6167
        %v6271 = vunpack.c.l.b16 %v6168
        %v6272 = vunpack.c.l.b16 %v6169
        %v6273 = vunpack.c.l.b16 %v6170
        %v6274 = vunpack.c.l.b16 %v6171
        %v6275 = vunpack.c.l.b16 %v6172
        %v6276 = vunpack.c.l.b16 %v6173
        %v6277 = vunpack.c.l.b16 %v6174
        %v6278 = vunpack.c.l.b16 %v6175
        %v6279 = vunpack.c.l.b16 %v6176
        %v6280 = vunpack.c.l.b16 %v6177
        %v6281 = vunpack.c.l.b16 %v6178
        %v6282 = vunpack.c.l.b16 %v6179
        %v6283 = vunpack.c.l.b16 %v6180
        %v6284 = vunpack.c.l.b16 %v6181
        %v6285 = vunpack.c.l.b16 %v6182
        %v6286 = vunpack.c.l.b16 %v6183
        %v6287 = vunpack.c.l.b16 %v6184
        %v6288 = vunpack.c.l.b16 %v6185
        %v6289 = vunpack.c.l.b16 %v6186
        %v6290 = vunpack.c.l.b16 %v6187
        %v6291 = vunpack.c.l.b16 %v6188
        %v6292 = vunpack.c.l.b16 %v6189
        %v6293 = vunpack.c.l.b16 %v6190
        %v6294 = vunpack.c.l.b16 %v6191
        %v6295 = vunpack.c.l.b16 %v6192
        %v6296 = vunpack.c.l.b16 %v6193
        %v6297 = vunpack.c.l.b16 %v6194
        %v6298 = vunpack.c.l.b16 %v6195
        %v6299 = vunpack.c.l.b16 %v6196
        %v6300 = vunpack.c.l.b16 %v6197
        %v6301 = vunpack.c.l.b16 %v6198
        %v6302 = vunpack.c.l.b16 %v6199
        %v6303 = vunpack.c.l.b16 %v6200
        %v6304 = vunpack.c.l.b16 %v6201
        %v6305 = vunpack.c.l.b16 %v6202
        %v6306 = vunpack.c.l.b16 %v6203
        %v6307 = vunpack.c.l.b16 %v6204
        %v6308 = vunpack.c.l.b16 %v6205
        %v6309 = vunpack.c.l.b16 %v6206
        %v6310 = vunpack.c.l.b16 %v6207
        %v6311 = vunpack.c.l.b16 %v6208
        %v6312 = vunpack.c.l.b16 %v6209
        %v6313 = vunpack.c.l.b16 %v6210
        %v6314 = vunpack.c.l.b16 %v6211
        %v6315 = vunpack.c.l.b16 %v6212
        %v6316 = vunpack.c.l.b16 %v6213
        %v6317 = vpack.c.b16 %v6270, %v6269
        %v6318 = vpack.c.b16 %v6272, %v6271
        %v6319 = vpack.c.b16 %v6274, %v6273
        %v6320 = vpack.c.b16 %v6276, %v6275
        %v6321 = vpack.c.b16 %v6278, %v6277
        %v6322 = vpack.c.b16 %v6280, %v6279
        %v6323 = vpack.c.b16 %v6282, %v6281
        %v6324 = vpack.c.b16 %v6284, %v6283
        %v6325 = vpack.c.b16 %v6286, %v6285
        %v6326 = vpack.c.b16 %v6288, %v6287
        %v6327 = vpack.c.b16 %v6290, %v6289
        %v6328 = vpack.c.b16 %v6292, %v6291
        %v6329 = vpack.c.b16 %v6294, %v6293
        %v6330 = vpack.c.b16 %v6296, %v6295
        %v6331 = vpack.c.b16 %v6298, %v6297
        %v6332 = vpack.c.b16 %v6300, %v6299
        %v6333 = vpack.c.b16 %v6302, %v6301
        %v6334 = vpack.c.b16 %v6304, %v6303
        %v6335 = vpack.c.b16 %v6306, %v6305
        %v6336 = vpack.c.b16 %v6308, %v6307
        %v6337 = vpack.c.b16 %v6310, %v6309
        %v6338 = vpack.c.b16 %v6312, %v6311
        %v6339 = vpack.c.b16 %v6314, %v6313
        %v6340 = vpack.c.b16 %v6316, %v6315
        %6365 = vmatprep.subr.bf16.mxu0 0
        %6366 = vmatpush1.bf16.msra.mxu0 %v6317
        %6367 = vmatprep.subr.bf16.mxu0 0
        %6368 = vmatpush1.bf16.msra.mxu0 %v6318
        %6369 = vmatprep.subr.bf16.mxu0 0
        %6370 = vmatpush1.bf16.msra.mxu0 %v6319
        %6371 = vmatprep.subr.bf16.mxu0 0
        %6372 = vmatpush1.bf16.msra.mxu0 %v6320
        %6373 = vmatprep.subr.bf16.mxu0 0
        %6374 = vmatpush1.bf16.msra.mxu0 %v6321
        %6375 = vmatprep.subr.bf16.mxu0 0
        %6376 = vmatpush1.bf16.msra.mxu0 %v6322
        %6377 = vmatprep.subr.bf16.mxu0 0
        %6378 = vmatpush1.bf16.msra.mxu0 %v6323
        %6379 = vmatprep.subr.bf16.mxu0 0
        %6380 = vmatpush1.bf16.msra.mxu0 %v6324
        %6381 = vmatprep.subr.bf16.mxu0 0
        %6382 = vmatpush1.bf16.msra.mxu0 %v6325
        %6383 = vmatprep.subr.bf16.mxu0 0
        %6384 = vmatpush1.bf16.msra.mxu0 %v6326
        %6385 = vmatprep.subr.bf16.mxu0 0
        %6386 = vmatpush1.bf16.msra.mxu0 %v6327
        %6387 = vmatprep.subr.bf16.mxu0 0
        %6388 = vmatpush1.bf16.msra.mxu0 %v6328
        %6389 = vmatprep.subr.bf16.mxu0 0
        %6390 = vmatpush1.bf16.msra.mxu0 %v6329
        %6391 = vmatprep.subr.bf16.mxu0 0
        %6392 = vmatpush1.bf16.msra.mxu0 %v6330
        %6393 = vmatprep.subr.bf16.mxu0 0
        %6394 = vmatpush1.bf16.msra.mxu0 %v6331
        %6395 = vmatprep.subr.bf16.mxu0 0
        %6396 = vmatpush1.bf16.msra.mxu0 %v6332
        %6397 = vmatprep.mubr.bf16.mxu0 %v6164
        %6398 = vmatmul.mubr.bf16.gmra.mrb[0].mxu0 %v6163
        %v6399 = vpop.f32.mrb[0].mxu0
        %v6400 = vadd.f32 %v6219, %v6399
        %v6401 = vpop.f32.mrb[0].mxu0
        %v6402 = vpop.f32.mrb[0].mxu0
        %v6403 = vpop.f32.mrb[0].mxu0
        %6404 = vdwg.mxu0
        %6405 = vmatprep.subr.bf16.mxu0 0
        %6406 = vmatpush1.bf16.msra.mxu0 %v6333
        %6407 = vmatprep.subr.bf16.mxu0 0
        %6408 = vmatpush1.bf16.msra.mxu0 %v6334
        %6409 = vmatprep.subr.bf16.mxu0 0
        %6410 = vmatpush1.bf16.msra.mxu0 %v6335
        %6411 = vmatprep.subr.bf16.mxu0 0
        %6412 = vmatpush1.bf16.msra.mxu0 %v6336
        %6413 = vmatprep.subr.bf16.mxu0 0
        %6414 = vmatpush1.bf16.msra.mxu0 %v6337
        %6415 = vmatprep.subr.bf16.mxu0 0
        %6416 = vmatpush1.bf16.msra.mxu0 %v6338
        %6417 = vmatprep.subr.bf16.mxu0 0
        %6418 = vmatpush1.bf16.msra.mxu0 %v6339
        %6419 = vmatprep.subr.bf16.mxu0 0
        %6420 = vmatpush1.bf16.msra.mxu0 %v6340
        %6421 = vmatprep.subr.bf16.mxu0 0
        %6422 = vmatpush1.bf16.msra.mxu0 0
        %6423 = vmatprep.subr.bf16.mxu0 0
        %6424 = vmatpush1.bf16.msra.mxu0 0
        %6425 = vmatprep.subr.bf16.mxu0 0
        %6426 = vmatpush1.bf16.msra.mxu0 0
        %6427 = vmatprep.subr.bf16.mxu0 0
        %6428 = vmatpush1.bf16.msra.mxu0 0
        %6429 = vmatprep.subr.bf16.mxu0 0
        %6430 = vmatpush1.bf16.msra.mxu0 0
        %6431 = vmatprep.subr.bf16.mxu0 0
        %6432 = vmatpush1.bf16.msra.mxu0 0
        %6433 = vmatprep.subr.bf16.mxu0 0
        %6434 = vmatpush1.bf16.msra.mxu0 0
        %6435 = vmatprep.subr.bf16.mxu0 0
        %6436 = vmatpush1.bf16.msra.mxu0 0
        %6437 = vmatprep.mubr.bf16.mxu0 0
        %6438 = vmatmul.mubr.bf16.gmra.mrb[0].mxu0 %v6165
        %v6439 = vpop.f32.mrb[0].mxu0
        %v6440 = vadd.f32 %v6400, %v6439
        %v6441 = vpop.f32.mrb[0].mxu0
        %v6442 = vpop.f32.mrb[0].mxu0
        %v6443 = vpop.f32.mrb[0].mxu0
        %6444 = vdwg.mxu0
        %6445 = vst [vmem:[%s614] sm:$0xff] %v6440
        %v6446 = vlaneseq
        %v6447 = vshrl.u32 %v6446, 7
        %v6448 = vsub.s32 %v3685, %v6447
        %v6449 = vrot.slane %v3923, %v6448
        %v6450 = vlaneseq
        %v6451 = vshrl.u32 %v6450, 7
        %v6452 = vsub.s32 %v3685, %v6451
        %v6453 = vrot.slane %v3928, %v6452
        %v6454 = vlaneseq
        %v6455 = vshrl.u32 %v6454, 7
        %v6456 = vsub.s32 %v3685, %v6455
        %v6457 = vrot.slane %v3933, %v6456
        %v6458 = vlaneseq
        %v6459 = vshrl.u32 %v6458, 7
        %v6460 = vsub.s32 %v3685, %v6459
        %v6461 = vrot.slane %v3938, %v6460
        %v6462 = vlaneseq
        %v6463 = vshrl.u32 %v6462, 7
        %v6464 = vsub.s32 %v3685, %v6463
        %v6465 = vrot.slane %v3943, %v6464
        %v6466 = vlaneseq
        %v6467 = vshrl.u32 %v6466, 7
        %v6468 = vsub.s32 %v3685, %v6467
        %v6469 = vrot.slane %v3948, %v6468
        %v6470 = vlaneseq
        %v6471 = vshrl.u32 %v6470, 7
        %v6472 = vsub.s32 %v3685, %v6471
        %v6473 = vrot.slane %v3953, %v6472
        %v6474 = vlaneseq
        %v6475 = vshrl.u32 %v6474, 7
        %v6476 = vsub.s32 %v3685, %v6475
        %v6477 = vrot.slane %v3958, %v6476
        %v6478 = vsel %vm1408, %v6453, %v6449
        %v6479 = vsel %vm1410, %v6457, %v6478
        %v6480 = vsel %vm1412, %v6461, %v6479
        %v6481 = vsel %vm1414, %v6465, %v6480
        %v6482 = vsel %vm1416, %v6469, %v6481
        %v6483 = vsel %vm1418, %v6473, %v6482
        %v6484 = vsel %vm1420, %v6477, %v6483
        %6486 = vst.msk [vmem:[%s629] sm:$0xff] %vm3726, %v6484
        %s6487 = sand.u32 %s348, 1
        %s6488 = scalar_lea.sflag [#allocation4], %s6487
        %s6489 = sand.u32 %s348, 1
        %s6490 = smul.addr %s6489, 8
        %s6491 = scalar_lea.vmem [#allocation14], %s6490
        %p6492 = scmp.lt.s32.totalorder %s36, 1
        %s6493 = scalar_select %p6492, %s36, 1
        %s6494 = smul.addr %s6493, 8
        %s6495 = scalar_lea.vmem %s15, %s6494
        // Predicated region
        $region105: #{tpu_custom_call.1} parent=75 // pred_check
          %p6496 = pneg %p358
        $region106: #{tpu_custom_call.1} parent=75 // pred_check_branch
          %6498 = sbr.rel (%p6496) target = $region108
        $region107: #{tpu_custom_call.1} parent=75 // pred_region
          %s6500 = ssub.s32 128, 128
          %6501 = vsyncadd %s6488, %s6500
          %s6502 = smul.addr %s36, 128
          %s6503 = scalar_lea.hbm %s14, %s6502
          %s6505 = sshll.u32 %s6491, 4
          %s6506 = int_to_ptr.vmem [resolvable:$true] %s6505
          %6508 = dma.vmem_to_hbm [thread:$0]  %s6506, 128, %s6503, %s6488
        $region108: #{tpu_custom_call.1} parent=75 // pred_fallthru
          _
        // Predicated region
        $region109: #{tpu_custom_call.1} parent=75 // pred_check
          %p6509 = pneg %p384
        $region110: #{tpu_custom_call.1} parent=75 // pred_check_branch
          %6511 = sbr.rel (%p6509) target = $region112
        $region111: #{tpu_custom_call.1} parent=75 // pred_region
          _
        $region112: #{tpu_custom_call.1} parent=75 // pred_fallthru
          _
      $region76: #{tpu_custom_call.1} parent=5 // pred_fallthru
        _
      %p6512 = scmp.le.s32.totalorder 2, %s31
      // Predicated region
      $region113: #{tpu_custom_call.1} parent=5 // pred_check
        %p6513 = pneg %p6512
      $region114: #{tpu_custom_call.1} parent=5 // pred_check_branch
        %6515 = sbr.rel (%p6513) target = $region116
      $region115: #{tpu_custom_call.1} parent=5 // pred_region
        %s6516 = ssub.s32 %s31, 2
        // Predicated region
        $region117: #{tpu_custom_call.1} parent=115 // pred_check
          %p6517 = pneg %p364
        $region118: #{tpu_custom_call.1} parent=115 // pred_check_branch
          %6519 = sbr.rel (%p6517) target = $region120
        $region119: #{tpu_custom_call.1} parent=115 // pred_region
          %s6520 = sand.u32 %s349, 1
          %s6521 = scalar_lea.sflag [#allocation4], %s6520
          %s6522 = sand.u32 %s349, 1
          %s6523 = smul.addr %s6522, 8
          %s6524 = scalar_lea.vmem [#allocation14], %s6523
          %6525 = dma.done %s6521, 128
        $region120: #{tpu_custom_call.1} parent=115 // pred_fallthru
          _
        // Predicated region
        $region121: #{tpu_custom_call.1} parent=115 // pred_check
          %p6526 = pneg %p390
        $region122: #{tpu_custom_call.1} parent=115 // pred_check_branch
          %6528 = sbr.rel (%p6526) target = $region124
        $region123: #{tpu_custom_call.1} parent=115 // pred_region
          %p6529 = scmp.lt.s32.totalorder %s37, 1
          %s6530 = scalar_select %p6529, %s37, 1
          %s6531 = smul.addr %s6530, 8
          %s6532 = scalar_lea.vmem %s15, %s6531
        $region124: #{tpu_custom_call.1} parent=115 // pred_fallthru
          _
      $region116: #{tpu_custom_call.1} parent=5 // pred_fallthru
        _
    $region6: #{tpu_custom_call.1} parent=1 // loop_footer
      %s35 = sadd.s32 1, %s31
    $region7: #{tpu_custom_call.1} parent=1 // loop_footer_branch
      %30 = sbr.rel target = $region3
    $region8: #{tpu_custom_call.1} parent=1 // loop_exit
      _
    %6533 = vsyncpa [#allocation3], 1
    %s6534 = scalar_lea.sflag [#allocation3], 1
    %6535 = vsyncpa %s6534, 1
    %6536 = vsyncpa [#allocation6], 1
    %6537 = vsyncpa [#allocation9], 1
    %6538 = vsyncpa [#allocation12], 1
    %6539 = vsyncpa [#allocation4], 1
    %s6540 = scalar_lea.sflag [#allocation4], 1
    %6541 = vsyncpa %s6540, 1

</llo_original>
